<compile_context>
chip_gen: v6e
topology: v6e:2x2x1
jax: 0.10.0
libtpu: 0.0.40
codegen_flags: <defaults>
</compile_context>

<pallas_src>
import jax
import jax.numpy as jnp
from jax.experimental import pallas as pl
from jax.experimental.pallas import tpu as pltpu


def _round_up(n, m):
    return (n + m - 1) // m * m


def mlp_kernel(x_ref, w1_ref, b1_ref, w2_ref, b2_ref,
               w3_ref, b3_ref, w4_ref, b4_ref, o_ref):
    cdt = w1_ref.dtype  # MXU compute dtype (bf16); accumulation stays f32

    # Layer 1: (TB, D_in) @ (D_in, 2048) + b1 -> ReLU   (bf16 MXU, f32 accum)
    h = jnp.dot(x_ref[...].astype(cdt), w1_ref[...],
                preferred_element_type=jnp.float32)
    h = jnp.maximum(h + b1_ref[...], 0.0)
    # TODO(synk): Dropout(0.1) is identity in eval mode; training-mode RNG
    # masking is intentionally not reproduced here.

    # Layer 2: (TB, 2048) @ (2048, 512) + b2 -> ReLU
    h = jnp.dot(h.astype(cdt), w2_ref[...], preferred_element_type=jnp.float32)
    h = jnp.maximum(h + b2_ref[...], 0.0)

    # Layer 3: (TB, 512) @ (512, 128) + b3 -> ReLU
    h = jnp.dot(h.astype(cdt), w3_ref[...], preferred_element_type=jnp.float32)
    h = jnp.maximum(h + b3_ref[...], 0.0)

    # Layer 4: N=1 would use 1/256 of the MXU columns; do it on the VPU/XLU:
    # (TB,128) * (1,128) -> lane reduce -> (TB,1), then add the SMEM scalar b4.
    out = jnp.sum(h * w4_ref[...], axis=-1, keepdims=True)
    o_ref[...] = (out + b4_ref[0]).astype(o_ref.dtype)


def prepare_params(params, compute_dtype=jnp.bfloat16):
    """One-time weight/bias prep, hoisted out of the per-call path.

    Big-layer weights go to bf16 (halves HBM weight traffic); biases and the
    tiny layer-4 weights stay f32 (used on the VPU).  NOTE: this file uses
    (in_features, out_features) weight layout; PyTorch nn.Linear stores
    (out_features, in_features), so transpose when importing real checkpoints.
    """
    (w1, b1), (w2, b2), (w3, b3), (w4, b4) = params
    return (
        w1.astype(compute_dtype), b1.reshape(1, -1).astype(jnp.float32),
        w2.astype(compute_dtype), b2.reshape(1, -1).astype(jnp.float32),
        w3.astype(compute_dtype), b3.reshape(1, -1).astype(jnp.float32),
        w4.astype(jnp.float32).reshape(1, -1),   # (1, 128) VPU row
        b4.astype(jnp.float32).reshape(1),       # (1,)  SMEM scalar
    )


def mlp_forward(x, prepared, *, tile_b=None):
    """Fused MLP forward. x: (B, D_in) f32, prepared = prepare_params(...)."""
    w1c, b1c, w2c, b2c, w3c, b3c, w4_row, b4c = prepared
    B, D_in = x.shape

    # Batch tiling: one tile for small batches; up to 512-row tiles for large
    # batches (weights stay resident; only the activation scratch grows).
    if tile_b is None:
        tile_b = min(_round_up(B, 8), 512)
    tile_b = _round_up(tile_b, 8)
    grid = (pl.cdiv(B, tile_b),)   # ragged last tile handled by Pallas masking

    # VMEM plan: single-buffered weights + double-buffered x/out tiles + f32
    # activation scratch, with 2x headroom (floor of 32 MiB).
    # TODO(synk): for very large D_in (>~4K) on v7x (64 MiB VMEM), add a
    # K-tiling grid axis over D_in instead of growing this limit further.
    weight_bytes = sum(int(a.size) * a.dtype.itemsize
                       for a in (w1c, b1c, w2c, b2c, w3c, b3c, w4_row, b4c))
    act_bytes = tile_b * (2048 + 512 + 128) * 4
    io_bytes = 2 * (tile_b * D_in * 4 + tile_b * 4)
    vmem_limit = int(max(32 << 20, 2 * (weight_bytes + act_bytes + io_bytes)))

    # Advisory cost estimate so XLA can overlap the weight fetch with neighbors.
    rows = grid[0] * tile_b
    flops = 2 * rows * (D_in * 2048 + 2048 * 512 + 512 * 128 + 128 * 1)
    bytes_accessed = int(x.size * x.dtype.itemsize + weight_bytes + B * 4)
    cost = pl.CostEstimate(flops=flops, transcendentals=0,
                           bytes_accessed=bytes_accessed)

    # Constant-index blocks (weights/biases): fetched once, single-buffered.
    const = lambda a: pl.BlockSpec(a.shape, lambda i: (0, 0),
                                   pipeline_mode=pl.Buffered(1))

    out = pl.pallas_call(
        mlp_kernel,
        out_shape=jax.ShapeDtypeStruct((B, 1), jnp.float32),
        grid_spec=pltpu.PrefetchScalarGridSpec(
            num_scalar_prefetch=0,
            grid=grid,
            in_specs=[
                pl.BlockSpec((tile_b, D_in), lambda i: (i, 0)),  # x tile
                const(w1c), const(b1c),
                const(w2c), const(b2c),
                const(w3c), const(b3c),
                const(w4_row),
                pl.BlockSpec(memory_space=pltpu.MemorySpace.SMEM),  # b4 (1,)
            ],
            out_specs=pl.BlockSpec((tile_b, 1), lambda i: (i, 0)),
        ),
        compiler_params=pltpu.CompilerParams(
            dimension_semantics=("parallel",),
            vmem_limit_bytes=vmem_limit,
        ),
        cost_estimate=cost,
    )(x, w1c, b1c, w2c, b2c, w3c, b3c, w4_row, b4c)

    return out


def init_params(key, d_in):
    """Deterministic PyTorch-style init: U(-1/sqrt(fan_in), 1/sqrt(fan_in)).

    Weights stored as (in_features, out_features); transpose PyTorch weights
    (stored as (out, in)) before using them here.
    """
    dims = [(d_in, 2048), (2048, 512), (512, 128), (128, 1)]
    params = []
    for (fan_in, fan_out) in dims:
        key, kw, kb = jax.random.split(key, 3)
        bound = 1.0 / jnp.sqrt(fan_in)
        w = jax.random.uniform(kw, (fan_in, fan_out), jnp.float32, -bound, bound)
        b = jax.random.uniform(kb, (1, fan_out), jnp.float32, -bound, bound)
        params.append((w, b))
    return params


def mlp_reference(x, params, compute_dtype=jnp.bfloat16):
    """Pure-JAX reference mirroring the kernel's bf16-input / f32-accum matmuls."""
    (w1, b1), (w2, b2), (w3, b3), (w4, b4) = params
    mm = lambda a, w: jnp.dot(a.astype(compute_dtype), w.astype(compute_dtype),
                              preferred_element_type=jnp.float32)
    h = jnp.maximum(mm(x, w1) + b1, 0.0)
    h = jnp.maximum(mm(h, w2) + b2, 0.0)
    h = jnp.maximum(mm(h, w3) + b3, 0.0)
    # Layer 4 in f32 on the VPU path, exactly as the kernel does it.
    out = jnp.sum(h * w4.astype(jnp.float32).reshape(1, -1), axis=-1,
                  keepdims=True)
    return out + b4.reshape(1, -1)


if __name__ == "__main__":
    key = jax.random.PRNGKey(0)
    D_IN = 256   # input_shape
    B = 32       # small batch -> single grid step, tile_b = 32

    kx, kp = jax.random.split(key)
    x = jax.random.normal(kx, (B, D_IN), jnp.float32)
    params = init_params(kp, D_IN)

    prepared = prepare_params(params)   # one-time prep, hoisted out of calls
    out = mlp_forward(x, prepared)
    out = jax.block_until_ready(out)

    ref = mlp_reference(x, params)
    assert out.shape == (B, 1), out.shape
    max_err = float(jnp.max(jnp.abs(out - ref)))
    assert jnp.allclose(out, ref, atol=1e-2, rtol=1e-2), \
        f"mismatch vs reference (max abs err {max_err})"

    print("KERNEL_OK")
</pallas_src>

<mosaic_0001>
module attributes {stable_mosaic.version = 11 : i64} {
  func.func @mlp_kernel(%arg0: i32, %arg1: memref<32x256xf32, #tpu.memory_space<vmem>>, %arg2: memref<256x2048xbf16, #tpu.memory_space<vmem>>, %arg3: memref<1x2048xf32, #tpu.memory_space<vmem>>, %arg4: memref<2048x512xbf16, #tpu.memory_space<vmem>>, %arg5: memref<1x512xf32, #tpu.memory_space<vmem>>, %arg6: memref<512x128xbf16, #tpu.memory_space<vmem>>, %arg7: memref<1x128xf32, #tpu.memory_space<vmem>>, %arg8: memref<1x128xf32, #tpu.memory_space<vmem>>, %arg9: memref<1xf32, #tpu.memory_space<smem>>, %arg10: memref<32x1xf32, #tpu.memory_space<vmem>>) attributes {dimension_semantics = [#tpu.dimension_semantics<parallel>], iteration_bounds = array<i64: 1>, scalar_prefetch = 0 : i64, scratch_operands = 0 : i64, tpu.core_type = #tpu.core_type<tc>, window_params = [{transform_indices = @transform_0, window_bounds = array<i64: 32, 256>}, {pipeline_mode = #tpu.pipeline_mode<synchronous>, transform_indices = @transform_1, window_bounds = array<i64: 256, 2048>}, {pipeline_mode = #tpu.pipeline_mode<synchronous>, transform_indices = @transform_2, window_bounds = array<i64: 1, 2048>}, {pipeline_mode = #tpu.pipeline_mode<synchronous>, transform_indices = @transform_3, window_bounds = array<i64: 2048, 512>}, {pipeline_mode = #tpu.pipeline_mode<synchronous>, transform_indices = @transform_4, window_bounds = array<i64: 1, 512>}, {pipeline_mode = #tpu.pipeline_mode<synchronous>, transform_indices = @transform_5, window_bounds = array<i64: 512, 128>}, {pipeline_mode = #tpu.pipeline_mode<synchronous>, transform_indices = @transform_6, window_bounds = array<i64: 1, 128>}, {pipeline_mode = #tpu.pipeline_mode<synchronous>, transform_indices = @transform_7, window_bounds = array<i64: 1, 128>}, {transform_indices = @transform_8, window_bounds = array<i64: 1>}, {transform_indices = @transform_9, window_bounds = array<i64: 32, 1>}]} {
    %c0 = arith.constant 0 : index
    %c0_0 = arith.constant 0 : index
    %0 = vector.load %arg1[%c0, %c0_0] : memref<32x256xf32, #tpu.memory_space<vmem>>, vector<32x256xf32>
    %1 = arith.truncf %0 : vector<32x256xf32> to vector<32x256xbf16>
    %c0_1 = arith.constant 0 : index
    %c0_2 = arith.constant 0 : index
    %2 = vector.load %arg2[%c0_1, %c0_2] : memref<256x2048xbf16, #tpu.memory_space<vmem>>, vector<256x2048xbf16>
    %cst = arith.constant dense<0.000000e+00> : vector<32x2048xf32>
    %3 = tpu.matmul %1, %2, %cst {dimension_numbers = #tpu.dot_dimension_numbers<[1], [0], [0], [1], [0, 0, 1, 1], [], []>} : vector<32x256xbf16>, vector<256x2048xbf16>, vector<32x2048xf32> -> vector<32x2048xf32>
    %c0_3 = arith.constant 0 : index
    %c0_4 = arith.constant 0 : index
    %4 = vector.load %arg3[%c0_3, %c0_4] : memref<1x2048xf32, #tpu.memory_space<vmem>>, vector<1x2048xf32>
    %5 = vector.broadcast %4 : vector<1x2048xf32> to vector<32x2048xf32>
    %6 = arith.addf %3, %5 : vector<32x2048xf32>
    %cst_5 = arith.constant 0.000000e+00 : f32
    %7 = vector.broadcast %cst_5 : f32 to vector<32x2048xf32>
    %8 = arith.maximumf %6, %7 : vector<32x2048xf32>
    %9 = arith.truncf %8 : vector<32x2048xf32> to vector<32x2048xbf16>
    %c0_6 = arith.constant 0 : index
    %c0_7 = arith.constant 0 : index
    %10 = vector.load %arg4[%c0_6, %c0_7] : memref<2048x512xbf16, #tpu.memory_space<vmem>>, vector<2048x512xbf16>
    %cst_8 = arith.constant dense<0.000000e+00> : vector<32x512xf32>
    %11 = tpu.matmul %9, %10, %cst_8 {dimension_numbers = #tpu.dot_dimension_numbers<[1], [0], [0], [1], [0, 0, 1, 1], [], []>} : vector<32x2048xbf16>, vector<2048x512xbf16>, vector<32x512xf32> -> vector<32x512xf32>
    %c0_9 = arith.constant 0 : index
    %c0_10 = arith.constant 0 : index
    %12 = vector.load %arg5[%c0_9, %c0_10] : memref<1x512xf32, #tpu.memory_space<vmem>>, vector<1x512xf32>
    %13 = vector.broadcast %12 : vector<1x512xf32> to vector<32x512xf32>
    %14 = arith.addf %11, %13 : vector<32x512xf32>
    %cst_11 = arith.constant 0.000000e+00 : f32
    %15 = vector.broadcast %cst_11 : f32 to vector<32x512xf32>
    %16 = arith.maximumf %14, %15 : vector<32x512xf32>
    %17 = arith.truncf %16 : vector<32x512xf32> to vector<32x512xbf16>
    %c0_12 = arith.constant 0 : index
    %c0_13 = arith.constant 0 : index
    %18 = vector.load %arg6[%c0_12, %c0_13] : memref<512x128xbf16, #tpu.memory_space<vmem>>, vector<512x128xbf16>
    %cst_14 = arith.constant dense<0.000000e+00> : vector<32x128xf32>
    %19 = tpu.matmul %17, %18, %cst_14 {dimension_numbers = #tpu.dot_dimension_numbers<[1], [0], [0], [1], [0, 0, 1, 1], [], []>} : vector<32x512xbf16>, vector<512x128xbf16>, vector<32x128xf32> -> vector<32x128xf32>
    %c0_15 = arith.constant 0 : index
    %c0_16 = arith.constant 0 : index
    %20 = vector.load %arg7[%c0_15, %c0_16] : memref<1x128xf32, #tpu.memory_space<vmem>>, vector<1x128xf32>
    %21 = vector.broadcast %20 : vector<1x128xf32> to vector<32x128xf32>
    %22 = arith.addf %19, %21 : vector<32x128xf32>
    %cst_17 = arith.constant 0.000000e+00 : f32
    %23 = vector.broadcast %cst_17 : f32 to vector<32x128xf32>
    %24 = arith.maximumf %22, %23 : vector<32x128xf32>
    %c0_18 = arith.constant 0 : index
    %c0_19 = arith.constant 0 : index
    %25 = vector.load %arg8[%c0_18, %c0_19] : memref<1x128xf32, #tpu.memory_space<vmem>>, vector<1x128xf32>
    %26 = vector.broadcast %25 : vector<1x128xf32> to vector<32x128xf32>
    %27 = arith.mulf %24, %26 : vector<32x128xf32>
    %cst_20 = arith.constant dense<0.000000e+00> : vector<32xf32>
    %28 = vector.multi_reduction <add>, %27, %cst_20 [1] : vector<32x128xf32> to vector<32xf32>
    %29 = vector.shape_cast %28 : vector<32xf32> to vector<32x1xf32>
    %c0_21 = arith.constant 0 : index
    %30 = memref.load %arg9[%c0_21] : memref<1xf32, #tpu.memory_space<smem>>
    %31 = vector.broadcast %30 : f32 to vector<32x1xf32>
    %32 = arith.addf %29, %31 : vector<32x1xf32>
    %c0_22 = arith.constant 0 : index
    %c0_23 = arith.constant 0 : index
    %33 = vector.load %arg10[%c0_22, %c0_23] : memref<32x1xf32, #tpu.memory_space<vmem>>, vector<32x1xf32>
    tpu.vector_store %arg10[%c0_22, %c0_23], %32 {strides = array<i32>} : memref<32x1xf32, #tpu.memory_space<vmem>>, vector<32x1xf32>,
    return
  }
  func.func @transform_0(%arg0: i32) -> (i32, i32) {
    %c0_i32 = arith.constant 0 : i32
    %c0_i32_0 = arith.constant 0 : i32
    return %arg0, %c0_i32 : i32, i32
  }
  func.func @transform_1(%arg0: i32) -> (i32, i32) {
    %c0_i32 = arith.constant 0 : i32
    %c0_i32_0 = arith.constant 0 : i32
    %c0_i32_1 = arith.constant 0 : i32
    return %c0_i32, %c0_i32_0 : i32, i32
  }
  func.func @transform_2(%arg0: i32) -> (i32, i32) {
    %c0_i32 = arith.constant 0 : i32
    %c0_i32_0 = arith.constant 0 : i32
    %c0_i32_1 = arith.constant 0 : i32
    return %c0_i32, %c0_i32_0 : i32, i32
  }
  func.func @transform_3(%arg0: i32) -> (i32, i32) {
    %c0_i32 = arith.constant 0 : i32
    %c0_i32_0 = arith.constant 0 : i32
    %c0_i32_1 = arith.constant 0 : i32
    return %c0_i32, %c0_i32_0 : i32, i32
  }
  func.func @transform_4(%arg0: i32) -> (i32, i32) {
    %c0_i32 = arith.constant 0 : i32
    %c0_i32_0 = arith.constant 0 : i32
    %c0_i32_1 = arith.constant 0 : i32
    return %c0_i32, %c0_i32_0 : i32, i32
  }
  func.func @transform_5(%arg0: i32) -> (i32, i32) {
    %c0_i32 = arith.constant 0 : i32
    %c0_i32_0 = arith.constant 0 : i32
    %c0_i32_1 = arith.constant 0 : i32
    return %c0_i32, %c0_i32_0 : i32, i32
  }
  func.func @transform_6(%arg0: i32) -> (i32, i32) {
    %c0_i32 = arith.constant 0 : i32
    %c0_i32_0 = arith.constant 0 : i32
    %c0_i32_1 = arith.constant 0 : i32
    return %c0_i32, %c0_i32_0 : i32, i32
  }
  func.func @transform_7(%arg0: i32) -> (i32, i32) {
    %c0_i32 = arith.constant 0 : i32
    %c0_i32_0 = arith.constant 0 : i32
    %c0_i32_1 = arith.constant 0 : i32
    return %c0_i32, %c0_i32_0 : i32, i32
  }
  func.func @transform_8(%arg0: i32) -> i32 {
    %c0_i32 = arith.constant 0 : i32
    %c0_i32_0 = arith.constant 0 : i32
    return %c0_i32 : i32
  }
  func.func @transform_9(%arg0: i32) -> (i32, i32) {
    %c0_i32 = arith.constant 0 : i32
    %c0_i32_0 = arith.constant 0 : i32
    return %arg0, %c0_i32 : i32, i32
  }
}

</mosaic_0001>

<llo_original>
// kernel: tpu_custom_call.1
$region0: #{tpu_custom_call.1}
  #allocation0 [shape = 'u32[]', space=smem, size = 0x4, offset = 0x4, fixed_abs, tag = 'smem constant byte address 0x4 - core index']
  #allocation1 [shape = 'u32[144,128]{1,0:T(1,128)}', space=vmem, size = 0x12000, scoped, tag = 'internal scratch']
  #allocation2 [shape = 'f32[1]{0:T(128)S(6)}', space=smem, size = 0x200, scoped, tag = 'scoped memory for tpu_custom_call.1']
  %s0 = inlined_call_operand.hbm [shape: f32[32,256], index: 0, kind: input, shape index: {}]
  %s1 = inlined_call_operand.hbm [shape: bf16[256,2048], index: 1, kind: input, shape index: {}]
  %s2 = inlined_call_operand.hbm [shape: f32[1,2048], index: 2, kind: input, shape index: {}]
  %s3 = inlined_call_operand.hbm [shape: bf16[2048,512], index: 3, kind: input, shape index: {}]
  %s4 = inlined_call_operand.hbm [shape: f32[1,512], index: 4, kind: input, shape index: {}]
  %s5 = inlined_call_operand.hbm [shape: bf16[512,128], index: 5, kind: input, shape index: {}]
  %s6 = inlined_call_operand.hbm [shape: f32[1,128], index: 6, kind: input, shape index: {}]
  %s7 = inlined_call_operand.hbm [shape: f32[1,128], index: 7, kind: input, shape index: {}]
  %s8 = inlined_call_operand.<no memory space> [shape: f32[1], index: 8, kind: input, shape index: {}]
  %s9 = inlined_call_operand.vmem [shape: f32[32,1], index: 9, kind: output, shape index: {}]
  %s10 = sld [smem:[#allocation0]]
  $region78: #{tpu_custom_call.1} parent=0
    _
  %s12 = ssub.s32 1, %s10
  %s13 = scalar_select 0, %s12, %s10
  %14 = sst [smem:[#allocation2]] %s8
  $region1: #{tpu_custom_call.1} parent=0
    #allocation3 [shape = 'u8[32768]{0}', space=vmem, size = 0x8000, scoped, tag = 'input window, operand 0, single buffered']
    #allocation4 [shape = 's32[1]{0}', space=sflag, size = 0x4, scoped, tag = 'scoped memory for tpu_custom_call.1']
    #allocation5 [shape = 'u8[1048576]{0}', space=vmem, size = 0x100000, scoped, tag = 'input window, operand 1, single buffered']
    #allocation6 [shape = 's32[1]{0}', space=sflag, size = 0x4, scoped, tag = 'scoped memory for tpu_custom_call.1']
    #allocation7 [shape = 'u8[8192]{0}', space=vmem, size = 0x2000, scoped, tag = 'input window, operand 2, single buffered']
    #allocation8 [shape = 'u8[2097152]{0}', space=vmem, size = 0x200000, scoped, tag = 'input window, operand 3, single buffered']
    #allocation9 [shape = 's32[1]{0}', space=sflag, size = 0x4, scoped, tag = 'scoped memory for tpu_custom_call.1']
    #allocation10 [shape = 'u8[2048]{0}', space=vmem, size = 0x800, scoped, tag = 'input window, operand 4, single buffered']
    #allocation11 [shape = 'u8[131072]{0}', space=vmem, size = 0x20000, scoped, tag = 'input window, operand 5, single buffered']
    #allocation12 [shape = 's32[1]{0}', space=sflag, size = 0x4, scoped, tag = 'scoped memory for tpu_custom_call.1']
    #allocation13 [shape = 'u8[512]{0}', space=vmem, size = 0x400, scoped, tag = 'input window, operand 6, single buffered']
    #allocation14 [shape = 'u8[512]{0}', space=vmem, size = 0x400, scoped, tag = 'input window, operand 7, single buffered']
    #allocation15 [shape = 's32[1]{0}', space=sflag, size = 0x4, scoped, tag = 'scoped memory for tpu_custom_call.1']
    %15 = vsyncpa [#allocation4], 0
    %16 = vsyncpa [#allocation6], 0
    %17 = vsyncpa [#allocation9], 0
    %18 = vsyncpa [#allocation12], 0
    %19 = vsyncpa [#allocation15], 0
    // Predicated region
    $region2: #{tpu_custom_call.1} parent=1 // pred_check
      _
    $region3: #{tpu_custom_call.1} parent=1 // pred_check_branch
      %21 = sbr.rel (0) target = $region5
    $region4: #{tpu_custom_call.1} parent=1 // pred_region
      %s23 = ssub.s32 1024, 1024
      %24 = vsyncadd [#allocation4], %s23
      %s25 = sshll.u32 [#allocation3], 4
      %s26 = int_to_ptr.vmem [resolvable:$true] %s25
      %31 = dma.hbm_to_vmem [thread:$0]  %s0, 1024, %s26, [#allocation4], 256, 256, 16
    $region5: #{tpu_custom_call.1} parent=1 // pred_fallthru
      _
    // Predicated region
    $region6: #{tpu_custom_call.1} parent=1 // pred_check
      _
    $region7: #{tpu_custom_call.1} parent=1 // pred_check_branch
      %33 = sbr.rel (0) target = $region9
    $region8: #{tpu_custom_call.1} parent=1 // pred_region
      %s35 = ssub.s32 32768, 32768
      %36 = vsyncadd [#allocation6], %s35
      %s37 = sshll.u32 [#allocation5], 4
      %s38 = int_to_ptr.vmem [resolvable:$true] %s37
      %43 = dma.hbm_to_vmem [thread:$0]  %s1, 32768, %s38, [#allocation6], 1024, 1024, 64
    $region9: #{tpu_custom_call.1} parent=1 // pred_fallthru
      _
    // Predicated region
    $region10: #{tpu_custom_call.1} parent=1 // pred_check
      _
    $region11: #{tpu_custom_call.1} parent=1 // pred_check_branch
      %45 = sbr.rel (0) target = $region13
    $region12: #{tpu_custom_call.1} parent=1 // pred_region
      %s47 = ssub.s32 256, 256
      %48 = vsyncadd [#allocation6], %s47
      %s50 = sshll.u32 [#allocation7], 4
      %s51 = int_to_ptr.vmem [resolvable:$true] %s50
      %53 = dma.hbm_to_vmem [thread:$0]  %s2, 256, %s51, [#allocation6]
    $region13: #{tpu_custom_call.1} parent=1 // pred_fallthru
      _
    // Predicated region
    $region14: #{tpu_custom_call.1} parent=1 // pred_check
      _
    $region15: #{tpu_custom_call.1} parent=1 // pred_check_branch
      %55 = sbr.rel (0) target = $region17
    $region16: #{tpu_custom_call.1} parent=1 // pred_region
      %s57 = ssub.s32 65536, 65536
      %58 = vsyncadd [#allocation9], %s57
      %s59 = sshll.u32 [#allocation8], 4
      %s60 = int_to_ptr.vmem [resolvable:$true] %s59
      %65 = dma.hbm_to_vmem [thread:$0]  %s3, 65536, %s60, [#allocation9], 256, 256, 16
    $region17: #{tpu_custom_call.1} parent=1 // pred_fallthru
      _
    // Predicated region
    $region18: #{tpu_custom_call.1} parent=1 // pred_check
      _
    $region19: #{tpu_custom_call.1} parent=1 // pred_check_branch
      %67 = sbr.rel (0) target = $region21
    $region20: #{tpu_custom_call.1} parent=1 // pred_region
      %s69 = ssub.s32 64, 64
      %70 = vsyncadd [#allocation9], %s69
      %s72 = sshll.u32 [#allocation10], 4
      %s73 = int_to_ptr.vmem [resolvable:$true] %s72
      %75 = dma.hbm_to_vmem [thread:$0]  %s4, 64, %s73, [#allocation9]
    $region21: #{tpu_custom_call.1} parent=1 // pred_fallthru
      _
    // Predicated region
    $region22: #{tpu_custom_call.1} parent=1 // pred_check
      _
    $region23: #{tpu_custom_call.1} parent=1 // pred_check_branch
      %77 = sbr.rel (0) target = $region25
    $region24: #{tpu_custom_call.1} parent=1 // pred_region
      %s79 = ssub.s32 4096, 4096
      %80 = vsyncadd [#allocation12], %s79
      %s81 = sshll.u32 [#allocation11], 4
      %s82 = int_to_ptr.vmem [resolvable:$true] %s81
      %87 = dma.hbm_to_vmem [thread:$0]  %s5, 4096, %s82, [#allocation12], 64, 64, 4
    $region25: #{tpu_custom_call.1} parent=1 // pred_fallthru
      _
    // Predicated region
    $region26: #{tpu_custom_call.1} parent=1 // pred_check
      _
    $region27: #{tpu_custom_call.1} parent=1 // pred_check_branch
      %89 = sbr.rel (0) target = $region29
    $region28: #{tpu_custom_call.1} parent=1 // pred_region
      %s91 = ssub.s32 16, 16
      %92 = vsyncadd [#allocation12], %s91
      %s94 = sshll.u32 [#allocation13], 4
      %s95 = int_to_ptr.vmem [resolvable:$true] %s94
      %97 = dma.hbm_to_vmem [thread:$0]  %s6, 16, %s95, [#allocation12]
    $region29: #{tpu_custom_call.1} parent=1 // pred_fallthru
      _
    // Predicated region
    $region30: #{tpu_custom_call.1} parent=1 // pred_check
      _
    $region31: #{tpu_custom_call.1} parent=1 // pred_check_branch
      %99 = sbr.rel (0) target = $region33
    $region32: #{tpu_custom_call.1} parent=1 // pred_region
      %s101 = ssub.s32 16, 16
      %102 = vsyncadd [#allocation15], %s101
      %s104 = sshll.u32 [#allocation14], 4
      %s105 = int_to_ptr.vmem [resolvable:$true] %s104
      %107 = dma.hbm_to_vmem [thread:$0]  %s7, 16, %s105, [#allocation15]
    $region33: #{tpu_custom_call.1} parent=1 // pred_fallthru
      _
    // Predicated region
    $region34: #{tpu_custom_call.1} parent=1 // pred_check
      _
    $region35: #{tpu_custom_call.1} parent=1 // pred_check_branch
      %109 = sbr.rel (0) target = $region37
    $region36: #{tpu_custom_call.1} parent=1 // pred_region
      _
    $region37: #{tpu_custom_call.1} parent=1 // pred_fallthru
      _
    // Predicated region
    $region38: #{tpu_custom_call.1} parent=1 // pred_check
      _
    $region39: #{tpu_custom_call.1} parent=1 // pred_check_branch
      %111 = sbr.rel (0) target = $region41
    $region40: #{tpu_custom_call.1} parent=1 // pred_region
      %112 = dma.done [#allocation4], 1024
    $region41: #{tpu_custom_call.1} parent=1 // pred_fallthru
      _
    // Predicated region
    $region42: #{tpu_custom_call.1} parent=1 // pred_check
      _
    $region43: #{tpu_custom_call.1} parent=1 // pred_check_branch
      %114 = sbr.rel (0) target = $region45
    $region44: #{tpu_custom_call.1} parent=1 // pred_region
      %115 = dma.done [#allocation6], 32768
    $region45: #{tpu_custom_call.1} parent=1 // pred_fallthru
      _
    // Predicated region
    $region46: #{tpu_custom_call.1} parent=1 // pred_check
      _
    $region47: #{tpu_custom_call.1} parent=1 // pred_check_branch
      %117 = sbr.rel (0) target = $region49
    $region48: #{tpu_custom_call.1} parent=1 // pred_region
      %118 = dma.done [#allocation6], 256
    $region49: #{tpu_custom_call.1} parent=1 // pred_fallthru
      _
    // Predicated region
    $region50: #{tpu_custom_call.1} parent=1 // pred_check
      _
    $region51: #{tpu_custom_call.1} parent=1 // pred_check_branch
      %120 = sbr.rel (0) target = $region53
    $region52: #{tpu_custom_call.1} parent=1 // pred_region
      %121 = dma.done [#allocation9], 65536
    $region53: #{tpu_custom_call.1} parent=1 // pred_fallthru
      _
    // Predicated region
    $region54: #{tpu_custom_call.1} parent=1 // pred_check
      _
    $region55: #{tpu_custom_call.1} parent=1 // pred_check_branch
      %123 = sbr.rel (0) target = $region57
    $region56: #{tpu_custom_call.1} parent=1 // pred_region
      %124 = dma.done [#allocation9], 64
    $region57: #{tpu_custom_call.1} parent=1 // pred_fallthru
      _
    // Predicated region
    $region58: #{tpu_custom_call.1} parent=1 // pred_check
      _
    $region59: #{tpu_custom_call.1} parent=1 // pred_check_branch
      %126 = sbr.rel (0) target = $region61
    $region60: #{tpu_custom_call.1} parent=1 // pred_region
      %127 = dma.done [#allocation12], 4096
    $region61: #{tpu_custom_call.1} parent=1 // pred_fallthru
      _
    // Predicated region
    $region62: #{tpu_custom_call.1} parent=1 // pred_check
      _
    $region63: #{tpu_custom_call.1} parent=1 // pred_check_branch
      %129 = sbr.rel (0) target = $region65
    $region64: #{tpu_custom_call.1} parent=1 // pred_region
      %130 = dma.done [#allocation12], 16
    $region65: #{tpu_custom_call.1} parent=1 // pred_fallthru
      _
    // Predicated region
    $region66: #{tpu_custom_call.1} parent=1 // pred_check
      _
    $region67: #{tpu_custom_call.1} parent=1 // pred_check_branch
      %132 = sbr.rel (0) target = $region69
    $region68: #{tpu_custom_call.1} parent=1 // pred_region
      %133 = dma.done [#allocation15], 16
    $region69: #{tpu_custom_call.1} parent=1 // pred_fallthru
      _
    %v135 = vld [vmem:[#allocation3] sm:$0xff]
    %v136 = vld [vmem:[#allocation3 + $0x8] sm:$0xff]
    %v137 = vld [vmem:[#allocation3 + $0x10] sm:$0xff]
    %v138 = vld [vmem:[#allocation3 + $0x18] sm:$0xff]
    %v139 = vld [vmem:[#allocation3 + $0x20] sm:$0xff]
    %v140 = vld [vmem:[#allocation3 + $0x28] sm:$0xff]
    %v141 = vld [vmem:[#allocation3 + $0x30] sm:$0xff]
    %v142 = vld [vmem:[#allocation3 + $0x38] sm:$0xff]
    %v143 = vpack.c.bf16 %v137, %v135
    %v144 = vpack.c.bf16 %v138, %v136
    %v145 = vpack.c.bf16 %v141, %v139
    %v146 = vpack.c.bf16 %v142, %v140
    %v147 = vld [vmem:[#allocation5] sm:$0xff]
    %v148 = vld [vmem:[#allocation5 + $0x8] sm:$0xff]
    %v149 = vld [vmem:[#allocation5 + $0x10] sm:$0xff]
    %v150 = vld [vmem:[#allocation5 + $0x18] sm:$0xff]
    %v151 = vld [vmem:[#allocation5 + $0x20] sm:$0xff]
    %v152 = vld [vmem:[#allocation5 + $0x28] sm:$0xff]
    %v153 = vld [vmem:[#allocation5 + $0x30] sm:$0xff]
    %v154 = vld [vmem:[#allocation5 + $0x38] sm:$0xff]
    %v155 = vld [vmem:[#allocation5 + $0x40] sm:$0xff]
    %v156 = vld [vmem:[#allocation5 + $0x48] sm:$0xff]
    %v157 = vld [vmem:[#allocation5 + $0x50] sm:$0xff]
    %v158 = vld [vmem:[#allocation5 + $0x58] sm:$0xff]
    %v159 = vld [vmem:[#allocation5 + $0x60] sm:$0xff]
    %v160 = vld [vmem:[#allocation5 + $0x68] sm:$0xff]
    %v161 = vld [vmem:[#allocation5 + $0x70] sm:$0xff]
    %v162 = vld [vmem:[#allocation5 + $0x78] sm:$0xff]
    %v163 = vld [vmem:[#allocation5 + $0x80] sm:$0xff]
    %v164 = vld [vmem:[#allocation5 + $0x88] sm:$0xff]
    %v165 = vld [vmem:[#allocation5 + $0x90] sm:$0xff]
    %v166 = vld [vmem:[#allocation5 + $0x98] sm:$0xff]
    %v167 = vld [vmem:[#allocation5 + $0xa0] sm:$0xff]
    %v168 = vld [vmem:[#allocation5 + $0xa8] sm:$0xff]
    %v169 = vld [vmem:[#allocation5 + $0xb0] sm:$0xff]
    %v170 = vld [vmem:[#allocation5 + $0xb8] sm:$0xff]
    %v171 = vld [vmem:[#allocation5 + $0xc0] sm:$0xff]
    %v172 = vld [vmem:[#allocation5 + $0xc8] sm:$0xff]
    %v173 = vld [vmem:[#allocation5 + $0xd0] sm:$0xff]
    %v174 = vld [vmem:[#allocation5 + $0xd8] sm:$0xff]
    %v175 = vld [vmem:[#allocation5 + $0xe0] sm:$0xff]
    %v176 = vld [vmem:[#allocation5 + $0xe8] sm:$0xff]
    %v177 = vld [vmem:[#allocation5 + $0xf0] sm:$0xff]
    %v178 = vld [vmem:[#allocation5 + $0xf8] sm:$0xff]
    %v179 = vld [vmem:[#allocation5 + $0x100] sm:$0xff]
    %v180 = vld [vmem:[#allocation5 + $0x108] sm:$0xff]
    %v181 = vld [vmem:[#allocation5 + $0x110] sm:$0xff]
    %v182 = vld [vmem:[#allocation5 + $0x118] sm:$0xff]
    %v183 = vld [vmem:[#allocation5 + $0x120] sm:$0xff]
    %v184 = vld [vmem:[#allocation5 + $0x128] sm:$0xff]
    %v185 = vld [vmem:[#allocation5 + $0x130] sm:$0xff]
    %v186 = vld [vmem:[#allocation5 + $0x138] sm:$0xff]
    %v187 = vld [vmem:[#allocation5 + $0x140] sm:$0xff]
    %v188 = vld [vmem:[#allocation5 + $0x148] sm:$0xff]
    %v189 = vld [vmem:[#allocation5 + $0x150] sm:$0xff]
    %v190 = vld [vmem:[#allocation5 + $0x158] sm:$0xff]
    %v191 = vld [vmem:[#allocation5 + $0x160] sm:$0xff]
    %v192 = vld [vmem:[#allocation5 + $0x168] sm:$0xff]
    %v193 = vld [vmem:[#allocation5 + $0x170] sm:$0xff]
    %v194 = vld [vmem:[#allocation5 + $0x178] sm:$0xff]
    %v195 = vld [vmem:[#allocation5 + $0x180] sm:$0xff]
    %v196 = vld [vmem:[#allocation5 + $0x188] sm:$0xff]
    %v197 = vld [vmem:[#allocation5 + $0x190] sm:$0xff]
    %v198 = vld [vmem:[#allocation5 + $0x198] sm:$0xff]
    %v199 = vld [vmem:[#allocation5 + $0x1a0] sm:$0xff]
    %v200 = vld [vmem:[#allocation5 + $0x1a8] sm:$0xff]
    %v201 = vld [vmem:[#allocation5 + $0x1b0] sm:$0xff]
    %v202 = vld [vmem:[#allocation5 + $0x1b8] sm:$0xff]
    %v203 = vld [vmem:[#allocation5 + $0x1c0] sm:$0xff]
    %v204 = vld [vmem:[#allocation5 + $0x1c8] sm:$0xff]
    %v205 = vld [vmem:[#allocation5 + $0x1d0] sm:$0xff]
    %v206 = vld [vmem:[#allocation5 + $0x1d8] sm:$0xff]
    %v207 = vld [vmem:[#allocation5 + $0x1e0] sm:$0xff]
    %v208 = vld [vmem:[#allocation5 + $0x1e8] sm:$0xff]
    %v209 = vld [vmem:[#allocation5 + $0x1f0] sm:$0xff]
    %v210 = vld [vmem:[#allocation5 + $0x1f8] sm:$0xff]
    %v211 = vld [vmem:[#allocation5 + $0x200] sm:$0xff]
    %v212 = vld [vmem:[#allocation5 + $0x208] sm:$0xff]
    %v213 = vld [vmem:[#allocation5 + $0x210] sm:$0xff]
    %v214 = vld [vmem:[#allocation5 + $0x218] sm:$0xff]
    %v215 = vld [vmem:[#allocation5 + $0x220] sm:$0xff]
    %v216 = vld [vmem:[#allocation5 + $0x228] sm:$0xff]
    %v217 = vld [vmem:[#allocation5 + $0x230] sm:$0xff]
    %v218 = vld [vmem:[#allocation5 + $0x238] sm:$0xff]
    %v219 = vld [vmem:[#allocation5 + $0x240] sm:$0xff]
    %v220 = vld [vmem:[#allocation5 + $0x248] sm:$0xff]
    %v221 = vld [vmem:[#allocation5 + $0x250] sm:$0xff]
    %v222 = vld [vmem:[#allocation5 + $0x258] sm:$0xff]
    %v223 = vld [vmem:[#allocation5 + $0x260] sm:$0xff]
    %v224 = vld [vmem:[#allocation5 + $0x268] sm:$0xff]
    %v225 = vld [vmem:[#allocation5 + $0x270] sm:$0xff]
    %v226 = vld [vmem:[#allocation5 + $0x278] sm:$0xff]
    %v227 = vld [vmem:[#allocation5 + $0x280] sm:$0xff]
    %v228 = vld [vmem:[#allocation5 + $0x288] sm:$0xff]
    %v229 = vld [vmem:[#allocation5 + $0x290] sm:$0xff]
    %v230 = vld [vmem:[#allocation5 + $0x298] sm:$0xff]
    %v231 = vld [vmem:[#allocation5 + $0x2a0] sm:$0xff]
    %v232 = vld [vmem:[#allocation5 + $0x2a8] sm:$0xff]
    %v233 = vld [vmem:[#allocation5 + $0x2b0] sm:$0xff]
    %v234 = vld [vmem:[#allocation5 + $0x2b8] sm:$0xff]
    %v235 = vld [vmem:[#allocation5 + $0x2c0] sm:$0xff]
    %v236 = vld [vmem:[#allocation5 + $0x2c8] sm:$0xff]
    %v237 = vld [vmem:[#allocation5 + $0x2d0] sm:$0xff]
    %v238 = vld [vmem:[#allocation5 + $0x2d8] sm:$0xff]
    %v239 = vld [vmem:[#allocation5 + $0x2e0] sm:$0xff]
    %v240 = vld [vmem:[#allocation5 + $0x2e8] sm:$0xff]
    %v241 = vld [vmem:[#allocation5 + $0x2f0] sm:$0xff]
    %v242 = vld [vmem:[#allocation5 + $0x2f8] sm:$0xff]
    %v243 = vld [vmem:[#allocation5 + $0x300] sm:$0xff]
    %v244 = vld [vmem:[#allocation5 + $0x308] sm:$0xff]
    %v245 = vld [vmem:[#allocation5 + $0x310] sm:$0xff]
    %v246 = vld [vmem:[#allocation5 + $0x318] sm:$0xff]
    %v247 = vld [vmem:[#allocation5 + $0x320] sm:$0xff]
    %v248 = vld [vmem:[#allocation5 + $0x328] sm:$0xff]
    %v249 = vld [vmem:[#allocation5 + $0x330] sm:$0xff]
    %v250 = vld [vmem:[#allocation5 + $0x338] sm:$0xff]
    %v251 = vld [vmem:[#allocation5 + $0x340] sm:$0xff]
    %v252 = vld [vmem:[#allocation5 + $0x348] sm:$0xff]
    %v253 = vld [vmem:[#allocation5 + $0x350] sm:$0xff]
    %v254 = vld [vmem:[#allocation5 + $0x358] sm:$0xff]
    %v255 = vld [vmem:[#allocation5 + $0x360] sm:$0xff]
    %v256 = vld [vmem:[#allocation5 + $0x368] sm:$0xff]
    %v257 = vld [vmem:[#allocation5 + $0x370] sm:$0xff]
    %v258 = vld [vmem:[#allocation5 + $0x378] sm:$0xff]
    %v259 = vld [vmem:[#allocation5 + $0x380] sm:$0xff]
    %v260 = vld [vmem:[#allocation5 + $0x388] sm:$0xff]
    %v261 = vld [vmem:[#allocation5 + $0x390] sm:$0xff]
    %v262 = vld [vmem:[#allocation5 + $0x398] sm:$0xff]
    %v263 = vld [vmem:[#allocation5 + $0x3a0] sm:$0xff]
    %v264 = vld [vmem:[#allocation5 + $0x3a8] sm:$0xff]
    %v265 = vld [vmem:[#allocation5 + $0x3b0] sm:$0xff]
    %v266 = vld [vmem:[#allocation5 + $0x3b8] sm:$0xff]
    %v267 = vld [vmem:[#allocation5 + $0x3c0] sm:$0xff]
    %v268 = vld [vmem:[#allocation5 + $0x3c8] sm:$0xff]
    %v269 = vld [vmem:[#allocation5 + $0x3d0] sm:$0xff]
    %v270 = vld [vmem:[#allocation5 + $0x3d8] sm:$0xff]
    %v271 = vld [vmem:[#allocation5 + $0x3e0] sm:$0xff]
    %v272 = vld [vmem:[#allocation5 + $0x3e8] sm:$0xff]
    %v273 = vld [vmem:[#allocation5 + $0x3f0] sm:$0xff]
    %v274 = vld [vmem:[#allocation5 + $0x3f8] sm:$0xff]
    %v275 = vld [vmem:[#allocation5 + $0x400] sm:$0xff]
    %v276 = vld [vmem:[#allocation5 + $0x408] sm:$0xff]
    %v277 = vld [vmem:[#allocation5 + $0x410] sm:$0xff]
    %v278 = vld [vmem:[#allocation5 + $0x418] sm:$0xff]
    %v279 = vld [vmem:[#allocation5 + $0x420] sm:$0xff]
    %v280 = vld [vmem:[#allocation5 + $0x428] sm:$0xff]
    %v281 = vld [vmem:[#allocation5 + $0x430] sm:$0xff]
    %v282 = vld [vmem:[#allocation5 + $0x438] sm:$0xff]
    %v283 = vld [vmem:[#allocation5 + $0x440] sm:$0xff]
    %v284 = vld [vmem:[#allocation5 + $0x448] sm:$0xff]
    %v285 = vld [vmem:[#allocation5 + $0x450] sm:$0xff]
    %v286 = vld [vmem:[#allocation5 + $0x458] sm:$0xff]
    %v287 = vld [vmem:[#allocation5 + $0x460] sm:$0xff]
    %v288 = vld [vmem:[#allocation5 + $0x468] sm:$0xff]
    %v289 = vld [vmem:[#allocation5 + $0x470] sm:$0xff]
    %v290 = vld [vmem:[#allocation5 + $0x478] sm:$0xff]
    %v291 = vld [vmem:[#allocation5 + $0x480] sm:$0xff]
    %v292 = vld [vmem:[#allocation5 + $0x488] sm:$0xff]
    %v293 = vld [vmem:[#allocation5 + $0x490] sm:$0xff]
    %v294 = vld [vmem:[#allocation5 + $0x498] sm:$0xff]
    %v295 = vld [vmem:[#allocation5 + $0x4a0] sm:$0xff]
    %v296 = vld [vmem:[#allocation5 + $0x4a8] sm:$0xff]
    %v297 = vld [vmem:[#allocation5 + $0x4b0] sm:$0xff]
    %v298 = vld [vmem:[#allocation5 + $0x4b8] sm:$0xff]
    %v299 = vld [vmem:[#allocation5 + $0x4c0] sm:$0xff]
    %v300 = vld [vmem:[#allocation5 + $0x4c8] sm:$0xff]
    %v301 = vld [vmem:[#allocation5 + $0x4d0] sm:$0xff]
    %v302 = vld [vmem:[#allocation5 + $0x4d8] sm:$0xff]
    %v303 = vld [vmem:[#allocation5 + $0x4e0] sm:$0xff]
    %v304 = vld [vmem:[#allocation5 + $0x4e8] sm:$0xff]
    %v305 = vld [vmem:[#allocation5 + $0x4f0] sm:$0xff]
    %v306 = vld [vmem:[#allocation5 + $0x4f8] sm:$0xff]
    %v307 = vld [vmem:[#allocation5 + $0x500] sm:$0xff]
    %v308 = vld [vmem:[#allocation5 + $0x508] sm:$0xff]
    %v309 = vld [vmem:[#allocation5 + $0x510] sm:$0xff]
    %v310 = vld [vmem:[#allocation5 + $0x518] sm:$0xff]
    %v311 = vld [vmem:[#allocation5 + $0x520] sm:$0xff]
    %v312 = vld [vmem:[#allocation5 + $0x528] sm:$0xff]
    %v313 = vld [vmem:[#allocation5 + $0x530] sm:$0xff]
    %v314 = vld [vmem:[#allocation5 + $0x538] sm:$0xff]
    %v315 = vld [vmem:[#allocation5 + $0x540] sm:$0xff]
    %v316 = vld [vmem:[#allocation5 + $0x548] sm:$0xff]
    %v317 = vld [vmem:[#allocation5 + $0x550] sm:$0xff]
    %v318 = vld [vmem:[#allocation5 + $0x558] sm:$0xff]
    %v319 = vld [vmem:[#allocation5 + $0x560] sm:$0xff]
    %v320 = vld [vmem:[#allocation5 + $0x568] sm:$0xff]
    %v321 = vld [vmem:[#allocation5 + $0x570] sm:$0xff]
    %v322 = vld [vmem:[#allocation5 + $0x578] sm:$0xff]
    %v323 = vld [vmem:[#allocation5 + $0x580] sm:$0xff]
    %v324 = vld [vmem:[#allocation5 + $0x588] sm:$0xff]
    %v325 = vld [vmem:[#allocation5 + $0x590] sm:$0xff]
    %v326 = vld [vmem:[#allocation5 + $0x598] sm:$0xff]
    %v327 = vld [vmem:[#allocation5 + $0x5a0] sm:$0xff]
    %v328 = vld [vmem:[#allocation5 + $0x5a8] sm:$0xff]
    %v329 = vld [vmem:[#allocation5 + $0x5b0] sm:$0xff]
    %v330 = vld [vmem:[#allocation5 + $0x5b8] sm:$0xff]
    %v331 = vld [vmem:[#allocation5 + $0x5c0] sm:$0xff]
    %v332 = vld [vmem:[#allocation5 + $0x5c8] sm:$0xff]
    %v333 = vld [vmem:[#allocation5 + $0x5d0] sm:$0xff]
    %v334 = vld [vmem:[#allocation5 + $0x5d8] sm:$0xff]
    %v335 = vld [vmem:[#allocation5 + $0x5e0] sm:$0xff]
    %v336 = vld [vmem:[#allocation5 + $0x5e8] sm:$0xff]
    %v337 = vld [vmem:[#allocation5 + $0x5f0] sm:$0xff]
    %v338 = vld [vmem:[#allocation5 + $0x5f8] sm:$0xff]
    %v339 = vld [vmem:[#allocation5 + $0x600] sm:$0xff]
    %v340 = vld [vmem:[#allocation5 + $0x608] sm:$0xff]
    %v341 = vld [vmem:[#allocation5 + $0x610] sm:$0xff]
    %v342 = vld [vmem:[#allocation5 + $0x618] sm:$0xff]
    %v343 = vld [vmem:[#allocation5 + $0x620] sm:$0xff]
    %v344 = vld [vmem:[#allocation5 + $0x628] sm:$0xff]
    %v345 = vld [vmem:[#allocation5 + $0x630] sm:$0xff]
    %v346 = vld [vmem:[#allocation5 + $0x638] sm:$0xff]
    %v347 = vld [vmem:[#allocation5 + $0x640] sm:$0xff]
    %v348 = vld [vmem:[#allocation5 + $0x648] sm:$0xff]
    %v349 = vld [vmem:[#allocation5 + $0x650] sm:$0xff]
    %v350 = vld [vmem:[#allocation5 + $0x658] sm:$0xff]
    %v351 = vld [vmem:[#allocation5 + $0x660] sm:$0xff]
    %v352 = vld [vmem:[#allocation5 + $0x668] sm:$0xff]
    %v353 = vld [vmem:[#allocation5 + $0x670] sm:$0xff]
    %v354 = vld [vmem:[#allocation5 + $0x678] sm:$0xff]
    %v355 = vld [vmem:[#allocation5 + $0x680] sm:$0xff]
    %v356 = vld [vmem:[#allocation5 + $0x688] sm:$0xff]
    %v357 = vld [vmem:[#allocation5 + $0x690] sm:$0xff]
    %v358 = vld [vmem:[#allocation5 + $0x698] sm:$0xff]
    %v359 = vld [vmem:[#allocation5 + $0x6a0] sm:$0xff]
    %v360 = vld [vmem:[#allocation5 + $0x6a8] sm:$0xff]
    %v361 = vld [vmem:[#allocation5 + $0x6b0] sm:$0xff]
    %v362 = vld [vmem:[#allocation5 + $0x6b8] sm:$0xff]
    %v363 = vld [vmem:[#allocation5 + $0x6c0] sm:$0xff]
    %v364 = vld [vmem:[#allocation5 + $0x6c8] sm:$0xff]
    %v365 = vld [vmem:[#allocation5 + $0x6d0] sm:$0xff]
    %v366 = vld [vmem:[#allocation5 + $0x6d8] sm:$0xff]
    %v367 = vld [vmem:[#allocation5 + $0x6e0] sm:$0xff]
    %v368 = vld [vmem:[#allocation5 + $0x6e8] sm:$0xff]
    %v369 = vld [vmem:[#allocation5 + $0x6f0] sm:$0xff]
    %v370 = vld [vmem:[#allocation5 + $0x6f8] sm:$0xff]
    %v371 = vld [vmem:[#allocation5 + $0x700] sm:$0xff]
    %v372 = vld [vmem:[#allocation5 + $0x708] sm:$0xff]
    %v373 = vld [vmem:[#allocation5 + $0x710] sm:$0xff]
    %v374 = vld [vmem:[#allocation5 + $0x718] sm:$0xff]
    %v375 = vld [vmem:[#allocation5 + $0x720] sm:$0xff]
    %v376 = vld [vmem:[#allocation5 + $0x728] sm:$0xff]
    %v377 = vld [vmem:[#allocation5 + $0x730] sm:$0xff]
    %v378 = vld [vmem:[#allocation5 + $0x738] sm:$0xff]
    %v379 = vld [vmem:[#allocation5 + $0x740] sm:$0xff]
    %v380 = vld [vmem:[#allocation5 + $0x748] sm:$0xff]
    %v381 = vld [vmem:[#allocation5 + $0x750] sm:$0xff]
    %v382 = vld [vmem:[#allocation5 + $0x758] sm:$0xff]
    %v383 = vld [vmem:[#allocation5 + $0x760] sm:$0xff]
    %v384 = vld [vmem:[#allocation5 + $0x768] sm:$0xff]
    %v385 = vld [vmem:[#allocation5 + $0x770] sm:$0xff]
    %v386 = vld [vmem:[#allocation5 + $0x778] sm:$0xff]
    %v387 = vld [vmem:[#allocation5 + $0x780] sm:$0xff]
    %v388 = vld [vmem:[#allocation5 + $0x788] sm:$0xff]
    %v389 = vld [vmem:[#allocation5 + $0x790] sm:$0xff]
    %v390 = vld [vmem:[#allocation5 + $0x798] sm:$0xff]
    %v391 = vld [vmem:[#allocation5 + $0x7a0] sm:$0xff]
    %v392 = vld [vmem:[#allocation5 + $0x7a8] sm:$0xff]
    %v393 = vld [vmem:[#allocation5 + $0x7b0] sm:$0xff]
    %v394 = vld [vmem:[#allocation5 + $0x7b8] sm:$0xff]
    %v395 = vld [vmem:[#allocation5 + $0x7c0] sm:$0xff]
    %v396 = vld [vmem:[#allocation5 + $0x7c8] sm:$0xff]
    %v397 = vld [vmem:[#allocation5 + $0x7d0] sm:$0xff]
    %v398 = vld [vmem:[#allocation5 + $0x7d8] sm:$0xff]
    %v399 = vld [vmem:[#allocation5 + $0x7e0] sm:$0xff]
    %v400 = vld [vmem:[#allocation5 + $0x7e8] sm:$0xff]
    %v401 = vld [vmem:[#allocation5 + $0x7f0] sm:$0xff]
    %v402 = vld [vmem:[#allocation5 + $0x7f8] sm:$0xff]
    %v403 = vld [vmem:[#allocation7] sm:$0xff]
    %v404 = vld [vmem:[#allocation7 + $0x8] sm:$0xff]
    %v407 = vlaneseq
    %v408 = vshrl.u32 %v407, 7
    %v409 = vsub.s32 0, %v408
    %v410 = vrot.slane %v403, %v409
    %v411 = vlaneseq
    %v412 = vshrl.u32 %v411, 7
    %v413 = vsub.s32 1, %v412
    %v414 = vrot.slane %v403, %v413
    %v415 = vlaneseq
    %v416 = vshrl.u32 %v415, 7
    %v417 = vsub.s32 2, %v416
    %v418 = vrot.slane %v403, %v417
    %v419 = vlaneseq
    %v420 = vshrl.u32 %v419, 7
    %v421 = vsub.s32 3, %v420
    %v422 = vrot.slane %v403, %v421
    %v423 = vlaneseq
    %v424 = vshrl.u32 %v423, 7
    %v425 = vsub.s32 4, %v424
    %v426 = vrot.slane %v403, %v425
    %v427 = vlaneseq
    %v428 = vshrl.u32 %v427, 7
    %v429 = vsub.s32 5, %v428
    %v430 = vrot.slane %v403, %v429
    %v431 = vlaneseq
    %v432 = vshrl.u32 %v431, 7
    %v433 = vsub.s32 6, %v432
    %v434 = vrot.slane %v403, %v433
    %v435 = vlaneseq
    %v436 = vshrl.u32 %v435, 7
    %v437 = vsub.s32 7, %v436
    %v438 = vrot.slane %v403, %v437
    %v439 = vlaneseq
    %v440 = vshrl.u32 %v439, 7
    %v441 = vsub.s32 0, %v440
    %v442 = vrot.slane %v404, %v441
    %v443 = vlaneseq
    %v444 = vshrl.u32 %v443, 7
    %v445 = vsub.s32 1, %v444
    %v446 = vrot.slane %v404, %v445
    %v447 = vlaneseq
    %v448 = vshrl.u32 %v447, 7
    %v449 = vsub.s32 2, %v448
    %v450 = vrot.slane %v404, %v449
    %v451 = vlaneseq
    %v452 = vshrl.u32 %v451, 7
    %v453 = vsub.s32 3, %v452
    %v454 = vrot.slane %v404, %v453
    %v455 = vlaneseq
    %v456 = vshrl.u32 %v455, 7
    %v457 = vsub.s32 4, %v456
    %v458 = vrot.slane %v404, %v457
    %v459 = vlaneseq
    %v460 = vshrl.u32 %v459, 7
    %v461 = vsub.s32 5, %v460
    %v462 = vrot.slane %v404, %v461
    %v463 = vlaneseq
    %v464 = vshrl.u32 %v463, 7
    %v465 = vsub.s32 6, %v464
    %v466 = vrot.slane %v404, %v465
    %v467 = vlaneseq
    %v468 = vshrl.u32 %v467, 7
    %v469 = vsub.s32 7, %v468
    %v470 = vrot.slane %v404, %v469
    %v743 = vunpack.c.l.b16 %v147
    %v744 = vunpack.c.h.b16 %v147
    %v745 = vunpack.c.l.b16 %v148
    %v746 = vunpack.c.h.b16 %v148
    %v747 = vunpack.c.l.b16 %v149
    %v748 = vunpack.c.h.b16 %v149
    %v749 = vunpack.c.l.b16 %v150
    %v750 = vunpack.c.h.b16 %v150
    %v751 = vunpack.c.l.b16 %v151
    %v752 = vunpack.c.h.b16 %v151
    %v753 = vunpack.c.l.b16 %v152
    %v754 = vunpack.c.h.b16 %v152
    %v755 = vunpack.c.l.b16 %v153
    %v756 = vunpack.c.h.b16 %v153
    %v757 = vunpack.c.l.b16 %v154
    %v758 = vunpack.c.h.b16 %v154
    %v759 = vunpack.c.l.b16 %v155
    %v760 = vunpack.c.h.b16 %v155
    %v761 = vunpack.c.l.b16 %v156
    %v762 = vunpack.c.h.b16 %v156
    %v763 = vunpack.c.l.b16 %v157
    %v764 = vunpack.c.h.b16 %v157
    %v765 = vunpack.c.l.b16 %v158
    %v766 = vunpack.c.h.b16 %v158
    %v767 = vunpack.c.l.b16 %v159
    %v768 = vunpack.c.h.b16 %v159
    %v769 = vunpack.c.l.b16 %v160
    %v770 = vunpack.c.h.b16 %v160
    %v771 = vunpack.c.l.b16 %v161
    %v772 = vunpack.c.h.b16 %v161
    %v773 = vunpack.c.l.b16 %v162
    %v774 = vunpack.c.h.b16 %v162
    %v775 = vunpack.c.l.b16 %v163
    %v776 = vunpack.c.h.b16 %v163
    %v777 = vunpack.c.l.b16 %v164
    %v778 = vunpack.c.h.b16 %v164
    %v779 = vunpack.c.l.b16 %v165
    %v780 = vunpack.c.h.b16 %v165
    %v781 = vunpack.c.l.b16 %v166
    %v782 = vunpack.c.h.b16 %v166
    %v783 = vunpack.c.l.b16 %v167
    %v784 = vunpack.c.h.b16 %v167
    %v785 = vunpack.c.l.b16 %v168
    %v786 = vunpack.c.h.b16 %v168
    %v787 = vunpack.c.l.b16 %v169
    %v788 = vunpack.c.h.b16 %v169
    %v789 = vunpack.c.l.b16 %v170
    %v790 = vunpack.c.h.b16 %v170
    %v791 = vunpack.c.l.b16 %v171
    %v792 = vunpack.c.h.b16 %v171
    %v793 = vunpack.c.l.b16 %v172
    %v794 = vunpack.c.h.b16 %v172
    %v795 = vunpack.c.l.b16 %v173
    %v796 = vunpack.c.h.b16 %v173
    %v797 = vunpack.c.l.b16 %v174
    %v798 = vunpack.c.h.b16 %v174
    %v799 = vunpack.c.l.b16 %v175
    %v800 = vunpack.c.h.b16 %v175
    %v801 = vunpack.c.l.b16 %v176
    %v802 = vunpack.c.h.b16 %v176
    %v803 = vunpack.c.l.b16 %v177
    %v804 = vunpack.c.h.b16 %v177
    %v805 = vunpack.c.l.b16 %v178
    %v806 = vunpack.c.h.b16 %v178
    %v807 = vunpack.c.l.b16 %v179
    %v808 = vunpack.c.h.b16 %v179
    %v809 = vunpack.c.l.b16 %v180
    %v810 = vunpack.c.h.b16 %v180
    %v811 = vunpack.c.l.b16 %v181
    %v812 = vunpack.c.h.b16 %v181
    %v813 = vunpack.c.l.b16 %v182
    %v814 = vunpack.c.h.b16 %v182
    %v815 = vunpack.c.l.b16 %v183
    %v816 = vunpack.c.h.b16 %v183
    %v817 = vunpack.c.l.b16 %v184
    %v818 = vunpack.c.h.b16 %v184
    %v819 = vunpack.c.l.b16 %v185
    %v820 = vunpack.c.h.b16 %v185
    %v821 = vunpack.c.l.b16 %v186
    %v822 = vunpack.c.h.b16 %v186
    %v823 = vunpack.c.l.b16 %v187
    %v824 = vunpack.c.h.b16 %v187
    %v825 = vunpack.c.l.b16 %v188
    %v826 = vunpack.c.h.b16 %v188
    %v827 = vunpack.c.l.b16 %v189
    %v828 = vunpack.c.h.b16 %v189
    %v829 = vunpack.c.l.b16 %v190
    %v830 = vunpack.c.h.b16 %v190
    %v831 = vunpack.c.l.b16 %v191
    %v832 = vunpack.c.h.b16 %v191
    %v833 = vunpack.c.l.b16 %v192
    %v834 = vunpack.c.h.b16 %v192
    %v835 = vunpack.c.l.b16 %v193
    %v836 = vunpack.c.h.b16 %v193
    %v837 = vunpack.c.l.b16 %v194
    %v838 = vunpack.c.h.b16 %v194
    %v839 = vunpack.c.l.b16 %v195
    %v840 = vunpack.c.h.b16 %v195
    %v841 = vunpack.c.l.b16 %v196
    %v842 = vunpack.c.h.b16 %v196
    %v843 = vunpack.c.l.b16 %v197
    %v844 = vunpack.c.h.b16 %v197
    %v845 = vunpack.c.l.b16 %v198
    %v846 = vunpack.c.h.b16 %v198
    %v847 = vunpack.c.l.b16 %v199
    %v848 = vunpack.c.h.b16 %v199
    %v849 = vunpack.c.l.b16 %v200
    %v850 = vunpack.c.h.b16 %v200
    %v851 = vunpack.c.l.b16 %v201
    %v852 = vunpack.c.h.b16 %v201
    %v853 = vunpack.c.l.b16 %v202
    %v854 = vunpack.c.h.b16 %v202
    %v855 = vunpack.c.l.b16 %v203
    %v856 = vunpack.c.h.b16 %v203
    %v857 = vunpack.c.l.b16 %v204
    %v858 = vunpack.c.h.b16 %v204
    %v859 = vunpack.c.l.b16 %v205
    %v860 = vunpack.c.h.b16 %v205
    %v861 = vunpack.c.l.b16 %v206
    %v862 = vunpack.c.h.b16 %v206
    %v863 = vunpack.c.l.b16 %v207
    %v864 = vunpack.c.h.b16 %v207
    %v865 = vunpack.c.l.b16 %v208
    %v866 = vunpack.c.h.b16 %v208
    %v867 = vunpack.c.l.b16 %v209
    %v868 = vunpack.c.h.b16 %v209
    %v869 = vunpack.c.l.b16 %v210
    %v870 = vunpack.c.h.b16 %v210
    %v871 = vunpack.c.l.b16 %v211
    %v872 = vunpack.c.h.b16 %v211
    %v873 = vunpack.c.l.b16 %v212
    %v874 = vunpack.c.h.b16 %v212
    %v875 = vunpack.c.l.b16 %v213
    %v876 = vunpack.c.h.b16 %v213
    %v877 = vunpack.c.l.b16 %v214
    %v878 = vunpack.c.h.b16 %v214
    %v879 = vunpack.c.l.b16 %v215
    %v880 = vunpack.c.h.b16 %v215
    %v881 = vunpack.c.l.b16 %v216
    %v882 = vunpack.c.h.b16 %v216
    %v883 = vunpack.c.l.b16 %v217
    %v884 = vunpack.c.h.b16 %v217
    %v885 = vunpack.c.l.b16 %v218
    %v886 = vunpack.c.h.b16 %v218
    %v887 = vunpack.c.l.b16 %v219
    %v888 = vunpack.c.h.b16 %v219
    %v889 = vunpack.c.l.b16 %v220
    %v890 = vunpack.c.h.b16 %v220
    %v891 = vunpack.c.l.b16 %v221
    %v892 = vunpack.c.h.b16 %v221
    %v893 = vunpack.c.l.b16 %v222
    %v894 = vunpack.c.h.b16 %v222
    %v895 = vunpack.c.l.b16 %v223
    %v896 = vunpack.c.h.b16 %v223
    %v897 = vunpack.c.l.b16 %v224
    %v898 = vunpack.c.h.b16 %v224
    %v899 = vunpack.c.l.b16 %v225
    %v900 = vunpack.c.h.b16 %v225
    %v901 = vunpack.c.l.b16 %v226
    %v902 = vunpack.c.h.b16 %v226
    %v903 = vunpack.c.l.b16 %v227
    %v904 = vunpack.c.h.b16 %v227
    %v905 = vunpack.c.l.b16 %v228
    %v906 = vunpack.c.h.b16 %v228
    %v907 = vunpack.c.l.b16 %v229
    %v908 = vunpack.c.h.b16 %v229
    %v909 = vunpack.c.l.b16 %v230
    %v910 = vunpack.c.h.b16 %v230
    %v911 = vunpack.c.l.b16 %v231
    %v912 = vunpack.c.h.b16 %v231
    %v913 = vunpack.c.l.b16 %v232
    %v914 = vunpack.c.h.b16 %v232
    %v915 = vunpack.c.l.b16 %v233
    %v916 = vunpack.c.h.b16 %v233
    %v917 = vunpack.c.l.b16 %v234
    %v918 = vunpack.c.h.b16 %v234
    %v919 = vunpack.c.l.b16 %v235
    %v920 = vunpack.c.h.b16 %v235
    %v921 = vunpack.c.l.b16 %v236
    %v922 = vunpack.c.h.b16 %v236
    %v923 = vunpack.c.l.b16 %v237
    %v924 = vunpack.c.h.b16 %v237
    %v925 = vunpack.c.l.b16 %v238
    %v926 = vunpack.c.h.b16 %v238
    %v927 = vunpack.c.l.b16 %v239
    %v928 = vunpack.c.h.b16 %v239
    %v929 = vunpack.c.l.b16 %v240
    %v930 = vunpack.c.h.b16 %v240
    %v931 = vunpack.c.l.b16 %v241
    %v932 = vunpack.c.h.b16 %v241
    %v933 = vunpack.c.l.b16 %v242
    %v934 = vunpack.c.h.b16 %v242
    %v935 = vunpack.c.l.b16 %v243
    %v936 = vunpack.c.h.b16 %v243
    %v937 = vunpack.c.l.b16 %v244
    %v938 = vunpack.c.h.b16 %v244
    %v939 = vunpack.c.l.b16 %v245
    %v940 = vunpack.c.h.b16 %v245
    %v941 = vunpack.c.l.b16 %v246
    %v942 = vunpack.c.h.b16 %v246
    %v943 = vunpack.c.l.b16 %v247
    %v944 = vunpack.c.h.b16 %v247
    %v945 = vunpack.c.l.b16 %v248
    %v946 = vunpack.c.h.b16 %v248
    %v947 = vunpack.c.l.b16 %v249
    %v948 = vunpack.c.h.b16 %v249
    %v949 = vunpack.c.l.b16 %v250
    %v950 = vunpack.c.h.b16 %v250
    %v951 = vunpack.c.l.b16 %v251
    %v952 = vunpack.c.h.b16 %v251
    %v953 = vunpack.c.l.b16 %v252
    %v954 = vunpack.c.h.b16 %v252
    %v955 = vunpack.c.l.b16 %v253
    %v956 = vunpack.c.h.b16 %v253
    %v957 = vunpack.c.l.b16 %v254
    %v958 = vunpack.c.h.b16 %v254
    %v959 = vunpack.c.l.b16 %v255
    %v960 = vunpack.c.h.b16 %v255
    %v961 = vunpack.c.l.b16 %v256
    %v962 = vunpack.c.h.b16 %v256
    %v963 = vunpack.c.l.b16 %v257
    %v964 = vunpack.c.h.b16 %v257
    %v965 = vunpack.c.l.b16 %v258
    %v966 = vunpack.c.h.b16 %v258
    %v967 = vunpack.c.l.b16 %v259
    %v968 = vunpack.c.h.b16 %v259
    %v969 = vunpack.c.l.b16 %v260
    %v970 = vunpack.c.h.b16 %v260
    %v971 = vunpack.c.l.b16 %v261
    %v972 = vunpack.c.h.b16 %v261
    %v973 = vunpack.c.l.b16 %v262
    %v974 = vunpack.c.h.b16 %v262
    %v975 = vunpack.c.l.b16 %v263
    %v976 = vunpack.c.h.b16 %v263
    %v977 = vunpack.c.l.b16 %v264
    %v978 = vunpack.c.h.b16 %v264
    %v979 = vunpack.c.l.b16 %v265
    %v980 = vunpack.c.h.b16 %v265
    %v981 = vunpack.c.l.b16 %v266
    %v982 = vunpack.c.h.b16 %v266
    %v983 = vunpack.c.l.b16 %v267
    %v984 = vunpack.c.h.b16 %v267
    %v985 = vunpack.c.l.b16 %v268
    %v986 = vunpack.c.h.b16 %v268
    %v987 = vunpack.c.l.b16 %v269
    %v988 = vunpack.c.h.b16 %v269
    %v989 = vunpack.c.l.b16 %v270
    %v990 = vunpack.c.h.b16 %v270
    %v991 = vunpack.c.l.b16 %v271
    %v992 = vunpack.c.h.b16 %v271
    %v993 = vunpack.c.l.b16 %v272
    %v994 = vunpack.c.h.b16 %v272
    %v995 = vunpack.c.l.b16 %v273
    %v996 = vunpack.c.h.b16 %v273
    %v997 = vunpack.c.l.b16 %v274
    %v998 = vunpack.c.h.b16 %v274
    %v999 = vunpack.c.l.b16 %v275
    %v1000 = vunpack.c.h.b16 %v275
    %v1001 = vunpack.c.l.b16 %v276
    %v1002 = vunpack.c.h.b16 %v276
    %v1003 = vunpack.c.l.b16 %v277
    %v1004 = vunpack.c.h.b16 %v277
    %v1005 = vunpack.c.l.b16 %v278
    %v1006 = vunpack.c.h.b16 %v278
    %v1007 = vunpack.c.l.b16 %v279
    %v1008 = vunpack.c.h.b16 %v279
    %v1009 = vunpack.c.l.b16 %v280
    %v1010 = vunpack.c.h.b16 %v280
    %v1011 = vunpack.c.l.b16 %v281
    %v1012 = vunpack.c.h.b16 %v281
    %v1013 = vunpack.c.l.b16 %v282
    %v1014 = vunpack.c.h.b16 %v282
    %v1015 = vunpack.c.l.b16 %v283
    %v1016 = vunpack.c.h.b16 %v283
    %v1017 = vunpack.c.l.b16 %v284
    %v1018 = vunpack.c.h.b16 %v284
    %v1019 = vunpack.c.l.b16 %v285
    %v1020 = vunpack.c.h.b16 %v285
    %v1021 = vunpack.c.l.b16 %v286
    %v1022 = vunpack.c.h.b16 %v286
    %v1023 = vunpack.c.l.b16 %v287
    %v1024 = vunpack.c.h.b16 %v287
    %v1025 = vunpack.c.l.b16 %v288
    %v1026 = vunpack.c.h.b16 %v288
    %v1027 = vunpack.c.l.b16 %v289
    %v1028 = vunpack.c.h.b16 %v289
    %v1029 = vunpack.c.l.b16 %v290
    %v1030 = vunpack.c.h.b16 %v290
    %v1031 = vunpack.c.l.b16 %v291
    %v1032 = vunpack.c.h.b16 %v291
    %v1033 = vunpack.c.l.b16 %v292
    %v1034 = vunpack.c.h.b16 %v292
    %v1035 = vunpack.c.l.b16 %v293
    %v1036 = vunpack.c.h.b16 %v293
    %v1037 = vunpack.c.l.b16 %v294
    %v1038 = vunpack.c.h.b16 %v294
    %v1039 = vunpack.c.l.b16 %v295
    %v1040 = vunpack.c.h.b16 %v295
    %v1041 = vunpack.c.l.b16 %v296
    %v1042 = vunpack.c.h.b16 %v296
    %v1043 = vunpack.c.l.b16 %v297
    %v1044 = vunpack.c.h.b16 %v297
    %v1045 = vunpack.c.l.b16 %v298
    %v1046 = vunpack.c.h.b16 %v298
    %v1047 = vunpack.c.l.b16 %v299
    %v1048 = vunpack.c.h.b16 %v299
    %v1049 = vunpack.c.l.b16 %v300
    %v1050 = vunpack.c.h.b16 %v300
    %v1051 = vunpack.c.l.b16 %v301
    %v1052 = vunpack.c.h.b16 %v301
    %v1053 = vunpack.c.l.b16 %v302
    %v1054 = vunpack.c.h.b16 %v302
    %v1055 = vunpack.c.l.b16 %v303
    %v1056 = vunpack.c.h.b16 %v303
    %v1057 = vunpack.c.l.b16 %v304
    %v1058 = vunpack.c.h.b16 %v304
    %v1059 = vunpack.c.l.b16 %v305
    %v1060 = vunpack.c.h.b16 %v305
    %v1061 = vunpack.c.l.b16 %v306
    %v1062 = vunpack.c.h.b16 %v306
    %v1063 = vunpack.c.l.b16 %v307
    %v1064 = vunpack.c.h.b16 %v307
    %v1065 = vunpack.c.l.b16 %v308
    %v1066 = vunpack.c.h.b16 %v308
    %v1067 = vunpack.c.l.b16 %v309
    %v1068 = vunpack.c.h.b16 %v309
    %v1069 = vunpack.c.l.b16 %v310
    %v1070 = vunpack.c.h.b16 %v310
    %v1071 = vunpack.c.l.b16 %v311
    %v1072 = vunpack.c.h.b16 %v311
    %v1073 = vunpack.c.l.b16 %v312
    %v1074 = vunpack.c.h.b16 %v312
    %v1075 = vunpack.c.l.b16 %v313
    %v1076 = vunpack.c.h.b16 %v313
    %v1077 = vunpack.c.l.b16 %v314
    %v1078 = vunpack.c.h.b16 %v314
    %v1079 = vunpack.c.l.b16 %v315
    %v1080 = vunpack.c.h.b16 %v315
    %v1081 = vunpack.c.l.b16 %v316
    %v1082 = vunpack.c.h.b16 %v316
    %v1083 = vunpack.c.l.b16 %v317
    %v1084 = vunpack.c.h.b16 %v317
    %v1085 = vunpack.c.l.b16 %v318
    %v1086 = vunpack.c.h.b16 %v318
    %v1087 = vunpack.c.l.b16 %v319
    %v1088 = vunpack.c.h.b16 %v319
    %v1089 = vunpack.c.l.b16 %v320
    %v1090 = vunpack.c.h.b16 %v320
    %v1091 = vunpack.c.l.b16 %v321
    %v1092 = vunpack.c.h.b16 %v321
    %v1093 = vunpack.c.l.b16 %v322
    %v1094 = vunpack.c.h.b16 %v322
    %v1095 = vunpack.c.l.b16 %v323
    %v1096 = vunpack.c.h.b16 %v323
    %v1097 = vunpack.c.l.b16 %v324
    %v1098 = vunpack.c.h.b16 %v324
    %v1099 = vunpack.c.l.b16 %v325
    %v1100 = vunpack.c.h.b16 %v325
    %v1101 = vunpack.c.l.b16 %v326
    %v1102 = vunpack.c.h.b16 %v326
    %v1103 = vunpack.c.l.b16 %v327
    %v1104 = vunpack.c.h.b16 %v327
    %v1105 = vunpack.c.l.b16 %v328
    %v1106 = vunpack.c.h.b16 %v328
    %v1107 = vunpack.c.l.b16 %v329
    %v1108 = vunpack.c.h.b16 %v329
    %v1109 = vunpack.c.l.b16 %v330
    %v1110 = vunpack.c.h.b16 %v330
    %v1111 = vunpack.c.l.b16 %v331
    %v1112 = vunpack.c.h.b16 %v331
    %v1113 = vunpack.c.l.b16 %v332
    %v1114 = vunpack.c.h.b16 %v332
    %v1115 = vunpack.c.l.b16 %v333
    %v1116 = vunpack.c.h.b16 %v333
    %v1117 = vunpack.c.l.b16 %v334
    %v1118 = vunpack.c.h.b16 %v334
    %v1119 = vunpack.c.l.b16 %v335
    %v1120 = vunpack.c.h.b16 %v335
    %v1121 = vunpack.c.l.b16 %v336
    %v1122 = vunpack.c.h.b16 %v336
    %v1123 = vunpack.c.l.b16 %v337
    %v1124 = vunpack.c.h.b16 %v337
    %v1125 = vunpack.c.l.b16 %v338
    %v1126 = vunpack.c.h.b16 %v338
    %v1127 = vunpack.c.l.b16 %v339
    %v1128 = vunpack.c.h.b16 %v339
    %v1129 = vunpack.c.l.b16 %v340
    %v1130 = vunpack.c.h.b16 %v340
    %v1131 = vunpack.c.l.b16 %v341
    %v1132 = vunpack.c.h.b16 %v341
    %v1133 = vunpack.c.l.b16 %v342
    %v1134 = vunpack.c.h.b16 %v342
    %v1135 = vunpack.c.l.b16 %v343
    %v1136 = vunpack.c.h.b16 %v343
    %v1137 = vunpack.c.l.b16 %v344
    %v1138 = vunpack.c.h.b16 %v344
    %v1139 = vunpack.c.l.b16 %v345
    %v1140 = vunpack.c.h.b16 %v345
    %v1141 = vunpack.c.l.b16 %v346
    %v1142 = vunpack.c.h.b16 %v346
    %v1143 = vunpack.c.l.b16 %v347
    %v1144 = vunpack.c.h.b16 %v347
    %v1145 = vunpack.c.l.b16 %v348
    %v1146 = vunpack.c.h.b16 %v348
    %v1147 = vunpack.c.l.b16 %v349
    %v1148 = vunpack.c.h.b16 %v349
    %v1149 = vunpack.c.l.b16 %v350
    %v1150 = vunpack.c.h.b16 %v350
    %v1151 = vunpack.c.l.b16 %v351
    %v1152 = vunpack.c.h.b16 %v351
    %v1153 = vunpack.c.l.b16 %v352
    %v1154 = vunpack.c.h.b16 %v352
    %v1155 = vunpack.c.l.b16 %v353
    %v1156 = vunpack.c.h.b16 %v353
    %v1157 = vunpack.c.l.b16 %v354
    %v1158 = vunpack.c.h.b16 %v354
    %v1159 = vunpack.c.l.b16 %v355
    %v1160 = vunpack.c.h.b16 %v355
    %v1161 = vunpack.c.l.b16 %v356
    %v1162 = vunpack.c.h.b16 %v356
    %v1163 = vunpack.c.l.b16 %v357
    %v1164 = vunpack.c.h.b16 %v357
    %v1165 = vunpack.c.l.b16 %v358
    %v1166 = vunpack.c.h.b16 %v358
    %v1167 = vunpack.c.l.b16 %v359
    %v1168 = vunpack.c.h.b16 %v359
    %v1169 = vunpack.c.l.b16 %v360
    %v1170 = vunpack.c.h.b16 %v360
    %v1171 = vunpack.c.l.b16 %v361
    %v1172 = vunpack.c.h.b16 %v361
    %v1173 = vunpack.c.l.b16 %v362
    %v1174 = vunpack.c.h.b16 %v362
    %v1175 = vunpack.c.l.b16 %v363
    %v1176 = vunpack.c.h.b16 %v363
    %v1177 = vunpack.c.l.b16 %v364
    %v1178 = vunpack.c.h.b16 %v364
    %v1179 = vunpack.c.l.b16 %v365
    %v1180 = vunpack.c.h.b16 %v365
    %v1181 = vunpack.c.l.b16 %v366
    %v1182 = vunpack.c.h.b16 %v366
    %v1183 = vunpack.c.l.b16 %v367
    %v1184 = vunpack.c.h.b16 %v367
    %v1185 = vunpack.c.l.b16 %v368
    %v1186 = vunpack.c.h.b16 %v368
    %v1187 = vunpack.c.l.b16 %v369
    %v1188 = vunpack.c.h.b16 %v369
    %v1189 = vunpack.c.l.b16 %v370
    %v1190 = vunpack.c.h.b16 %v370
    %v1191 = vunpack.c.l.b16 %v371
    %v1192 = vunpack.c.h.b16 %v371
    %v1193 = vunpack.c.l.b16 %v372
    %v1194 = vunpack.c.h.b16 %v372
    %v1195 = vunpack.c.l.b16 %v373
    %v1196 = vunpack.c.h.b16 %v373
    %v1197 = vunpack.c.l.b16 %v374
    %v1198 = vunpack.c.h.b16 %v374
    %v1199 = vunpack.c.l.b16 %v375
    %v1200 = vunpack.c.h.b16 %v375
    %v1201 = vunpack.c.l.b16 %v376
    %v1202 = vunpack.c.h.b16 %v376
    %v1203 = vunpack.c.l.b16 %v377
    %v1204 = vunpack.c.h.b16 %v377
    %v1205 = vunpack.c.l.b16 %v378
    %v1206 = vunpack.c.h.b16 %v378
    %v1207 = vunpack.c.l.b16 %v379
    %v1208 = vunpack.c.h.b16 %v379
    %v1209 = vunpack.c.l.b16 %v380
    %v1210 = vunpack.c.h.b16 %v380
    %v1211 = vunpack.c.l.b16 %v381
    %v1212 = vunpack.c.h.b16 %v381
    %v1213 = vunpack.c.l.b16 %v382
    %v1214 = vunpack.c.h.b16 %v382
    %v1215 = vunpack.c.l.b16 %v383
    %v1216 = vunpack.c.h.b16 %v383
    %v1217 = vunpack.c.l.b16 %v384
    %v1218 = vunpack.c.h.b16 %v384
    %v1219 = vunpack.c.l.b16 %v385
    %v1220 = vunpack.c.h.b16 %v385
    %v1221 = vunpack.c.l.b16 %v386
    %v1222 = vunpack.c.h.b16 %v386
    %v1223 = vunpack.c.l.b16 %v387
    %v1224 = vunpack.c.h.b16 %v387
    %v1225 = vunpack.c.l.b16 %v388
    %v1226 = vunpack.c.h.b16 %v388
    %v1227 = vunpack.c.l.b16 %v389
    %v1228 = vunpack.c.h.b16 %v389
    %v1229 = vunpack.c.l.b16 %v390
    %v1230 = vunpack.c.h.b16 %v390
    %v1231 = vunpack.c.l.b16 %v391
    %v1232 = vunpack.c.h.b16 %v391
    %v1233 = vunpack.c.l.b16 %v392
    %v1234 = vunpack.c.h.b16 %v392
    %v1235 = vunpack.c.l.b16 %v393
    %v1236 = vunpack.c.h.b16 %v393
    %v1237 = vunpack.c.l.b16 %v394
    %v1238 = vunpack.c.h.b16 %v394
    %v1239 = vunpack.c.l.b16 %v395
    %v1240 = vunpack.c.h.b16 %v395
    %v1241 = vunpack.c.l.b16 %v396
    %v1242 = vunpack.c.h.b16 %v396
    %v1243 = vunpack.c.l.b16 %v397
    %v1244 = vunpack.c.h.b16 %v397
    %v1245 = vunpack.c.l.b16 %v398
    %v1246 = vunpack.c.h.b16 %v398
    %v1247 = vunpack.c.l.b16 %v399
    %v1248 = vunpack.c.h.b16 %v399
    %v1249 = vunpack.c.l.b16 %v400
    %v1250 = vunpack.c.h.b16 %v400
    %v1251 = vunpack.c.l.b16 %v401
    %v1252 = vunpack.c.h.b16 %v401
    %v1253 = vunpack.c.l.b16 %v402
    %v1254 = vunpack.c.h.b16 %v402
    %v1255 = vpack.c.b16 %v759, %v743
    %v1256 = vpack.c.b16 %v760, %v744
    %v1257 = vpack.c.b16 %v761, %v745
    %v1258 = vpack.c.b16 %v762, %v746
    %v1259 = vpack.c.b16 %v763, %v747
    %v1260 = vpack.c.b16 %v764, %v748
    %v1261 = vpack.c.b16 %v765, %v749
    %v1262 = vpack.c.b16 %v766, %v750
    %v1263 = vpack.c.b16 %v767, %v751
    %v1264 = vpack.c.b16 %v768, %v752
    %v1265 = vpack.c.b16 %v769, %v753
    %v1266 = vpack.c.b16 %v770, %v754
    %v1267 = vpack.c.b16 %v771, %v755
    %v1268 = vpack.c.b16 %v772, %v756
    %v1269 = vpack.c.b16 %v773, %v757
    %v1270 = vpack.c.b16 %v774, %v758
    %v1271 = vpack.c.b16 %v791, %v775
    %v1272 = vpack.c.b16 %v792, %v776
    %v1273 = vpack.c.b16 %v793, %v777
    %v1274 = vpack.c.b16 %v794, %v778
    %v1275 = vpack.c.b16 %v795, %v779
    %v1276 = vpack.c.b16 %v796, %v780
    %v1277 = vpack.c.b16 %v797, %v781
    %v1278 = vpack.c.b16 %v798, %v782
    %v1279 = vpack.c.b16 %v799, %v783
    %v1280 = vpack.c.b16 %v800, %v784
    %v1281 = vpack.c.b16 %v801, %v785
    %v1282 = vpack.c.b16 %v802, %v786
    %v1283 = vpack.c.b16 %v803, %v787
    %v1284 = vpack.c.b16 %v804, %v788
    %v1285 = vpack.c.b16 %v805, %v789
    %v1286 = vpack.c.b16 %v806, %v790
    %v1287 = vpack.c.b16 %v823, %v807
    %v1288 = vpack.c.b16 %v824, %v808
    %v1289 = vpack.c.b16 %v825, %v809
    %v1290 = vpack.c.b16 %v826, %v810
    %v1291 = vpack.c.b16 %v827, %v811
    %v1292 = vpack.c.b16 %v828, %v812
    %v1293 = vpack.c.b16 %v829, %v813
    %v1294 = vpack.c.b16 %v830, %v814
    %v1295 = vpack.c.b16 %v831, %v815
    %v1296 = vpack.c.b16 %v832, %v816
    %v1297 = vpack.c.b16 %v833, %v817
    %v1298 = vpack.c.b16 %v834, %v818
    %v1299 = vpack.c.b16 %v835, %v819
    %v1300 = vpack.c.b16 %v836, %v820
    %v1301 = vpack.c.b16 %v837, %v821
    %v1302 = vpack.c.b16 %v838, %v822
    %v1303 = vpack.c.b16 %v855, %v839
    %v1304 = vpack.c.b16 %v856, %v840
    %v1305 = vpack.c.b16 %v857, %v841
    %v1306 = vpack.c.b16 %v858, %v842
    %v1307 = vpack.c.b16 %v859, %v843
    %v1308 = vpack.c.b16 %v860, %v844
    %v1309 = vpack.c.b16 %v861, %v845
    %v1310 = vpack.c.b16 %v862, %v846
    %v1311 = vpack.c.b16 %v863, %v847
    %v1312 = vpack.c.b16 %v864, %v848
    %v1313 = vpack.c.b16 %v865, %v849
    %v1314 = vpack.c.b16 %v866, %v850
    %v1315 = vpack.c.b16 %v867, %v851
    %v1316 = vpack.c.b16 %v868, %v852
    %v1317 = vpack.c.b16 %v869, %v853
    %v1318 = vpack.c.b16 %v870, %v854
    %v1319 = vpack.c.b16 %v887, %v871
    %v1320 = vpack.c.b16 %v888, %v872
    %v1321 = vpack.c.b16 %v889, %v873
    %v1322 = vpack.c.b16 %v890, %v874
    %v1323 = vpack.c.b16 %v891, %v875
    %v1324 = vpack.c.b16 %v892, %v876
    %v1325 = vpack.c.b16 %v893, %v877
    %v1326 = vpack.c.b16 %v894, %v878
    %v1327 = vpack.c.b16 %v895, %v879
    %v1328 = vpack.c.b16 %v896, %v880
    %v1329 = vpack.c.b16 %v897, %v881
    %v1330 = vpack.c.b16 %v898, %v882
    %v1331 = vpack.c.b16 %v899, %v883
    %v1332 = vpack.c.b16 %v900, %v884
    %v1333 = vpack.c.b16 %v901, %v885
    %v1334 = vpack.c.b16 %v902, %v886
    %v1335 = vpack.c.b16 %v919, %v903
    %v1336 = vpack.c.b16 %v920, %v904
    %v1337 = vpack.c.b16 %v921, %v905
    %v1338 = vpack.c.b16 %v922, %v906
    %v1339 = vpack.c.b16 %v923, %v907
    %v1340 = vpack.c.b16 %v924, %v908
    %v1341 = vpack.c.b16 %v925, %v909
    %v1342 = vpack.c.b16 %v926, %v910
    %v1343 = vpack.c.b16 %v927, %v911
    %v1344 = vpack.c.b16 %v928, %v912
    %v1345 = vpack.c.b16 %v929, %v913
    %v1346 = vpack.c.b16 %v930, %v914
    %v1347 = vpack.c.b16 %v931, %v915
    %v1348 = vpack.c.b16 %v932, %v916
    %v1349 = vpack.c.b16 %v933, %v917
    %v1350 = vpack.c.b16 %v934, %v918
    %v1351 = vpack.c.b16 %v951, %v935
    %v1352 = vpack.c.b16 %v952, %v936
    %v1353 = vpack.c.b16 %v953, %v937
    %v1354 = vpack.c.b16 %v954, %v938
    %v1355 = vpack.c.b16 %v955, %v939
    %v1356 = vpack.c.b16 %v956, %v940
    %v1357 = vpack.c.b16 %v957, %v941
    %v1358 = vpack.c.b16 %v958, %v942
    %v1359 = vpack.c.b16 %v959, %v943
    %v1360 = vpack.c.b16 %v960, %v944
    %v1361 = vpack.c.b16 %v961, %v945
    %v1362 = vpack.c.b16 %v962, %v946
    %v1363 = vpack.c.b16 %v963, %v947
    %v1364 = vpack.c.b16 %v964, %v948
    %v1365 = vpack.c.b16 %v965, %v949
    %v1366 = vpack.c.b16 %v966, %v950
    %v1367 = vpack.c.b16 %v983, %v967
    %v1368 = vpack.c.b16 %v984, %v968
    %v1369 = vpack.c.b16 %v985, %v969
    %v1370 = vpack.c.b16 %v986, %v970
    %v1371 = vpack.c.b16 %v987, %v971
    %v1372 = vpack.c.b16 %v988, %v972
    %v1373 = vpack.c.b16 %v989, %v973
    %v1374 = vpack.c.b16 %v990, %v974
    %v1375 = vpack.c.b16 %v991, %v975
    %v1376 = vpack.c.b16 %v992, %v976
    %v1377 = vpack.c.b16 %v993, %v977
    %v1378 = vpack.c.b16 %v994, %v978
    %v1379 = vpack.c.b16 %v995, %v979
    %v1380 = vpack.c.b16 %v996, %v980
    %v1381 = vpack.c.b16 %v997, %v981
    %v1382 = vpack.c.b16 %v998, %v982
    %v1383 = vpack.c.b16 %v1015, %v999
    %v1384 = vpack.c.b16 %v1016, %v1000
    %v1385 = vpack.c.b16 %v1017, %v1001
    %v1386 = vpack.c.b16 %v1018, %v1002
    %v1387 = vpack.c.b16 %v1019, %v1003
    %v1388 = vpack.c.b16 %v1020, %v1004
    %v1389 = vpack.c.b16 %v1021, %v1005
    %v1390 = vpack.c.b16 %v1022, %v1006
    %v1391 = vpack.c.b16 %v1023, %v1007
    %v1392 = vpack.c.b16 %v1024, %v1008
    %v1393 = vpack.c.b16 %v1025, %v1009
    %v1394 = vpack.c.b16 %v1026, %v1010
    %v1395 = vpack.c.b16 %v1027, %v1011
    %v1396 = vpack.c.b16 %v1028, %v1012
    %v1397 = vpack.c.b16 %v1029, %v1013
    %v1398 = vpack.c.b16 %v1030, %v1014
    %v1399 = vpack.c.b16 %v1047, %v1031
    %v1400 = vpack.c.b16 %v1048, %v1032
    %v1401 = vpack.c.b16 %v1049, %v1033
    %v1402 = vpack.c.b16 %v1050, %v1034
    %v1403 = vpack.c.b16 %v1051, %v1035
    %v1404 = vpack.c.b16 %v1052, %v1036
    %v1405 = vpack.c.b16 %v1053, %v1037
    %v1406 = vpack.c.b16 %v1054, %v1038
    %v1407 = vpack.c.b16 %v1055, %v1039
    %v1408 = vpack.c.b16 %v1056, %v1040
    %v1409 = vpack.c.b16 %v1057, %v1041
    %v1410 = vpack.c.b16 %v1058, %v1042
    %v1411 = vpack.c.b16 %v1059, %v1043
    %v1412 = vpack.c.b16 %v1060, %v1044
    %v1413 = vpack.c.b16 %v1061, %v1045
    %v1414 = vpack.c.b16 %v1062, %v1046
    %v1415 = vpack.c.b16 %v1079, %v1063
    %v1416 = vpack.c.b16 %v1080, %v1064
    %v1417 = vpack.c.b16 %v1081, %v1065
    %v1418 = vpack.c.b16 %v1082, %v1066
    %v1419 = vpack.c.b16 %v1083, %v1067
    %v1420 = vpack.c.b16 %v1084, %v1068
    %v1421 = vpack.c.b16 %v1085, %v1069
    %v1422 = vpack.c.b16 %v1086, %v1070
    %v1423 = vpack.c.b16 %v1087, %v1071
    %v1424 = vpack.c.b16 %v1088, %v1072
    %v1425 = vpack.c.b16 %v1089, %v1073
    %v1426 = vpack.c.b16 %v1090, %v1074
    %v1427 = vpack.c.b16 %v1091, %v1075
    %v1428 = vpack.c.b16 %v1092, %v1076
    %v1429 = vpack.c.b16 %v1093, %v1077
    %v1430 = vpack.c.b16 %v1094, %v1078
    %v1431 = vpack.c.b16 %v1111, %v1095
    %v1432 = vpack.c.b16 %v1112, %v1096
    %v1433 = vpack.c.b16 %v1113, %v1097
    %v1434 = vpack.c.b16 %v1114, %v1098
    %v1435 = vpack.c.b16 %v1115, %v1099
    %v1436 = vpack.c.b16 %v1116, %v1100
    %v1437 = vpack.c.b16 %v1117, %v1101
    %v1438 = vpack.c.b16 %v1118, %v1102
    %v1439 = vpack.c.b16 %v1119, %v1103
    %v1440 = vpack.c.b16 %v1120, %v1104
    %v1441 = vpack.c.b16 %v1121, %v1105
    %v1442 = vpack.c.b16 %v1122, %v1106
    %v1443 = vpack.c.b16 %v1123, %v1107
    %v1444 = vpack.c.b16 %v1124, %v1108
    %v1445 = vpack.c.b16 %v1125, %v1109
    %v1446 = vpack.c.b16 %v1126, %v1110
    %v1447 = vpack.c.b16 %v1143, %v1127
    %v1448 = vpack.c.b16 %v1144, %v1128
    %v1449 = vpack.c.b16 %v1145, %v1129
    %v1450 = vpack.c.b16 %v1146, %v1130
    %v1451 = vpack.c.b16 %v1147, %v1131
    %v1452 = vpack.c.b16 %v1148, %v1132
    %v1453 = vpack.c.b16 %v1149, %v1133
    %v1454 = vpack.c.b16 %v1150, %v1134
    %v1455 = vpack.c.b16 %v1151, %v1135
    %v1456 = vpack.c.b16 %v1152, %v1136
    %v1457 = vpack.c.b16 %v1153, %v1137
    %v1458 = vpack.c.b16 %v1154, %v1138
    %v1459 = vpack.c.b16 %v1155, %v1139
    %v1460 = vpack.c.b16 %v1156, %v1140
    %v1461 = vpack.c.b16 %v1157, %v1141
    %v1462 = vpack.c.b16 %v1158, %v1142
    %v1463 = vpack.c.b16 %v1175, %v1159
    %v1464 = vpack.c.b16 %v1176, %v1160
    %v1465 = vpack.c.b16 %v1177, %v1161
    %v1466 = vpack.c.b16 %v1178, %v1162
    %v1467 = vpack.c.b16 %v1179, %v1163
    %v1468 = vpack.c.b16 %v1180, %v1164
    %v1469 = vpack.c.b16 %v1181, %v1165
    %v1470 = vpack.c.b16 %v1182, %v1166
    %v1471 = vpack.c.b16 %v1183, %v1167
    %v1472 = vpack.c.b16 %v1184, %v1168
    %v1473 = vpack.c.b16 %v1185, %v1169
    %v1474 = vpack.c.b16 %v1186, %v1170
    %v1475 = vpack.c.b16 %v1187, %v1171
    %v1476 = vpack.c.b16 %v1188, %v1172
    %v1477 = vpack.c.b16 %v1189, %v1173
    %v1478 = vpack.c.b16 %v1190, %v1174
    %v1479 = vpack.c.b16 %v1207, %v1191
    %v1480 = vpack.c.b16 %v1208, %v1192
    %v1481 = vpack.c.b16 %v1209, %v1193
    %v1482 = vpack.c.b16 %v1210, %v1194
    %v1483 = vpack.c.b16 %v1211, %v1195
    %v1484 = vpack.c.b16 %v1212, %v1196
    %v1485 = vpack.c.b16 %v1213, %v1197
    %v1486 = vpack.c.b16 %v1214, %v1198
    %v1487 = vpack.c.b16 %v1215, %v1199
    %v1488 = vpack.c.b16 %v1216, %v1200
    %v1489 = vpack.c.b16 %v1217, %v1201
    %v1490 = vpack.c.b16 %v1218, %v1202
    %v1491 = vpack.c.b16 %v1219, %v1203
    %v1492 = vpack.c.b16 %v1220, %v1204
    %v1493 = vpack.c.b16 %v1221, %v1205
    %v1494 = vpack.c.b16 %v1222, %v1206
    %v1495 = vpack.c.b16 %v1239, %v1223
    %v1496 = vpack.c.b16 %v1240, %v1224
    %v1497 = vpack.c.b16 %v1241, %v1225
    %v1498 = vpack.c.b16 %v1242, %v1226
    %v1499 = vpack.c.b16 %v1243, %v1227
    %v1500 = vpack.c.b16 %v1244, %v1228
    %v1501 = vpack.c.b16 %v1245, %v1229
    %v1502 = vpack.c.b16 %v1246, %v1230
    %v1503 = vpack.c.b16 %v1247, %v1231
    %v1504 = vpack.c.b16 %v1248, %v1232
    %v1505 = vpack.c.b16 %v1249, %v1233
    %v1506 = vpack.c.b16 %v1250, %v1234
    %v1507 = vpack.c.b16 %v1251, %v1235
    %v1508 = vpack.c.b16 %v1252, %v1236
    %v1509 = vpack.c.b16 %v1253, %v1237
    %v1510 = vpack.c.b16 %v1254, %v1238
    %1767 = vmatprep.subr.bf16.mxu0 %v1368
    %1768 = vmatpush1.bf16.msra.mxu0 %v1367
    %1769 = vmatprep.subr.bf16.mxu0 %v1352
    %1770 = vmatpush1.bf16.msra.mxu0 %v1351
    %1771 = vmatprep.subr.bf16.mxu0 %v1336
    %1772 = vmatpush1.bf16.msra.mxu0 %v1335
    %1773 = vmatprep.subr.bf16.mxu0 %v1320
    %1774 = vmatpush1.bf16.msra.mxu0 %v1319
    %1775 = vmatprep.subr.bf16.mxu0 %v1304
    %1776 = vmatpush1.bf16.msra.mxu0 %v1303
    %1777 = vmatprep.subr.bf16.mxu0 %v1288
    %1778 = vmatpush1.bf16.msra.mxu0 %v1287
    %1779 = vmatprep.subr.bf16.mxu0 %v1272
    %1780 = vmatpush1.bf16.msra.mxu0 %v1271
    %1781 = vmatprep.subr.bf16.mxu0 %v1256
    %1782 = vmatpush1.bf16.msra.mxu0 %v1255
    %1783 = vmatprep.subr.bf16.mxu0 %v1496
    %1784 = vmatpush2.bf16.msra.mxu0 %v1495
    %1785 = vmatprep.subr.bf16.mxu0 %v1480
    %1786 = vmatpush2.bf16.msra.mxu0 %v1479
    %1787 = vmatprep.subr.bf16.mxu0 %v1464
    %1788 = vmatpush2.bf16.msra.mxu0 %v1463
    %1789 = vmatprep.subr.bf16.mxu0 %v1448
    %1790 = vmatpush2.bf16.msra.mxu0 %v1447
    %1791 = vmatprep.subr.bf16.mxu0 %v1432
    %1792 = vmatpush2.bf16.msra.mxu0 %v1431
    %1793 = vmatprep.subr.bf16.mxu0 %v1416
    %1794 = vmatpush2.bf16.msra.mxu0 %v1415
    %1795 = vmatprep.subr.bf16.mxu0 %v1400
    %1796 = vmatpush2.bf16.msra.mxu0 %v1399
    %1797 = vmatprep.subr.bf16.mxu0 %v1384
    %1798 = vmatpush2.bf16.msra.mxu0 %v1383
    %1799 = vmatprep.mubr.bf16.mxu0 %v144
    %1800 = vmatmul.mubr.bf16.gmra.mxu0 %v143
    %v1801 = vpop.f32.mrf.mxu0
    %v1802 = vadd.f32 %v410, %v1801
    %v1803 = vpop.f32.mrf.mxu0
    %v1804 = vadd.f32 %v414, %v1803
    %v1805 = vpop.f32.mrf.mxu0
    %v1806 = vadd.f32 %v410, %v1805
    %v1807 = vpop.f32.mrf.mxu0
    %v1808 = vadd.f32 %v414, %v1807
    %1809 = vmatprep.mubr.bf16.mxu0 %v146
    %1810 = vmatmul.mubr.bf16.gmra.mxu0 %v145
    %v1811 = vpop.f32.mrf.mxu0
    %v1812 = vadd.f32 %v410, %v1811
    %v1813 = vpop.f32.mrf.mxu0
    %v1814 = vadd.f32 %v414, %v1813
    %v1815 = vpop.f32.mrf.mxu0
    %v1816 = vadd.f32 %v410, %v1815
    %v1817 = vpop.f32.mrf.mxu0
    %v1818 = vadd.f32 %v414, %v1817
    %1819 = vdwg.mxu0
    %1820 = vmatprep.subr.bf16.mxu0 %v1370
    %1821 = vmatpush1.bf16.msra.mxu0 %v1369
    %1822 = vmatprep.subr.bf16.mxu0 %v1354
    %1823 = vmatpush1.bf16.msra.mxu0 %v1353
    %1824 = vmatprep.subr.bf16.mxu0 %v1338
    %1825 = vmatpush1.bf16.msra.mxu0 %v1337
    %1826 = vmatprep.subr.bf16.mxu0 %v1322
    %1827 = vmatpush1.bf16.msra.mxu0 %v1321
    %1828 = vmatprep.subr.bf16.mxu0 %v1306
    %1829 = vmatpush1.bf16.msra.mxu0 %v1305
    %1830 = vmatprep.subr.bf16.mxu0 %v1290
    %1831 = vmatpush1.bf16.msra.mxu0 %v1289
    %1832 = vmatprep.subr.bf16.mxu0 %v1274
    %1833 = vmatpush1.bf16.msra.mxu0 %v1273
    %1834 = vmatprep.subr.bf16.mxu0 %v1258
    %1835 = vmatpush1.bf16.msra.mxu0 %v1257
    %1836 = vmatprep.subr.bf16.mxu0 %v1498
    %1837 = vmatpush2.bf16.msra.mxu0 %v1497
    %1838 = vmatprep.subr.bf16.mxu0 %v1482
    %1839 = vmatpush2.bf16.msra.mxu0 %v1481
    %1840 = vmatprep.subr.bf16.mxu0 %v1466
    %1841 = vmatpush2.bf16.msra.mxu0 %v1465
    %1842 = vmatprep.subr.bf16.mxu0 %v1450
    %1843 = vmatpush2.bf16.msra.mxu0 %v1449
    %1844 = vmatprep.subr.bf16.mxu0 %v1434
    %1845 = vmatpush2.bf16.msra.mxu0 %v1433
    %1846 = vmatprep.subr.bf16.mxu0 %v1418
    %1847 = vmatpush2.bf16.msra.mxu0 %v1417
    %1848 = vmatprep.subr.bf16.mxu0 %v1402
    %1849 = vmatpush2.bf16.msra.mxu0 %v1401
    %1850 = vmatprep.subr.bf16.mxu0 %v1386
    %1851 = vmatpush2.bf16.msra.mxu0 %v1385
    %1852 = vmatprep.mubr.bf16.mxu0 %v144
    %1853 = vmatmul.mubr.bf16.gmra.mxu0 %v143
    %v1854 = vpop.f32.mrf.mxu0
    %v1855 = vadd.f32 %v418, %v1854
    %v1856 = vpop.f32.mrf.mxu0
    %v1857 = vadd.f32 %v422, %v1856
    %v1858 = vpop.f32.mrf.mxu0
    %v1859 = vadd.f32 %v418, %v1858
    %v1860 = vpop.f32.mrf.mxu0
    %v1861 = vadd.f32 %v422, %v1860
    %1862 = vmatprep.mubr.bf16.mxu0 %v146
    %1863 = vmatmul.mubr.bf16.gmra.mxu0 %v145
    %v1864 = vpop.f32.mrf.mxu0
    %v1865 = vadd.f32 %v418, %v1864
    %v1866 = vpop.f32.mrf.mxu0
    %v1867 = vadd.f32 %v422, %v1866
    %v1868 = vpop.f32.mrf.mxu0
    %v1869 = vadd.f32 %v418, %v1868
    %v1870 = vpop.f32.mrf.mxu0
    %v1871 = vadd.f32 %v422, %v1870
    %1872 = vdwg.mxu0
    %1873 = vmatprep.subr.bf16.mxu0 %v1372
    %1874 = vmatpush1.bf16.msra.mxu0 %v1371
    %1875 = vmatprep.subr.bf16.mxu0 %v1356
    %1876 = vmatpush1.bf16.msra.mxu0 %v1355
    %1877 = vmatprep.subr.bf16.mxu0 %v1340
    %1878 = vmatpush1.bf16.msra.mxu0 %v1339
    %1879 = vmatprep.subr.bf16.mxu0 %v1324
    %1880 = vmatpush1.bf16.msra.mxu0 %v1323
    %1881 = vmatprep.subr.bf16.mxu0 %v1308
    %1882 = vmatpush1.bf16.msra.mxu0 %v1307
    %1883 = vmatprep.subr.bf16.mxu0 %v1292
    %1884 = vmatpush1.bf16.msra.mxu0 %v1291
    %1885 = vmatprep.subr.bf16.mxu0 %v1276
    %1886 = vmatpush1.bf16.msra.mxu0 %v1275
    %1887 = vmatprep.subr.bf16.mxu0 %v1260
    %1888 = vmatpush1.bf16.msra.mxu0 %v1259
    %1889 = vmatprep.subr.bf16.mxu0 %v1500
    %1890 = vmatpush2.bf16.msra.mxu0 %v1499
    %1891 = vmatprep.subr.bf16.mxu0 %v1484
    %1892 = vmatpush2.bf16.msra.mxu0 %v1483
    %1893 = vmatprep.subr.bf16.mxu0 %v1468
    %1894 = vmatpush2.bf16.msra.mxu0 %v1467
    %1895 = vmatprep.subr.bf16.mxu0 %v1452
    %1896 = vmatpush2.bf16.msra.mxu0 %v1451
    %1897 = vmatprep.subr.bf16.mxu0 %v1436
    %1898 = vmatpush2.bf16.msra.mxu0 %v1435
    %1899 = vmatprep.subr.bf16.mxu0 %v1420
    %1900 = vmatpush2.bf16.msra.mxu0 %v1419
    %1901 = vmatprep.subr.bf16.mxu0 %v1404
    %1902 = vmatpush2.bf16.msra.mxu0 %v1403
    %1903 = vmatprep.subr.bf16.mxu0 %v1388
    %1904 = vmatpush2.bf16.msra.mxu0 %v1387
    %1905 = vmatprep.mubr.bf16.mxu0 %v144
    %1906 = vmatmul.mubr.bf16.gmra.mxu0 %v143
    %v1907 = vpop.f32.mrf.mxu0
    %v1908 = vadd.f32 %v426, %v1907
    %v1909 = vpop.f32.mrf.mxu0
    %v1910 = vadd.f32 %v430, %v1909
    %v1911 = vpop.f32.mrf.mxu0
    %v1912 = vadd.f32 %v426, %v1911
    %v1913 = vpop.f32.mrf.mxu0
    %v1914 = vadd.f32 %v430, %v1913
    %1915 = vmatprep.mubr.bf16.mxu0 %v146
    %1916 = vmatmul.mubr.bf16.gmra.mxu0 %v145
    %v1917 = vpop.f32.mrf.mxu0
    %v1918 = vadd.f32 %v426, %v1917
    %v1919 = vpop.f32.mrf.mxu0
    %v1920 = vadd.f32 %v430, %v1919
    %v1921 = vpop.f32.mrf.mxu0
    %v1922 = vadd.f32 %v426, %v1921
    %v1923 = vpop.f32.mrf.mxu0
    %v1924 = vadd.f32 %v430, %v1923
    %1925 = vdwg.mxu0
    %1926 = vmatprep.subr.bf16.mxu0 %v1374
    %1927 = vmatpush1.bf16.msra.mxu0 %v1373
    %1928 = vmatprep.subr.bf16.mxu0 %v1358
    %1929 = vmatpush1.bf16.msra.mxu0 %v1357
    %1930 = vmatprep.subr.bf16.mxu0 %v1342
    %1931 = vmatpush1.bf16.msra.mxu0 %v1341
    %1932 = vmatprep.subr.bf16.mxu0 %v1326
    %1933 = vmatpush1.bf16.msra.mxu0 %v1325
    %1934 = vmatprep.subr.bf16.mxu0 %v1310
    %1935 = vmatpush1.bf16.msra.mxu0 %v1309
    %1936 = vmatprep.subr.bf16.mxu0 %v1294
    %1937 = vmatpush1.bf16.msra.mxu0 %v1293
    %1938 = vmatprep.subr.bf16.mxu0 %v1278
    %1939 = vmatpush1.bf16.msra.mxu0 %v1277
    %1940 = vmatprep.subr.bf16.mxu0 %v1262
    %1941 = vmatpush1.bf16.msra.mxu0 %v1261
    %1942 = vmatprep.subr.bf16.mxu0 %v1502
    %1943 = vmatpush2.bf16.msra.mxu0 %v1501
    %1944 = vmatprep.subr.bf16.mxu0 %v1486
    %1945 = vmatpush2.bf16.msra.mxu0 %v1485
    %1946 = vmatprep.subr.bf16.mxu0 %v1470
    %1947 = vmatpush2.bf16.msra.mxu0 %v1469
    %1948 = vmatprep.subr.bf16.mxu0 %v1454
    %1949 = vmatpush2.bf16.msra.mxu0 %v1453
    %1950 = vmatprep.subr.bf16.mxu0 %v1438
    %1951 = vmatpush2.bf16.msra.mxu0 %v1437
    %1952 = vmatprep.subr.bf16.mxu0 %v1422
    %1953 = vmatpush2.bf16.msra.mxu0 %v1421
    %1954 = vmatprep.subr.bf16.mxu0 %v1406
    %1955 = vmatpush2.bf16.msra.mxu0 %v1405
    %1956 = vmatprep.subr.bf16.mxu0 %v1390
    %1957 = vmatpush2.bf16.msra.mxu0 %v1389
    %1958 = vmatprep.mubr.bf16.mxu0 %v144
    %1959 = vmatmul.mubr.bf16.gmra.mxu0 %v143
    %v1960 = vpop.f32.mrf.mxu0
    %v1961 = vadd.f32 %v434, %v1960
    %v1962 = vpop.f32.mrf.mxu0
    %v1963 = vadd.f32 %v438, %v1962
    %v1964 = vpop.f32.mrf.mxu0
    %v1965 = vadd.f32 %v434, %v1964
    %v1966 = vpop.f32.mrf.mxu0
    %v1967 = vadd.f32 %v438, %v1966
    %1968 = vmatprep.mubr.bf16.mxu0 %v146
    %1969 = vmatmul.mubr.bf16.gmra.mxu0 %v145
    %v1970 = vpop.f32.mrf.mxu0
    %v1971 = vadd.f32 %v434, %v1970
    %v1972 = vpop.f32.mrf.mxu0
    %v1973 = vadd.f32 %v438, %v1972
    %v1974 = vpop.f32.mrf.mxu0
    %v1975 = vadd.f32 %v434, %v1974
    %v1976 = vpop.f32.mrf.mxu0
    %v1977 = vadd.f32 %v438, %v1976
    %1978 = vdwg.mxu0
    %1979 = vmatprep.subr.bf16.mxu0 %v1376
    %1980 = vmatpush1.bf16.msra.mxu0 %v1375
    %1981 = vmatprep.subr.bf16.mxu0 %v1360
    %1982 = vmatpush1.bf16.msra.mxu0 %v1359
    %1983 = vmatprep.subr.bf16.mxu0 %v1344
    %1984 = vmatpush1.bf16.msra.mxu0 %v1343
    %1985 = vmatprep.subr.bf16.mxu0 %v1328
    %1986 = vmatpush1.bf16.msra.mxu0 %v1327
    %1987 = vmatprep.subr.bf16.mxu0 %v1312
    %1988 = vmatpush1.bf16.msra.mxu0 %v1311
    %1989 = vmatprep.subr.bf16.mxu0 %v1296
    %1990 = vmatpush1.bf16.msra.mxu0 %v1295
    %1991 = vmatprep.subr.bf16.mxu0 %v1280
    %1992 = vmatpush1.bf16.msra.mxu0 %v1279
    %1993 = vmatprep.subr.bf16.mxu0 %v1264
    %1994 = vmatpush1.bf16.msra.mxu0 %v1263
    %1995 = vmatprep.subr.bf16.mxu0 %v1504
    %1996 = vmatpush2.bf16.msra.mxu0 %v1503
    %1997 = vmatprep.subr.bf16.mxu0 %v1488
    %1998 = vmatpush2.bf16.msra.mxu0 %v1487
    %1999 = vmatprep.subr.bf16.mxu0 %v1472
    %2000 = vmatpush2.bf16.msra.mxu0 %v1471
    %2001 = vmatprep.subr.bf16.mxu0 %v1456
    %2002 = vmatpush2.bf16.msra.mxu0 %v1455
    %2003 = vmatprep.subr.bf16.mxu0 %v1440
    %2004 = vmatpush2.bf16.msra.mxu0 %v1439
    %2005 = vmatprep.subr.bf16.mxu0 %v1424
    %2006 = vmatpush2.bf16.msra.mxu0 %v1423
    %2007 = vmatprep.subr.bf16.mxu0 %v1408
    %2008 = vmatpush2.bf16.msra.mxu0 %v1407
    %2009 = vmatprep.subr.bf16.mxu0 %v1392
    %2010 = vmatpush2.bf16.msra.mxu0 %v1391
    %2011 = vmatprep.mubr.bf16.mxu0 %v144
    %2012 = vmatmul.mubr.bf16.gmra.mxu0 %v143
    %v2013 = vpop.f32.mrf.mxu0
    %v2014 = vadd.f32 %v442, %v2013
    %v2015 = vpop.f32.mrf.mxu0
    %v2016 = vadd.f32 %v446, %v2015
    %v2017 = vpop.f32.mrf.mxu0
    %v2018 = vadd.f32 %v442, %v2017
    %v2019 = vpop.f32.mrf.mxu0
    %v2020 = vadd.f32 %v446, %v2019
    %2021 = vmatprep.mubr.bf16.mxu0 %v146
    %2022 = vmatmul.mubr.bf16.gmra.mxu0 %v145
    %v2023 = vpop.f32.mrf.mxu0
    %v2024 = vadd.f32 %v442, %v2023
    %v2025 = vpop.f32.mrf.mxu0
    %v2026 = vadd.f32 %v446, %v2025
    %v2027 = vpop.f32.mrf.mxu0
    %v2028 = vadd.f32 %v442, %v2027
    %v2029 = vpop.f32.mrf.mxu0
    %v2030 = vadd.f32 %v446, %v2029
    %2031 = vdwg.mxu0
    %2032 = vmatprep.subr.bf16.mxu0 %v1378
    %2033 = vmatpush1.bf16.msra.mxu0 %v1377
    %2034 = vmatprep.subr.bf16.mxu0 %v1362
    %2035 = vmatpush1.bf16.msra.mxu0 %v1361
    %2036 = vmatprep.subr.bf16.mxu0 %v1346
    %2037 = vmatpush1.bf16.msra.mxu0 %v1345
    %2038 = vmatprep.subr.bf16.mxu0 %v1330
    %2039 = vmatpush1.bf16.msra.mxu0 %v1329
    %2040 = vmatprep.subr.bf16.mxu0 %v1314
    %2041 = vmatpush1.bf16.msra.mxu0 %v1313
    %2042 = vmatprep.subr.bf16.mxu0 %v1298
    %2043 = vmatpush1.bf16.msra.mxu0 %v1297
    %2044 = vmatprep.subr.bf16.mxu0 %v1282
    %2045 = vmatpush1.bf16.msra.mxu0 %v1281
    %2046 = vmatprep.subr.bf16.mxu0 %v1266
    %2047 = vmatpush1.bf16.msra.mxu0 %v1265
    %2048 = vmatprep.subr.bf16.mxu0 %v1506
    %2049 = vmatpush2.bf16.msra.mxu0 %v1505
    %2050 = vmatprep.subr.bf16.mxu0 %v1490
    %2051 = vmatpush2.bf16.msra.mxu0 %v1489
    %2052 = vmatprep.subr.bf16.mxu0 %v1474
    %2053 = vmatpush2.bf16.msra.mxu0 %v1473
    %2054 = vmatprep.subr.bf16.mxu0 %v1458
    %2055 = vmatpush2.bf16.msra.mxu0 %v1457
    %2056 = vmatprep.subr.bf16.mxu0 %v1442
    %2057 = vmatpush2.bf16.msra.mxu0 %v1441
    %2058 = vmatprep.subr.bf16.mxu0 %v1426
    %2059 = vmatpush2.bf16.msra.mxu0 %v1425
    %2060 = vmatprep.subr.bf16.mxu0 %v1410
    %2061 = vmatpush2.bf16.msra.mxu0 %v1409
    %2062 = vmatprep.subr.bf16.mxu0 %v1394
    %2063 = vmatpush2.bf16.msra.mxu0 %v1393
    %2064 = vmatprep.mubr.bf16.mxu0 %v144
    %2065 = vmatmul.mubr.bf16.gmra.mxu0 %v143
    %v2066 = vpop.f32.mrf.mxu0
    %v2067 = vadd.f32 %v450, %v2066
    %v2068 = vpop.f32.mrf.mxu0
    %v2069 = vadd.f32 %v454, %v2068
    %v2070 = vpop.f32.mrf.mxu0
    %v2071 = vadd.f32 %v450, %v2070
    %v2072 = vpop.f32.mrf.mxu0
    %v2073 = vadd.f32 %v454, %v2072
    %2074 = vmatprep.mubr.bf16.mxu0 %v146
    %2075 = vmatmul.mubr.bf16.gmra.mxu0 %v145
    %v2076 = vpop.f32.mrf.mxu0
    %v2077 = vadd.f32 %v450, %v2076
    %v2078 = vpop.f32.mrf.mxu0
    %v2079 = vadd.f32 %v454, %v2078
    %v2080 = vpop.f32.mrf.mxu0
    %v2081 = vadd.f32 %v450, %v2080
    %v2082 = vpop.f32.mrf.mxu0
    %v2083 = vadd.f32 %v454, %v2082
    %2084 = vdwg.mxu0
    %2085 = vmatprep.subr.bf16.mxu0 %v1380
    %2086 = vmatpush1.bf16.msra.mxu0 %v1379
    %2087 = vmatprep.subr.bf16.mxu0 %v1364
    %2088 = vmatpush1.bf16.msra.mxu0 %v1363
    %2089 = vmatprep.subr.bf16.mxu0 %v1348
    %2090 = vmatpush1.bf16.msra.mxu0 %v1347
    %2091 = vmatprep.subr.bf16.mxu0 %v1332
    %2092 = vmatpush1.bf16.msra.mxu0 %v1331
    %2093 = vmatprep.subr.bf16.mxu0 %v1316
    %2094 = vmatpush1.bf16.msra.mxu0 %v1315
    %2095 = vmatprep.subr.bf16.mxu0 %v1300
    %2096 = vmatpush1.bf16.msra.mxu0 %v1299
    %2097 = vmatprep.subr.bf16.mxu0 %v1284
    %2098 = vmatpush1.bf16.msra.mxu0 %v1283
    %2099 = vmatprep.subr.bf16.mxu0 %v1268
    %2100 = vmatpush1.bf16.msra.mxu0 %v1267
    %2101 = vmatprep.subr.bf16.mxu0 %v1508
    %2102 = vmatpush2.bf16.msra.mxu0 %v1507
    %2103 = vmatprep.subr.bf16.mxu0 %v1492
    %2104 = vmatpush2.bf16.msra.mxu0 %v1491
    %2105 = vmatprep.subr.bf16.mxu0 %v1476
    %2106 = vmatpush2.bf16.msra.mxu0 %v1475
    %2107 = vmatprep.subr.bf16.mxu0 %v1460
    %2108 = vmatpush2.bf16.msra.mxu0 %v1459
    %2109 = vmatprep.subr.bf16.mxu0 %v1444
    %2110 = vmatpush2.bf16.msra.mxu0 %v1443
    %2111 = vmatprep.subr.bf16.mxu0 %v1428
    %2112 = vmatpush2.bf16.msra.mxu0 %v1427
    %2113 = vmatprep.subr.bf16.mxu0 %v1412
    %2114 = vmatpush2.bf16.msra.mxu0 %v1411
    %2115 = vmatprep.subr.bf16.mxu0 %v1396
    %2116 = vmatpush2.bf16.msra.mxu0 %v1395
    %2117 = vmatprep.mubr.bf16.mxu0 %v144
    %2118 = vmatmul.mubr.bf16.gmra.mxu0 %v143
    %v2119 = vpop.f32.mrf.mxu0
    %v2120 = vadd.f32 %v458, %v2119
    %v2121 = vpop.f32.mrf.mxu0
    %v2122 = vadd.f32 %v462, %v2121
    %v2123 = vpop.f32.mrf.mxu0
    %v2124 = vadd.f32 %v458, %v2123
    %v2125 = vpop.f32.mrf.mxu0
    %v2126 = vadd.f32 %v462, %v2125
    %2127 = vmatprep.mubr.bf16.mxu0 %v146
    %2128 = vmatmul.mubr.bf16.gmra.mxu0 %v145
    %v2129 = vpop.f32.mrf.mxu0
    %v2130 = vadd.f32 %v458, %v2129
    %v2131 = vpop.f32.mrf.mxu0
    %v2132 = vadd.f32 %v462, %v2131
    %v2133 = vpop.f32.mrf.mxu0
    %v2134 = vadd.f32 %v458, %v2133
    %v2135 = vpop.f32.mrf.mxu0
    %v2136 = vadd.f32 %v462, %v2135
    %2137 = vdwg.mxu0
    %2138 = vmatprep.subr.bf16.mxu0 %v1382
    %2139 = vmatpush1.bf16.msra.mxu0 %v1381
    %2140 = vmatprep.subr.bf16.mxu0 %v1366
    %2141 = vmatpush1.bf16.msra.mxu0 %v1365
    %2142 = vmatprep.subr.bf16.mxu0 %v1350
    %2143 = vmatpush1.bf16.msra.mxu0 %v1349
    %2144 = vmatprep.subr.bf16.mxu0 %v1334
    %2145 = vmatpush1.bf16.msra.mxu0 %v1333
    %2146 = vmatprep.subr.bf16.mxu0 %v1318
    %2147 = vmatpush1.bf16.msra.mxu0 %v1317
    %2148 = vmatprep.subr.bf16.mxu0 %v1302
    %2149 = vmatpush1.bf16.msra.mxu0 %v1301
    %2150 = vmatprep.subr.bf16.mxu0 %v1286
    %2151 = vmatpush1.bf16.msra.mxu0 %v1285
    %2152 = vmatprep.subr.bf16.mxu0 %v1270
    %2153 = vmatpush1.bf16.msra.mxu0 %v1269
    %2154 = vmatprep.subr.bf16.mxu0 %v1510
    %2155 = vmatpush2.bf16.msra.mxu0 %v1509
    %2156 = vmatprep.subr.bf16.mxu0 %v1494
    %2157 = vmatpush2.bf16.msra.mxu0 %v1493
    %2158 = vmatprep.subr.bf16.mxu0 %v1478
    %2159 = vmatpush2.bf16.msra.mxu0 %v1477
    %2160 = vmatprep.subr.bf16.mxu0 %v1462
    %2161 = vmatpush2.bf16.msra.mxu0 %v1461
    %2162 = vmatprep.subr.bf16.mxu0 %v1446
    %2163 = vmatpush2.bf16.msra.mxu0 %v1445
    %2164 = vmatprep.subr.bf16.mxu0 %v1430
    %2165 = vmatpush2.bf16.msra.mxu0 %v1429
    %2166 = vmatprep.subr.bf16.mxu0 %v1414
    %2167 = vmatpush2.bf16.msra.mxu0 %v1413
    %2168 = vmatprep.subr.bf16.mxu0 %v1398
    %2169 = vmatpush2.bf16.msra.mxu0 %v1397
    %2170 = vmatprep.mubr.bf16.mxu0 %v144
    %2171 = vmatmul.mubr.bf16.gmra.mxu0 %v143
    %v2172 = vpop.f32.mrf.mxu0
    %v2173 = vadd.f32 %v466, %v2172
    %v2174 = vpop.f32.mrf.mxu0
    %v2175 = vadd.f32 %v470, %v2174
    %v2176 = vpop.f32.mrf.mxu0
    %v2177 = vadd.f32 %v466, %v2176
    %v2178 = vpop.f32.mrf.mxu0
    %v2179 = vadd.f32 %v470, %v2178
    %2180 = vmatprep.mubr.bf16.mxu0 %v146
    %2181 = vmatmul.mubr.bf16.gmra.mxu0 %v145
    %v2182 = vpop.f32.mrf.mxu0
    %v2183 = vadd.f32 %v466, %v2182
    %v2184 = vpop.f32.mrf.mxu0
    %v2185 = vadd.f32 %v470, %v2184
    %v2186 = vpop.f32.mrf.mxu0
    %v2187 = vadd.f32 %v466, %v2186
    %v2188 = vpop.f32.mrf.mxu0
    %v2189 = vadd.f32 %v470, %v2188
    %2190 = vdwg.mxu0
    %v2191 = vmax.f32 %v1802, 0.0
    %v2192 = vmax.f32 %v1804, 0.0
    %v2193 = vmax.f32 %v1855, 0.0
    %v2194 = vmax.f32 %v1857, 0.0
    %v2195 = vmax.f32 %v1908, 0.0
    %v2196 = vmax.f32 %v1910, 0.0
    %v2197 = vmax.f32 %v1961, 0.0
    %v2198 = vmax.f32 %v1963, 0.0
    %v2199 = vmax.f32 %v2014, 0.0
    %v2200 = vmax.f32 %v2016, 0.0
    %v2201 = vmax.f32 %v2067, 0.0
    %v2202 = vmax.f32 %v2069, 0.0
    %v2203 = vmax.f32 %v2120, 0.0
    %v2204 = vmax.f32 %v2122, 0.0
    %v2205 = vmax.f32 %v2173, 0.0
    %v2206 = vmax.f32 %v2175, 0.0
    %v2207 = vmax.f32 %v1806, 0.0
    %v2208 = vmax.f32 %v1808, 0.0
    %v2209 = vmax.f32 %v1859, 0.0
    %v2210 = vmax.f32 %v1861, 0.0
    %v2211 = vmax.f32 %v1912, 0.0
    %v2212 = vmax.f32 %v1914, 0.0
    %v2213 = vmax.f32 %v1965, 0.0
    %v2214 = vmax.f32 %v1967, 0.0
    %v2215 = vmax.f32 %v2018, 0.0
    %v2216 = vmax.f32 %v2020, 0.0
    %v2217 = vmax.f32 %v2071, 0.0
    %v2218 = vmax.f32 %v2073, 0.0
    %v2219 = vmax.f32 %v2124, 0.0
    %v2220 = vmax.f32 %v2126, 0.0
    %v2221 = vmax.f32 %v2177, 0.0
    %v2222 = vmax.f32 %v2179, 0.0
    %v2223 = vmax.f32 %v1812, 0.0
    %v2224 = vmax.f32 %v1814, 0.0
    %v2225 = vmax.f32 %v1865, 0.0
    %v2226 = vmax.f32 %v1867, 0.0
    %v2227 = vmax.f32 %v1918, 0.0
    %v2228 = vmax.f32 %v1920, 0.0
    %v2229 = vmax.f32 %v1971, 0.0
    %v2230 = vmax.f32 %v1973, 0.0
    %v2231 = vmax.f32 %v2024, 0.0
    %v2232 = vmax.f32 %v2026, 0.0
    %v2233 = vmax.f32 %v2077, 0.0
    %v2234 = vmax.f32 %v2079, 0.0
    %v2235 = vmax.f32 %v2130, 0.0
    %v2236 = vmax.f32 %v2132, 0.0
    %v2237 = vmax.f32 %v2183, 0.0
    %v2238 = vmax.f32 %v2185, 0.0
    %v2239 = vmax.f32 %v1816, 0.0
    %v2240 = vmax.f32 %v1818, 0.0
    %v2241 = vmax.f32 %v1869, 0.0
    %v2242 = vmax.f32 %v1871, 0.0
    %v2243 = vmax.f32 %v1922, 0.0
    %v2244 = vmax.f32 %v1924, 0.0
    %v2245 = vmax.f32 %v1975, 0.0
    %v2246 = vmax.f32 %v1977, 0.0
    %v2247 = vmax.f32 %v2028, 0.0
    %v2248 = vmax.f32 %v2030, 0.0
    %v2249 = vmax.f32 %v2081, 0.0
    %v2250 = vmax.f32 %v2083, 0.0
    %v2251 = vmax.f32 %v2134, 0.0
    %v2252 = vmax.f32 %v2136, 0.0
    %v2253 = vmax.f32 %v2187, 0.0
    %v2254 = vmax.f32 %v2189, 0.0
    %v2255 = vpack.c.bf16 %v2207, %v2191
    %v2256 = vpack.c.bf16 %v2208, %v2192
    %v2257 = vpack.c.bf16 %v2209, %v2193
    %v2258 = vpack.c.bf16 %v2210, %v2194
    %v2259 = vpack.c.bf16 %v2211, %v2195
    %v2260 = vpack.c.bf16 %v2212, %v2196
    %v2261 = vpack.c.bf16 %v2213, %v2197
    %v2262 = vpack.c.bf16 %v2214, %v2198
    %v2263 = vpack.c.bf16 %v2215, %v2199
    %v2264 = vpack.c.bf16 %v2216, %v2200
    %v2265 = vpack.c.bf16 %v2217, %v2201
    %v2266 = vpack.c.bf16 %v2218, %v2202
    %v2267 = vpack.c.bf16 %v2219, %v2203
    %v2268 = vpack.c.bf16 %v2220, %v2204
    %v2269 = vpack.c.bf16 %v2221, %v2205
    %v2270 = vpack.c.bf16 %v2222, %v2206
    %v2271 = vpack.c.bf16 %v2239, %v2223
    %v2272 = vpack.c.bf16 %v2240, %v2224
    %v2273 = vpack.c.bf16 %v2241, %v2225
    %v2274 = vpack.c.bf16 %v2242, %v2226
    %v2275 = vpack.c.bf16 %v2243, %v2227
    %v2276 = vpack.c.bf16 %v2244, %v2228
    %v2277 = vpack.c.bf16 %v2245, %v2229
    %v2278 = vpack.c.bf16 %v2246, %v2230
    %v2279 = vpack.c.bf16 %v2247, %v2231
    %v2280 = vpack.c.bf16 %v2248, %v2232
    %v2281 = vpack.c.bf16 %v2249, %v2233
    %v2282 = vpack.c.bf16 %v2250, %v2234
    %v2283 = vpack.c.bf16 %v2251, %v2235
    %v2284 = vpack.c.bf16 %v2252, %v2236
    %v2285 = vpack.c.bf16 %v2253, %v2237
    %v2286 = vpack.c.bf16 %v2254, %v2238
    %v2287 = vld [vmem:[#allocation8] sm:$0xff]
    %v2288 = vld [vmem:[#allocation8 + $0x8] sm:$0xff]
    %v2289 = vld [vmem:[#allocation8 + $0x10] sm:$0xff]
    %v2290 = vld [vmem:[#allocation8 + $0x18] sm:$0xff]
    %v2291 = vld [vmem:[#allocation8 + $0x20] sm:$0xff]
    %v2292 = vld [vmem:[#allocation8 + $0x28] sm:$0xff]
    %v2293 = vld [vmem:[#allocation8 + $0x30] sm:$0xff]
    %v2294 = vld [vmem:[#allocation8 + $0x38] sm:$0xff]
    %v2295 = vld [vmem:[#allocation8 + $0x40] sm:$0xff]
    %v2296 = vld [vmem:[#allocation8 + $0x48] sm:$0xff]
    %v2297 = vld [vmem:[#allocation8 + $0x50] sm:$0xff]
    %v2298 = vld [vmem:[#allocation8 + $0x58] sm:$0xff]
    %v2299 = vld [vmem:[#allocation8 + $0x60] sm:$0xff]
    %v2300 = vld [vmem:[#allocation8 + $0x68] sm:$0xff]
    %v2301 = vld [vmem:[#allocation8 + $0x70] sm:$0xff]
    %v2302 = vld [vmem:[#allocation8 + $0x78] sm:$0xff]
    %v2303 = vld [vmem:[#allocation8 + $0x80] sm:$0xff]
    %v2304 = vld [vmem:[#allocation8 + $0x88] sm:$0xff]
    %v2305 = vld [vmem:[#allocation8 + $0x90] sm:$0xff]
    %v2306 = vld [vmem:[#allocation8 + $0x98] sm:$0xff]
    %v2307 = vld [vmem:[#allocation8 + $0xa0] sm:$0xff]
    %v2308 = vld [vmem:[#allocation8 + $0xa8] sm:$0xff]
    %v2309 = vld [vmem:[#allocation8 + $0xb0] sm:$0xff]
    %v2310 = vld [vmem:[#allocation8 + $0xb8] sm:$0xff]
    %v2311 = vld [vmem:[#allocation8 + $0xc0] sm:$0xff]
    %v2312 = vld [vmem:[#allocation8 + $0xc8] sm:$0xff]
    %v2313 = vld [vmem:[#allocation8 + $0xd0] sm:$0xff]
    %v2314 = vld [vmem:[#allocation8 + $0xd8] sm:$0xff]
    %v2315 = vld [vmem:[#allocation8 + $0xe0] sm:$0xff]
    %v2316 = vld [vmem:[#allocation8 + $0xe8] sm:$0xff]
    %v2317 = vld [vmem:[#allocation8 + $0xf0] sm:$0xff]
    %v2318 = vld [vmem:[#allocation8 + $0xf8] sm:$0xff]
    %v2319 = vld [vmem:[#allocation8 + $0x100] sm:$0xff]
    %v2320 = vld [vmem:[#allocation8 + $0x108] sm:$0xff]
    %v2321 = vld [vmem:[#allocation8 + $0x110] sm:$0xff]
    %v2322 = vld [vmem:[#allocation8 + $0x118] sm:$0xff]
    %v2323 = vld [vmem:[#allocation8 + $0x120] sm:$0xff]
    %v2324 = vld [vmem:[#allocation8 + $0x128] sm:$0xff]
    %v2325 = vld [vmem:[#allocation8 + $0x130] sm:$0xff]
    %v2326 = vld [vmem:[#allocation8 + $0x138] sm:$0xff]
    %v2327 = vld [vmem:[#allocation8 + $0x140] sm:$0xff]
    %v2328 = vld [vmem:[#allocation8 + $0x148] sm:$0xff]
    %v2329 = vld [vmem:[#allocation8 + $0x150] sm:$0xff]
    %v2330 = vld [vmem:[#allocation8 + $0x158] sm:$0xff]
    %v2331 = vld [vmem:[#allocation8 + $0x160] sm:$0xff]
    %v2332 = vld [vmem:[#allocation8 + $0x168] sm:$0xff]
    %v2333 = vld [vmem:[#allocation8 + $0x170] sm:$0xff]
    %v2334 = vld [vmem:[#allocation8 + $0x178] sm:$0xff]
    %v2335 = vld [vmem:[#allocation8 + $0x180] sm:$0xff]
    %v2336 = vld [vmem:[#allocation8 + $0x188] sm:$0xff]
    %v2337 = vld [vmem:[#allocation8 + $0x190] sm:$0xff]
    %v2338 = vld [vmem:[#allocation8 + $0x198] sm:$0xff]
    %v2339 = vld [vmem:[#allocation8 + $0x1a0] sm:$0xff]
    %v2340 = vld [vmem:[#allocation8 + $0x1a8] sm:$0xff]
    %v2341 = vld [vmem:[#allocation8 + $0x1b0] sm:$0xff]
    %v2342 = vld [vmem:[#allocation8 + $0x1b8] sm:$0xff]
    %v2343 = vld [vmem:[#allocation8 + $0x1c0] sm:$0xff]
    %v2344 = vld [vmem:[#allocation8 + $0x1c8] sm:$0xff]
    %v2345 = vld [vmem:[#allocation8 + $0x1d0] sm:$0xff]
    %v2346 = vld [vmem:[#allocation8 + $0x1d8] sm:$0xff]
    %v2347 = vld [vmem:[#allocation8 + $0x1e0] sm:$0xff]
    %v2348 = vld [vmem:[#allocation8 + $0x1e8] sm:$0xff]
    %v2349 = vld [vmem:[#allocation8 + $0x1f0] sm:$0xff]
    %v2350 = vld [vmem:[#allocation8 + $0x1f8] sm:$0xff]
    %v2351 = vld [vmem:[#allocation8 + $0x200] sm:$0xff]
    %v2352 = vld [vmem:[#allocation8 + $0x208] sm:$0xff]
    %v2353 = vld [vmem:[#allocation8 + $0x210] sm:$0xff]
    %v2354 = vld [vmem:[#allocation8 + $0x218] sm:$0xff]
    %v2355 = vld [vmem:[#allocation8 + $0x220] sm:$0xff]
    %v2356 = vld [vmem:[#allocation8 + $0x228] sm:$0xff]
    %v2357 = vld [vmem:[#allocation8 + $0x230] sm:$0xff]
    %v2358 = vld [vmem:[#allocation8 + $0x238] sm:$0xff]
    %v2359 = vld [vmem:[#allocation8 + $0x240] sm:$0xff]
    %v2360 = vld [vmem:[#allocation8 + $0x248] sm:$0xff]
    %v2361 = vld [vmem:[#allocation8 + $0x250] sm:$0xff]
    %v2362 = vld [vmem:[#allocation8 + $0x258] sm:$0xff]
    %v2363 = vld [vmem:[#allocation8 + $0x260] sm:$0xff]
    %v2364 = vld [vmem:[#allocation8 + $0x268] sm:$0xff]
    %v2365 = vld [vmem:[#allocation8 + $0x270] sm:$0xff]
    %v2366 = vld [vmem:[#allocation8 + $0x278] sm:$0xff]
    %v2367 = vld [vmem:[#allocation8 + $0x280] sm:$0xff]
    %v2368 = vld [vmem:[#allocation8 + $0x288] sm:$0xff]
    %v2369 = vld [vmem:[#allocation8 + $0x290] sm:$0xff]
    %v2370 = vld [vmem:[#allocation8 + $0x298] sm:$0xff]
    %v2371 = vld [vmem:[#allocation8 + $0x2a0] sm:$0xff]
    %v2372 = vld [vmem:[#allocation8 + $0x2a8] sm:$0xff]
    %v2373 = vld [vmem:[#allocation8 + $0x2b0] sm:$0xff]
    %v2374 = vld [vmem:[#allocation8 + $0x2b8] sm:$0xff]
    %v2375 = vld [vmem:[#allocation8 + $0x2c0] sm:$0xff]
    %v2376 = vld [vmem:[#allocation8 + $0x2c8] sm:$0xff]
    %v2377 = vld [vmem:[#allocation8 + $0x2d0] sm:$0xff]
    %v2378 = vld [vmem:[#allocation8 + $0x2d8] sm:$0xff]
    %v2379 = vld [vmem:[#allocation8 + $0x2e0] sm:$0xff]
    %v2380 = vld [vmem:[#allocation8 + $0x2e8] sm:$0xff]
    %v2381 = vld [vmem:[#allocation8 + $0x2f0] sm:$0xff]
    %v2382 = vld [vmem:[#allocation8 + $0x2f8] sm:$0xff]
    %v2383 = vld [vmem:[#allocation8 + $0x300] sm:$0xff]
    %v2384 = vld [vmem:[#allocation8 + $0x308] sm:$0xff]
    %v2385 = vld [vmem:[#allocation8 + $0x310] sm:$0xff]
    %v2386 = vld [vmem:[#allocation8 + $0x318] sm:$0xff]
    %v2387 = vld [vmem:[#allocation8 + $0x320] sm:$0xff]
    %v2388 = vld [vmem:[#allocation8 + $0x328] sm:$0xff]
    %v2389 = vld [vmem:[#allocation8 + $0x330] sm:$0xff]
    %v2390 = vld [vmem:[#allocation8 + $0x338] sm:$0xff]
    %v2391 = vld [vmem:[#allocation8 + $0x340] sm:$0xff]
    %v2392 = vld [vmem:[#allocation8 + $0x348] sm:$0xff]
    %v2393 = vld [vmem:[#allocation8 + $0x350] sm:$0xff]
    %v2394 = vld [vmem:[#allocation8 + $0x358] sm:$0xff]
    %v2395 = vld [vmem:[#allocation8 + $0x360] sm:$0xff]
    %v2396 = vld [vmem:[#allocation8 + $0x368] sm:$0xff]
    %v2397 = vld [vmem:[#allocation8 + $0x370] sm:$0xff]
    %v2398 = vld [vmem:[#allocation8 + $0x378] sm:$0xff]
    %v2399 = vld [vmem:[#allocation8 + $0x380] sm:$0xff]
    %v2400 = vld [vmem:[#allocation8 + $0x388] sm:$0xff]
    %v2401 = vld [vmem:[#allocation8 + $0x390] sm:$0xff]
    %v2402 = vld [vmem:[#allocation8 + $0x398] sm:$0xff]
    %v2403 = vld [vmem:[#allocation8 + $0x3a0] sm:$0xff]
    %v2404 = vld [vmem:[#allocation8 + $0x3a8] sm:$0xff]
    %v2405 = vld [vmem:[#allocation8 + $0x3b0] sm:$0xff]
    %v2406 = vld [vmem:[#allocation8 + $0x3b8] sm:$0xff]
    %v2407 = vld [vmem:[#allocation8 + $0x3c0] sm:$0xff]
    %v2408 = vld [vmem:[#allocation8 + $0x3c8] sm:$0xff]
    %v2409 = vld [vmem:[#allocation8 + $0x3d0] sm:$0xff]
    %v2410 = vld [vmem:[#allocation8 + $0x3d8] sm:$0xff]
    %v2411 = vld [vmem:[#allocation8 + $0x3e0] sm:$0xff]
    %v2412 = vld [vmem:[#allocation8 + $0x3e8] sm:$0xff]
    %v2413 = vld [vmem:[#allocation8 + $0x3f0] sm:$0xff]
    %v2414 = vld [vmem:[#allocation8 + $0x3f8] sm:$0xff]
    %v2415 = vld [vmem:[#allocation8 + $0x400] sm:$0xff]
    %v2416 = vld [vmem:[#allocation8 + $0x408] sm:$0xff]
    %v2417 = vld [vmem:[#allocation8 + $0x410] sm:$0xff]
    %v2418 = vld [vmem:[#allocation8 + $0x418] sm:$0xff]
    %v2419 = vld [vmem:[#allocation8 + $0x420] sm:$0xff]
    %v2420 = vld [vmem:[#allocation8 + $0x428] sm:$0xff]
    %v2421 = vld [vmem:[#allocation8 + $0x430] sm:$0xff]
    %v2422 = vld [vmem:[#allocation8 + $0x438] sm:$0xff]
    %v2423 = vld [vmem:[#allocation8 + $0x440] sm:$0xff]
    %v2424 = vld [vmem:[#allocation8 + $0x448] sm:$0xff]
    %v2425 = vld [vmem:[#allocation8 + $0x450] sm:$0xff]
    %v2426 = vld [vmem:[#allocation8 + $0x458] sm:$0xff]
    %v2427 = vld [vmem:[#allocation8 + $0x460] sm:$0xff]
    %v2428 = vld [vmem:[#allocation8 + $0x468] sm:$0xff]
    %v2429 = vld [vmem:[#allocation8 + $0x470] sm:$0xff]
    %v2430 = vld [vmem:[#allocation8 + $0x478] sm:$0xff]
    %v2431 = vld [vmem:[#allocation8 + $0x480] sm:$0xff]
    %v2432 = vld [vmem:[#allocation8 + $0x488] sm:$0xff]
    %v2433 = vld [vmem:[#allocation8 + $0x490] sm:$0xff]
    %v2434 = vld [vmem:[#allocation8 + $0x498] sm:$0xff]
    %v2435 = vld [vmem:[#allocation8 + $0x4a0] sm:$0xff]
    %v2436 = vld [vmem:[#allocation8 + $0x4a8] sm:$0xff]
    %v2437 = vld [vmem:[#allocation8 + $0x4b0] sm:$0xff]
    %v2438 = vld [vmem:[#allocation8 + $0x4b8] sm:$0xff]
    %v2439 = vld [vmem:[#allocation8 + $0x4c0] sm:$0xff]
    %v2440 = vld [vmem:[#allocation8 + $0x4c8] sm:$0xff]
    %v2441 = vld [vmem:[#allocation8 + $0x4d0] sm:$0xff]
    %v2442 = vld [vmem:[#allocation8 + $0x4d8] sm:$0xff]
    %v2443 = vld [vmem:[#allocation8 + $0x4e0] sm:$0xff]
    %v2444 = vld [vmem:[#allocation8 + $0x4e8] sm:$0xff]
    %v2445 = vld [vmem:[#allocation8 + $0x4f0] sm:$0xff]
    %v2446 = vld [vmem:[#allocation8 + $0x4f8] sm:$0xff]
    %v2447 = vld [vmem:[#allocation8 + $0x500] sm:$0xff]
    %v2448 = vld [vmem:[#allocation8 + $0x508] sm:$0xff]
    %v2449 = vld [vmem:[#allocation8 + $0x510] sm:$0xff]
    %v2450 = vld [vmem:[#allocation8 + $0x518] sm:$0xff]
    %v2451 = vld [vmem:[#allocation8 + $0x520] sm:$0xff]
    %v2452 = vld [vmem:[#allocation8 + $0x528] sm:$0xff]
    %v2453 = vld [vmem:[#allocation8 + $0x530] sm:$0xff]
    %v2454 = vld [vmem:[#allocation8 + $0x538] sm:$0xff]
    %v2455 = vld [vmem:[#allocation8 + $0x540] sm:$0xff]
    %v2456 = vld [vmem:[#allocation8 + $0x548] sm:$0xff]
    %v2457 = vld [vmem:[#allocation8 + $0x550] sm:$0xff]
    %v2458 = vld [vmem:[#allocation8 + $0x558] sm:$0xff]
    %v2459 = vld [vmem:[#allocation8 + $0x560] sm:$0xff]
    %v2460 = vld [vmem:[#allocation8 + $0x568] sm:$0xff]
    %v2461 = vld [vmem:[#allocation8 + $0x570] sm:$0xff]
    %v2462 = vld [vmem:[#allocation8 + $0x578] sm:$0xff]
    %v2463 = vld [vmem:[#allocation8 + $0x580] sm:$0xff]
    %v2464 = vld [vmem:[#allocation8 + $0x588] sm:$0xff]
    %v2465 = vld [vmem:[#allocation8 + $0x590] sm:$0xff]
    %v2466 = vld [vmem:[#allocation8 + $0x598] sm:$0xff]
    %v2467 = vld [vmem:[#allocation8 + $0x5a0] sm:$0xff]
    %v2468 = vld [vmem:[#allocation8 + $0x5a8] sm:$0xff]
    %v2469 = vld [vmem:[#allocation8 + $0x5b0] sm:$0xff]
    %v2470 = vld [vmem:[#allocation8 + $0x5b8] sm:$0xff]
    %v2471 = vld [vmem:[#allocation8 + $0x5c0] sm:$0xff]
    %v2472 = vld [vmem:[#allocation8 + $0x5c8] sm:$0xff]
    %v2473 = vld [vmem:[#allocation8 + $0x5d0] sm:$0xff]
    %v2474 = vld [vmem:[#allocation8 + $0x5d8] sm:$0xff]
    %v2475 = vld [vmem:[#allocation8 + $0x5e0] sm:$0xff]
    %v2476 = vld [vmem:[#allocation8 + $0x5e8] sm:$0xff]
    %v2477 = vld [vmem:[#allocation8 + $0x5f0] sm:$0xff]
    %v2478 = vld [vmem:[#allocation8 + $0x5f8] sm:$0xff]
    %v2479 = vld [vmem:[#allocation8 + $0x600] sm:$0xff]
    %v2480 = vld [vmem:[#allocation8 + $0x608] sm:$0xff]
    %v2481 = vld [vmem:[#allocation8 + $0x610] sm:$0xff]
    %v2482 = vld [vmem:[#allocation8 + $0x618] sm:$0xff]
    %v2483 = vld [vmem:[#allocation8 + $0x620] sm:$0xff]
    %v2484 = vld [vmem:[#allocation8 + $0x628] sm:$0xff]
    %v2485 = vld [vmem:[#allocation8 + $0x630] sm:$0xff]
    %v2486 = vld [vmem:[#allocation8 + $0x638] sm:$0xff]
    %v2487 = vld [vmem:[#allocation8 + $0x640] sm:$0xff]
    %v2488 = vld [vmem:[#allocation8 + $0x648] sm:$0xff]
    %v2489 = vld [vmem:[#allocation8 + $0x650] sm:$0xff]
    %v2490 = vld [vmem:[#allocation8 + $0x658] sm:$0xff]
    %v2491 = vld [vmem:[#allocation8 + $0x660] sm:$0xff]
    %v2492 = vld [vmem:[#allocation8 + $0x668] sm:$0xff]
    %v2493 = vld [vmem:[#allocation8 + $0x670] sm:$0xff]
    %v2494 = vld [vmem:[#allocation8 + $0x678] sm:$0xff]
    %v2495 = vld [vmem:[#allocation8 + $0x680] sm:$0xff]
    %v2496 = vld [vmem:[#allocation8 + $0x688] sm:$0xff]
    %v2497 = vld [vmem:[#allocation8 + $0x690] sm:$0xff]
    %v2498 = vld [vmem:[#allocation8 + $0x698] sm:$0xff]
    %v2499 = vld [vmem:[#allocation8 + $0x6a0] sm:$0xff]
    %v2500 = vld [vmem:[#allocation8 + $0x6a8] sm:$0xff]
    %v2501 = vld [vmem:[#allocation8 + $0x6b0] sm:$0xff]
    %v2502 = vld [vmem:[#allocation8 + $0x6b8] sm:$0xff]
    %v2503 = vld [vmem:[#allocation8 + $0x6c0] sm:$0xff]
    %v2504 = vld [vmem:[#allocation8 + $0x6c8] sm:$0xff]
    %v2505 = vld [vmem:[#allocation8 + $0x6d0] sm:$0xff]
    %v2506 = vld [vmem:[#allocation8 + $0x6d8] sm:$0xff]
    %v2507 = vld [vmem:[#allocation8 + $0x6e0] sm:$0xff]
    %v2508 = vld [vmem:[#allocation8 + $0x6e8] sm:$0xff]
    %v2509 = vld [vmem:[#allocation8 + $0x6f0] sm:$0xff]
    %v2510 = vld [vmem:[#allocation8 + $0x6f8] sm:$0xff]
    %v2511 = vld [vmem:[#allocation8 + $0x700] sm:$0xff]
    %v2512 = vld [vmem:[#allocation8 + $0x708] sm:$0xff]
    %v2513 = vld [vmem:[#allocation8 + $0x710] sm:$0xff]
    %v2514 = vld [vmem:[#allocation8 + $0x718] sm:$0xff]
    %v2515 = vld [vmem:[#allocation8 + $0x720] sm:$0xff]
    %v2516 = vld [vmem:[#allocation8 + $0x728] sm:$0xff]
    %v2517 = vld [vmem:[#allocation8 + $0x730] sm:$0xff]
    %v2518 = vld [vmem:[#allocation8 + $0x738] sm:$0xff]
    %v2519 = vld [vmem:[#allocation8 + $0x740] sm:$0xff]
    %v2520 = vld [vmem:[#allocation8 + $0x748] sm:$0xff]
    %v2521 = vld [vmem:[#allocation8 + $0x750] sm:$0xff]
    %v2522 = vld [vmem:[#allocation8 + $0x758] sm:$0xff]
    %v2523 = vld [vmem:[#allocation8 + $0x760] sm:$0xff]
    %v2524 = vld [vmem:[#allocation8 + $0x768] sm:$0xff]
    %v2525 = vld [vmem:[#allocation8 + $0x770] sm:$0xff]
    %v2526 = vld [vmem:[#allocation8 + $0x778] sm:$0xff]
    %v2527 = vld [vmem:[#allocation8 + $0x780] sm:$0xff]
    %v2528 = vld [vmem:[#allocation8 + $0x788] sm:$0xff]
    %v2529 = vld [vmem:[#allocation8 + $0x790] sm:$0xff]
    %v2530 = vld [vmem:[#allocation8 + $0x798] sm:$0xff]
    %v2531 = vld [vmem:[#allocation8 + $0x7a0] sm:$0xff]
    %v2532 = vld [vmem:[#allocation8 + $0x7a8] sm:$0xff]
    %v2533 = vld [vmem:[#allocation8 + $0x7b0] sm:$0xff]
    %v2534 = vld [vmem:[#allocation8 + $0x7b8] sm:$0xff]
    %v2535 = vld [vmem:[#allocation8 + $0x7c0] sm:$0xff]
    %v2536 = vld [vmem:[#allocation8 + $0x7c8] sm:$0xff]
    %v2537 = vld [vmem:[#allocation8 + $0x7d0] sm:$0xff]
    %v2538 = vld [vmem:[#allocation8 + $0x7d8] sm:$0xff]
    %v2539 = vld [vmem:[#allocation8 + $0x7e0] sm:$0xff]
    %v2540 = vld [vmem:[#allocation8 + $0x7e8] sm:$0xff]
    %v2541 = vld [vmem:[#allocation8 + $0x7f0] sm:$0xff]
    %v2542 = vld [vmem:[#allocation8 + $0x7f8] sm:$0xff]
    %v2543 = vld [vmem:[#allocation8 + $0x800] sm:$0xff]
    %v2544 = vld [vmem:[#allocation8 + $0x808] sm:$0xff]
    %v2545 = vld [vmem:[#allocation8 + $0x810] sm:$0xff]
    %v2546 = vld [vmem:[#allocation8 + $0x818] sm:$0xff]
    %v2547 = vld [vmem:[#allocation8 + $0x820] sm:$0xff]
    %v2548 = vld [vmem:[#allocation8 + $0x828] sm:$0xff]
    %v2549 = vld [vmem:[#allocation8 + $0x830] sm:$0xff]
    %v2550 = vld [vmem:[#allocation8 + $0x838] sm:$0xff]
    %v2551 = vld [vmem:[#allocation8 + $0x840] sm:$0xff]
    %v2552 = vld [vmem:[#allocation8 + $0x848] sm:$0xff]
    %v2553 = vld [vmem:[#allocation8 + $0x850] sm:$0xff]
    %v2554 = vld [vmem:[#allocation8 + $0x858] sm:$0xff]
    %v2555 = vld [vmem:[#allocation8 + $0x860] sm:$0xff]
    %v2556 = vld [vmem:[#allocation8 + $0x868] sm:$0xff]
    %v2557 = vld [vmem:[#allocation8 + $0x870] sm:$0xff]
    %v2558 = vld [vmem:[#allocation8 + $0x878] sm:$0xff]
    %v2559 = vld [vmem:[#allocation8 + $0x880] sm:$0xff]
    %v2560 = vld [vmem:[#allocation8 + $0x888] sm:$0xff]
    %v2561 = vld [vmem:[#allocation8 + $0x890] sm:$0xff]
    %v2562 = vld [vmem:[#allocation8 + $0x898] sm:$0xff]
    %v2563 = vld [vmem:[#allocation8 + $0x8a0] sm:$0xff]
    %v2564 = vld [vmem:[#allocation8 + $0x8a8] sm:$0xff]
    %v2565 = vld [vmem:[#allocation8 + $0x8b0] sm:$0xff]
    %v2566 = vld [vmem:[#allocation8 + $0x8b8] sm:$0xff]
    %v2567 = vld [vmem:[#allocation8 + $0x8c0] sm:$0xff]
    %v2568 = vld [vmem:[#allocation8 + $0x8c8] sm:$0xff]
    %v2569 = vld [vmem:[#allocation8 + $0x8d0] sm:$0xff]
    %v2570 = vld [vmem:[#allocation8 + $0x8d8] sm:$0xff]
    %v2571 = vld [vmem:[#allocation8 + $0x8e0] sm:$0xff]
    %v2572 = vld [vmem:[#allocation8 + $0x8e8] sm:$0xff]
    %v2573 = vld [vmem:[#allocation8 + $0x8f0] sm:$0xff]
    %v2574 = vld [vmem:[#allocation8 + $0x8f8] sm:$0xff]
    %v2575 = vld [vmem:[#allocation8 + $0x900] sm:$0xff]
    %v2576 = vld [vmem:[#allocation8 + $0x908] sm:$0xff]
    %v2577 = vld [vmem:[#allocation8 + $0x910] sm:$0xff]
    %v2578 = vld [vmem:[#allocation8 + $0x918] sm:$0xff]
    %v2579 = vld [vmem:[#allocation8 + $0x920] sm:$0xff]
    %v2580 = vld [vmem:[#allocation8 + $0x928] sm:$0xff]
    %v2581 = vld [vmem:[#allocation8 + $0x930] sm:$0xff]
    %v2582 = vld [vmem:[#allocation8 + $0x938] sm:$0xff]
    %v2583 = vld [vmem:[#allocation8 + $0x940] sm:$0xff]
    %v2584 = vld [vmem:[#allocation8 + $0x948] sm:$0xff]
    %v2585 = vld [vmem:[#allocation8 + $0x950] sm:$0xff]
    %v2586 = vld [vmem:[#allocation8 + $0x958] sm:$0xff]
    %v2587 = vld [vmem:[#allocation8 + $0x960] sm:$0xff]
    %v2588 = vld [vmem:[#allocation8 + $0x968] sm:$0xff]
    %v2589 = vld [vmem:[#allocation8 + $0x970] sm:$0xff]
    %v2590 = vld [vmem:[#allocation8 + $0x978] sm:$0xff]
    %v2591 = vld [vmem:[#allocation8 + $0x980] sm:$0xff]
    %v2592 = vld [vmem:[#allocation8 + $0x988] sm:$0xff]
    %v2593 = vld [vmem:[#allocation8 + $0x990] sm:$0xff]
    %v2594 = vld [vmem:[#allocation8 + $0x998] sm:$0xff]
    %v2595 = vld [vmem:[#allocation8 + $0x9a0] sm:$0xff]
    %v2596 = vld [vmem:[#allocation8 + $0x9a8] sm:$0xff]
    %v2597 = vld [vmem:[#allocation8 + $0x9b0] sm:$0xff]
    %v2598 = vld [vmem:[#allocation8 + $0x9b8] sm:$0xff]
    %v2599 = vld [vmem:[#allocation8 + $0x9c0] sm:$0xff]
    %v2600 = vld [vmem:[#allocation8 + $0x9c8] sm:$0xff]
    %v2601 = vld [vmem:[#allocation8 + $0x9d0] sm:$0xff]
    %v2602 = vld [vmem:[#allocation8 + $0x9d8] sm:$0xff]
    %v2603 = vld [vmem:[#allocation8 + $0x9e0] sm:$0xff]
    %v2604 = vld [vmem:[#allocation8 + $0x9e8] sm:$0xff]
    %v2605 = vld [vmem:[#allocation8 + $0x9f0] sm:$0xff]
    %v2606 = vld [vmem:[#allocation8 + $0x9f8] sm:$0xff]
    %v2607 = vld [vmem:[#allocation8 + $0xa00] sm:$0xff]
    %v2608 = vld [vmem:[#allocation8 + $0xa08] sm:$0xff]
    %v2609 = vld [vmem:[#allocation8 + $0xa10] sm:$0xff]
    %v2610 = vld [vmem:[#allocation8 + $0xa18] sm:$0xff]
    %v2611 = vld [vmem:[#allocation8 + $0xa20] sm:$0xff]
    %v2612 = vld [vmem:[#allocation8 + $0xa28] sm:$0xff]
    %v2613 = vld [vmem:[#allocation8 + $0xa30] sm:$0xff]
    %v2614 = vld [vmem:[#allocation8 + $0xa38] sm:$0xff]
    %v2615 = vld [vmem:[#allocation8 + $0xa40] sm:$0xff]
    %v2616 = vld [vmem:[#allocation8 + $0xa48] sm:$0xff]
    %v2617 = vld [vmem:[#allocation8 + $0xa50] sm:$0xff]
    %v2618 = vld [vmem:[#allocation8 + $0xa58] sm:$0xff]
    %v2619 = vld [vmem:[#allocation8 + $0xa60] sm:$0xff]
    %v2620 = vld [vmem:[#allocation8 + $0xa68] sm:$0xff]
    %v2621 = vld [vmem:[#allocation8 + $0xa70] sm:$0xff]
    %v2622 = vld [vmem:[#allocation8 + $0xa78] sm:$0xff]
    %v2623 = vld [vmem:[#allocation8 + $0xa80] sm:$0xff]
    %v2624 = vld [vmem:[#allocation8 + $0xa88] sm:$0xff]
    %v2625 = vld [vmem:[#allocation8 + $0xa90] sm:$0xff]
    %v2626 = vld [vmem:[#allocation8 + $0xa98] sm:$0xff]
    %v2627 = vld [vmem:[#allocation8 + $0xaa0] sm:$0xff]
    %v2628 = vld [vmem:[#allocation8 + $0xaa8] sm:$0xff]
    %v2629 = vld [vmem:[#allocation8 + $0xab0] sm:$0xff]
    %v2630 = vld [vmem:[#allocation8 + $0xab8] sm:$0xff]
    %v2631 = vld [vmem:[#allocation8 + $0xac0] sm:$0xff]
    %v2632 = vld [vmem:[#allocation8 + $0xac8] sm:$0xff]
    %v2633 = vld [vmem:[#allocation8 + $0xad0] sm:$0xff]
    %v2634 = vld [vmem:[#allocation8 + $0xad8] sm:$0xff]
    %v2635 = vld [vmem:[#allocation8 + $0xae0] sm:$0xff]
    %v2636 = vld [vmem:[#allocation8 + $0xae8] sm:$0xff]
    %v2637 = vld [vmem:[#allocation8 + $0xaf0] sm:$0xff]
    %v2638 = vld [vmem:[#allocation8 + $0xaf8] sm:$0xff]
    %v2639 = vld [vmem:[#allocation8 + $0xb00] sm:$0xff]
    %v2640 = vld [vmem:[#allocation8 + $0xb08] sm:$0xff]
    %v2641 = vld [vmem:[#allocation8 + $0xb10] sm:$0xff]
    %v2642 = vld [vmem:[#allocation8 + $0xb18] sm:$0xff]
    %v2643 = vld [vmem:[#allocation8 + $0xb20] sm:$0xff]
    %v2644 = vld [vmem:[#allocation8 + $0xb28] sm:$0xff]
    %v2645 = vld [vmem:[#allocation8 + $0xb30] sm:$0xff]
    %v2646 = vld [vmem:[#allocation8 + $0xb38] sm:$0xff]
    %v2647 = vld [vmem:[#allocation8 + $0xb40] sm:$0xff]
    %v2648 = vld [vmem:[#allocation8 + $0xb48] sm:$0xff]
    %v2649 = vld [vmem:[#allocation8 + $0xb50] sm:$0xff]
    %v2650 = vld [vmem:[#allocation8 + $0xb58] sm:$0xff]
    %v2651 = vld [vmem:[#allocation8 + $0xb60] sm:$0xff]
    %v2652 = vld [vmem:[#allocation8 + $0xb68] sm:$0xff]
    %v2653 = vld [vmem:[#allocation8 + $0xb70] sm:$0xff]
    %v2654 = vld [vmem:[#allocation8 + $0xb78] sm:$0xff]
    %v2655 = vld [vmem:[#allocation8 + $0xb80] sm:$0xff]
    %v2656 = vld [vmem:[#allocation8 + $0xb88] sm:$0xff]
    %v2657 = vld [vmem:[#allocation8 + $0xb90] sm:$0xff]
    %v2658 = vld [vmem:[#allocation8 + $0xb98] sm:$0xff]
    %v2659 = vld [vmem:[#allocation8 + $0xba0] sm:$0xff]
    %v2660 = vld [vmem:[#allocation8 + $0xba8] sm:$0xff]
    %v2661 = vld [vmem:[#allocation8 + $0xbb0] sm:$0xff]
    %v2662 = vld [vmem:[#allocation8 + $0xbb8] sm:$0xff]
    %v2663 = vld [vmem:[#allocation8 + $0xbc0] sm:$0xff]
    %v2664 = vld [vmem:[#allocation8 + $0xbc8] sm:$0xff]
    %v2665 = vld [vmem:[#allocation8 + $0xbd0] sm:$0xff]
    %v2666 = vld [vmem:[#allocation8 + $0xbd8] sm:$0xff]
    %v2667 = vld [vmem:[#allocation8 + $0xbe0] sm:$0xff]
    %v2668 = vld [vmem:[#allocation8 + $0xbe8] sm:$0xff]
    %v2669 = vld [vmem:[#allocation8 + $0xbf0] sm:$0xff]
    %v2670 = vld [vmem:[#allocation8 + $0xbf8] sm:$0xff]
    %v2671 = vld [vmem:[#allocation8 + $0xc00] sm:$0xff]
    %v2672 = vld [vmem:[#allocation8 + $0xc08] sm:$0xff]
    %v2673 = vld [vmem:[#allocation8 + $0xc10] sm:$0xff]
    %v2674 = vld [vmem:[#allocation8 + $0xc18] sm:$0xff]
    %v2675 = vld [vmem:[#allocation8 + $0xc20] sm:$0xff]
    %v2676 = vld [vmem:[#allocation8 + $0xc28] sm:$0xff]
    %v2677 = vld [vmem:[#allocation8 + $0xc30] sm:$0xff]
    %v2678 = vld [vmem:[#allocation8 + $0xc38] sm:$0xff]
    %v2679 = vld [vmem:[#allocation8 + $0xc40] sm:$0xff]
    %v2680 = vld [vmem:[#allocation8 + $0xc48] sm:$0xff]
    %v2681 = vld [vmem:[#allocation8 + $0xc50] sm:$0xff]
    %v2682 = vld [vmem:[#allocation8 + $0xc58] sm:$0xff]
    %v2683 = vld [vmem:[#allocation8 + $0xc60] sm:$0xff]
    %v2684 = vld [vmem:[#allocation8 + $0xc68] sm:$0xff]
    %v2685 = vld [vmem:[#allocation8 + $0xc70] sm:$0xff]
    %v2686 = vld [vmem:[#allocation8 + $0xc78] sm:$0xff]
    %v2687 = vld [vmem:[#allocation8 + $0xc80] sm:$0xff]
    %v2688 = vld [vmem:[#allocation8 + $0xc88] sm:$0xff]
    %v2689 = vld [vmem:[#allocation8 + $0xc90] sm:$0xff]
    %v2690 = vld [vmem:[#allocation8 + $0xc98] sm:$0xff]
    %v2691 = vld [vmem:[#allocation8 + $0xca0] sm:$0xff]
    %v2692 = vld [vmem:[#allocation8 + $0xca8] sm:$0xff]
    %v2693 = vld [vmem:[#allocation8 + $0xcb0] sm:$0xff]
    %v2694 = vld [vmem:[#allocation8 + $0xcb8] sm:$0xff]
    %v2695 = vld [vmem:[#allocation8 + $0xcc0] sm:$0xff]
    %v2696 = vld [vmem:[#allocation8 + $0xcc8] sm:$0xff]
    %v2697 = vld [vmem:[#allocation8 + $0xcd0] sm:$0xff]
    %v2698 = vld [vmem:[#allocation8 + $0xcd8] sm:$0xff]
    %v2699 = vld [vmem:[#allocation8 + $0xce0] sm:$0xff]
    %v2700 = vld [vmem:[#allocation8 + $0xce8] sm:$0xff]
    %v2701 = vld [vmem:[#allocation8 + $0xcf0] sm:$0xff]
    %v2702 = vld [vmem:[#allocation8 + $0xcf8] sm:$0xff]
    %v2703 = vld [vmem:[#allocation8 + $0xd00] sm:$0xff]
    %v2704 = vld [vmem:[#allocation8 + $0xd08] sm:$0xff]
    %v2705 = vld [vmem:[#allocation8 + $0xd10] sm:$0xff]
    %v2706 = vld [vmem:[#allocation8 + $0xd18] sm:$0xff]
    %v2707 = vld [vmem:[#allocation8 + $0xd20] sm:$0xff]
    %v2708 = vld [vmem:[#allocation8 + $0xd28] sm:$0xff]
    %v2709 = vld [vmem:[#allocation8 + $0xd30] sm:$0xff]
    %v2710 = vld [vmem:[#allocation8 + $0xd38] sm:$0xff]
    %v2711 = vld [vmem:[#allocation8 + $0xd40] sm:$0xff]
    %v2712 = vld [vmem:[#allocation8 + $0xd48] sm:$0xff]
    %v2713 = vld [vmem:[#allocation8 + $0xd50] sm:$0xff]
    %v2714 = vld [vmem:[#allocation8 + $0xd58] sm:$0xff]
    %v2715 = vld [vmem:[#allocation8 + $0xd60] sm:$0xff]
    %v2716 = vld [vmem:[#allocation8 + $0xd68] sm:$0xff]
    %v2717 = vld [vmem:[#allocation8 + $0xd70] sm:$0xff]
    %v2718 = vld [vmem:[#allocation8 + $0xd78] sm:$0xff]
    %v2719 = vld [vmem:[#allocation8 + $0xd80] sm:$0xff]
    %v2720 = vld [vmem:[#allocation8 + $0xd88] sm:$0xff]
    %v2721 = vld [vmem:[#allocation8 + $0xd90] sm:$0xff]
    %v2722 = vld [vmem:[#allocation8 + $0xd98] sm:$0xff]
    %v2723 = vld [vmem:[#allocation8 + $0xda0] sm:$0xff]
    %v2724 = vld [vmem:[#allocation8 + $0xda8] sm:$0xff]
    %v2725 = vld [vmem:[#allocation8 + $0xdb0] sm:$0xff]
    %v2726 = vld [vmem:[#allocation8 + $0xdb8] sm:$0xff]
    %v2727 = vld [vmem:[#allocation8 + $0xdc0] sm:$0xff]
    %v2728 = vld [vmem:[#allocation8 + $0xdc8] sm:$0xff]
    %v2729 = vld [vmem:[#allocation8 + $0xdd0] sm:$0xff]
    %v2730 = vld [vmem:[#allocation8 + $0xdd8] sm:$0xff]
    %v2731 = vld [vmem:[#allocation8 + $0xde0] sm:$0xff]
    %v2732 = vld [vmem:[#allocation8 + $0xde8] sm:$0xff]
    %v2733 = vld [vmem:[#allocation8 + $0xdf0] sm:$0xff]
    %v2734 = vld [vmem:[#allocation8 + $0xdf8] sm:$0xff]
    %v2735 = vld [vmem:[#allocation8 + $0xe00] sm:$0xff]
    %v2736 = vld [vmem:[#allocation8 + $0xe08] sm:$0xff]
    %v2737 = vld [vmem:[#allocation8 + $0xe10] sm:$0xff]
    %v2738 = vld [vmem:[#allocation8 + $0xe18] sm:$0xff]
    %v2739 = vld [vmem:[#allocation8 + $0xe20] sm:$0xff]
    %v2740 = vld [vmem:[#allocation8 + $0xe28] sm:$0xff]
    %v2741 = vld [vmem:[#allocation8 + $0xe30] sm:$0xff]
    %v2742 = vld [vmem:[#allocation8 + $0xe38] sm:$0xff]
    %v2743 = vld [vmem:[#allocation8 + $0xe40] sm:$0xff]
    %v2744 = vld [vmem:[#allocation8 + $0xe48] sm:$0xff]
    %v2745 = vld [vmem:[#allocation8 + $0xe50] sm:$0xff]
    %v2746 = vld [vmem:[#allocation8 + $0xe58] sm:$0xff]
    %v2747 = vld [vmem:[#allocation8 + $0xe60] sm:$0xff]
    %v2748 = vld [vmem:[#allocation8 + $0xe68] sm:$0xff]
    %v2749 = vld [vmem:[#allocation8 + $0xe70] sm:$0xff]
    %v2750 = vld [vmem:[#allocation8 + $0xe78] sm:$0xff]
    %v2751 = vld [vmem:[#allocation8 + $0xe80] sm:$0xff]
    %v2752 = vld [vmem:[#allocation8 + $0xe88] sm:$0xff]
    %v2753 = vld [vmem:[#allocation8 + $0xe90] sm:$0xff]
    %v2754 = vld [vmem:[#allocation8 + $0xe98] sm:$0xff]
    %v2755 = vld [vmem:[#allocation8 + $0xea0] sm:$0xff]
    %v2756 = vld [vmem:[#allocation8 + $0xea8] sm:$0xff]
    %v2757 = vld [vmem:[#allocation8 + $0xeb0] sm:$0xff]
    %v2758 = vld [vmem:[#allocation8 + $0xeb8] sm:$0xff]
    %v2759 = vld [vmem:[#allocation8 + $0xec0] sm:$0xff]
    %v2760 = vld [vmem:[#allocation8 + $0xec8] sm:$0xff]
    %v2761 = vld [vmem:[#allocation8 + $0xed0] sm:$0xff]
    %v2762 = vld [vmem:[#allocation8 + $0xed8] sm:$0xff]
    %v2763 = vld [vmem:[#allocation8 + $0xee0] sm:$0xff]
    %v2764 = vld [vmem:[#allocation8 + $0xee8] sm:$0xff]
    %v2765 = vld [vmem:[#allocation8 + $0xef0] sm:$0xff]
    %v2766 = vld [vmem:[#allocation8 + $0xef8] sm:$0xff]
    %v2767 = vld [vmem:[#allocation8 + $0xf00] sm:$0xff]
    %v2768 = vld [vmem:[#allocation8 + $0xf08] sm:$0xff]
    %v2769 = vld [vmem:[#allocation8 + $0xf10] sm:$0xff]
    %v2770 = vld [vmem:[#allocation8 + $0xf18] sm:$0xff]
    %v2771 = vld [vmem:[#allocation8 + $0xf20] sm:$0xff]
    %v2772 = vld [vmem:[#allocation8 + $0xf28] sm:$0xff]
    %v2773 = vld [vmem:[#allocation8 + $0xf30] sm:$0xff]
    %v2774 = vld [vmem:[#allocation8 + $0xf38] sm:$0xff]
    %v2775 = vld [vmem:[#allocation8 + $0xf40] sm:$0xff]
    %v2776 = vld [vmem:[#allocation8 + $0xf48] sm:$0xff]
    %v2777 = vld [vmem:[#allocation8 + $0xf50] sm:$0xff]
    %v2778 = vld [vmem:[#allocation8 + $0xf58] sm:$0xff]
    %v2779 = vld [vmem:[#allocation8 + $0xf60] sm:$0xff]
    %v2780 = vld [vmem:[#allocation8 + $0xf68] sm:$0xff]
    %v2781 = vld [vmem:[#allocation8 + $0xf70] sm:$0xff]
    %v2782 = vld [vmem:[#allocation8 + $0xf78] sm:$0xff]
    %v2783 = vld [vmem:[#allocation8 + $0xf80] sm:$0xff]
    %v2784 = vld [vmem:[#allocation8 + $0xf88] sm:$0xff]
    %v2785 = vld [vmem:[#allocation8 + $0xf90] sm:$0xff]
    %v2786 = vld [vmem:[#allocation8 + $0xf98] sm:$0xff]
    %v2787 = vld [vmem:[#allocation8 + $0xfa0] sm:$0xff]
    %v2788 = vld [vmem:[#allocation8 + $0xfa8] sm:$0xff]
    %v2789 = vld [vmem:[#allocation8 + $0xfb0] sm:$0xff]
    %v2790 = vld [vmem:[#allocation8 + $0xfb8] sm:$0xff]
    %v2791 = vld [vmem:[#allocation8 + $0xfc0] sm:$0xff]
    %v2792 = vld [vmem:[#allocation8 + $0xfc8] sm:$0xff]
    %v2793 = vld [vmem:[#allocation8 + $0xfd0] sm:$0xff]
    %v2794 = vld [vmem:[#allocation8 + $0xfd8] sm:$0xff]
    %v2795 = vld [vmem:[#allocation8 + $0xfe0] sm:$0xff]
    %v2796 = vld [vmem:[#allocation8 + $0xfe8] sm:$0xff]
    %v2797 = vld [vmem:[#allocation8 + $0xff0] sm:$0xff]
    %v2798 = vld [vmem:[#allocation8 + $0xff8] sm:$0xff]
    %v2799 = vld [vmem:[#allocation10] sm:$0xf]
    %v2801 = vlaneseq
    %v2802 = vshrl.u32 %v2801, 7
    %v2803 = vsub.s32 0, %v2802
    %v2804 = vrot.slane %v2799, %v2803
    %v2805 = vlaneseq
    %v2806 = vshrl.u32 %v2805, 7
    %v2807 = vsub.s32 1, %v2806
    %v2808 = vrot.slane %v2799, %v2807
    %v2809 = vlaneseq
    %v2810 = vshrl.u32 %v2809, 7
    %v2811 = vsub.s32 2, %v2810
    %v2812 = vrot.slane %v2799, %v2811
    %v2813 = vlaneseq
    %v2814 = vshrl.u32 %v2813, 7
    %v2815 = vsub.s32 3, %v2814
    %v2816 = vrot.slane %v2799, %v2815
    %v3333 = vunpack.c.l.b16 %v2287
    %v3334 = vunpack.c.h.b16 %v2287
    %v3335 = vunpack.c.l.b16 %v2288
    %v3336 = vunpack.c.h.b16 %v2288
    %v3337 = vunpack.c.l.b16 %v2289
    %v3338 = vunpack.c.h.b16 %v2289
    %v3339 = vunpack.c.l.b16 %v2290
    %v3340 = vunpack.c.h.b16 %v2290
    %v3341 = vunpack.c.l.b16 %v2291
    %v3342 = vunpack.c.h.b16 %v2291
    %v3343 = vunpack.c.l.b16 %v2292
    %v3344 = vunpack.c.h.b16 %v2292
    %v3345 = vunpack.c.l.b16 %v2293
    %v3346 = vunpack.c.h.b16 %v2293
    %v3347 = vunpack.c.l.b16 %v2294
    %v3348 = vunpack.c.h.b16 %v2294
    %v3349 = vunpack.c.l.b16 %v2295
    %v3350 = vunpack.c.h.b16 %v2295
    %v3351 = vunpack.c.l.b16 %v2296
    %v3352 = vunpack.c.h.b16 %v2296
    %v3353 = vunpack.c.l.b16 %v2297
    %v3354 = vunpack.c.h.b16 %v2297
    %v3355 = vunpack.c.l.b16 %v2298
    %v3356 = vunpack.c.h.b16 %v2298
    %v3357 = vunpack.c.l.b16 %v2299
    %v3358 = vunpack.c.h.b16 %v2299
    %v3359 = vunpack.c.l.b16 %v2300
    %v3360 = vunpack.c.h.b16 %v2300
    %v3361 = vunpack.c.l.b16 %v2301
    %v3362 = vunpack.c.h.b16 %v2301
    %v3363 = vunpack.c.l.b16 %v2302
    %v3364 = vunpack.c.h.b16 %v2302
    %v3365 = vunpack.c.l.b16 %v2303
    %v3366 = vunpack.c.h.b16 %v2303
    %v3367 = vunpack.c.l.b16 %v2304
    %v3368 = vunpack.c.h.b16 %v2304
    %v3369 = vunpack.c.l.b16 %v2305
    %v3370 = vunpack.c.h.b16 %v2305
    %v3371 = vunpack.c.l.b16 %v2306
    %v3372 = vunpack.c.h.b16 %v2306
    %v3373 = vunpack.c.l.b16 %v2307
    %v3374 = vunpack.c.h.b16 %v2307
    %v3375 = vunpack.c.l.b16 %v2308
    %v3376 = vunpack.c.h.b16 %v2308
    %v3377 = vunpack.c.l.b16 %v2309
    %v3378 = vunpack.c.h.b16 %v2309
    %v3379 = vunpack.c.l.b16 %v2310
    %v3380 = vunpack.c.h.b16 %v2310
    %v3381 = vunpack.c.l.b16 %v2311
    %v3382 = vunpack.c.h.b16 %v2311
    %v3383 = vunpack.c.l.b16 %v2312
    %v3384 = vunpack.c.h.b16 %v2312
    %v3385 = vunpack.c.l.b16 %v2313
    %v3386 = vunpack.c.h.b16 %v2313
    %v3387 = vunpack.c.l.b16 %v2314
    %v3388 = vunpack.c.h.b16 %v2314
    %v3389 = vunpack.c.l.b16 %v2315
    %v3390 = vunpack.c.h.b16 %v2315
    %v3391 = vunpack.c.l.b16 %v2316
    %v3392 = vunpack.c.h.b16 %v2316
    %v3393 = vunpack.c.l.b16 %v2317
    %v3394 = vunpack.c.h.b16 %v2317
    %v3395 = vunpack.c.l.b16 %v2318
    %v3396 = vunpack.c.h.b16 %v2318
    %v3397 = vunpack.c.l.b16 %v2319
    %v3398 = vunpack.c.h.b16 %v2319
    %v3399 = vunpack.c.l.b16 %v2320
    %v3400 = vunpack.c.h.b16 %v2320
    %v3401 = vunpack.c.l.b16 %v2321
    %v3402 = vunpack.c.h.b16 %v2321
    %v3403 = vunpack.c.l.b16 %v2322
    %v3404 = vunpack.c.h.b16 %v2322
    %v3405 = vunpack.c.l.b16 %v2323
    %v3406 = vunpack.c.h.b16 %v2323
    %v3407 = vunpack.c.l.b16 %v2324
    %v3408 = vunpack.c.h.b16 %v2324
    %v3409 = vunpack.c.l.b16 %v2325
    %v3410 = vunpack.c.h.b16 %v2325
    %v3411 = vunpack.c.l.b16 %v2326
    %v3412 = vunpack.c.h.b16 %v2326
    %v3413 = vunpack.c.l.b16 %v2327
    %v3414 = vunpack.c.h.b16 %v2327
    %v3415 = vunpack.c.l.b16 %v2328
    %v3416 = vunpack.c.h.b16 %v2328
    %v3417 = vunpack.c.l.b16 %v2329
    %v3418 = vunpack.c.h.b16 %v2329
    %v3419 = vunpack.c.l.b16 %v2330
    %v3420 = vunpack.c.h.b16 %v2330
    %v3421 = vunpack.c.l.b16 %v2331
    %v3422 = vunpack.c.h.b16 %v2331
    %v3423 = vunpack.c.l.b16 %v2332
    %v3424 = vunpack.c.h.b16 %v2332
    %v3425 = vunpack.c.l.b16 %v2333
    %v3426 = vunpack.c.h.b16 %v2333
    %v3427 = vunpack.c.l.b16 %v2334
    %v3428 = vunpack.c.h.b16 %v2334
    %v3429 = vunpack.c.l.b16 %v2335
    %v3430 = vunpack.c.h.b16 %v2335
    %v3431 = vunpack.c.l.b16 %v2336
    %v3432 = vunpack.c.h.b16 %v2336
    %v3433 = vunpack.c.l.b16 %v2337
    %v3434 = vunpack.c.h.b16 %v2337
    %v3435 = vunpack.c.l.b16 %v2338
    %v3436 = vunpack.c.h.b16 %v2338
    %v3437 = vunpack.c.l.b16 %v2339
    %v3438 = vunpack.c.h.b16 %v2339
    %v3439 = vunpack.c.l.b16 %v2340
    %v3440 = vunpack.c.h.b16 %v2340
    %v3441 = vunpack.c.l.b16 %v2341
    %v3442 = vunpack.c.h.b16 %v2341
    %v3443 = vunpack.c.l.b16 %v2342
    %v3444 = vunpack.c.h.b16 %v2342
    %v3445 = vunpack.c.l.b16 %v2343
    %v3446 = vunpack.c.h.b16 %v2343
    %v3447 = vunpack.c.l.b16 %v2344
    %v3448 = vunpack.c.h.b16 %v2344
    %v3449 = vunpack.c.l.b16 %v2345
    %v3450 = vunpack.c.h.b16 %v2345
    %v3451 = vunpack.c.l.b16 %v2346
    %v3452 = vunpack.c.h.b16 %v2346
    %v3453 = vunpack.c.l.b16 %v2347
    %v3454 = vunpack.c.h.b16 %v2347
    %v3455 = vunpack.c.l.b16 %v2348
    %v3456 = vunpack.c.h.b16 %v2348
    %v3457 = vunpack.c.l.b16 %v2349
    %v3458 = vunpack.c.h.b16 %v2349
    %v3459 = vunpack.c.l.b16 %v2350
    %v3460 = vunpack.c.h.b16 %v2350
    %v3461 = vunpack.c.l.b16 %v2351
    %v3462 = vunpack.c.h.b16 %v2351
    %v3463 = vunpack.c.l.b16 %v2352
    %v3464 = vunpack.c.h.b16 %v2352
    %v3465 = vunpack.c.l.b16 %v2353
    %v3466 = vunpack.c.h.b16 %v2353
    %v3467 = vunpack.c.l.b16 %v2354
    %v3468 = vunpack.c.h.b16 %v2354
    %v3469 = vunpack.c.l.b16 %v2355
    %v3470 = vunpack.c.h.b16 %v2355
    %v3471 = vunpack.c.l.b16 %v2356
    %v3472 = vunpack.c.h.b16 %v2356
    %v3473 = vunpack.c.l.b16 %v2357
    %v3474 = vunpack.c.h.b16 %v2357
    %v3475 = vunpack.c.l.b16 %v2358
    %v3476 = vunpack.c.h.b16 %v2358
    %v3477 = vunpack.c.l.b16 %v2359
    %v3478 = vunpack.c.h.b16 %v2359
    %v3479 = vunpack.c.l.b16 %v2360
    %v3480 = vunpack.c.h.b16 %v2360
    %v3481 = vunpack.c.l.b16 %v2361
    %v3482 = vunpack.c.h.b16 %v2361
    %v3483 = vunpack.c.l.b16 %v2362
    %v3484 = vunpack.c.h.b16 %v2362
    %v3485 = vunpack.c.l.b16 %v2363
    %v3486 = vunpack.c.h.b16 %v2363
    %v3487 = vunpack.c.l.b16 %v2364
    %v3488 = vunpack.c.h.b16 %v2364
    %v3489 = vunpack.c.l.b16 %v2365
    %v3490 = vunpack.c.h.b16 %v2365
    %v3491 = vunpack.c.l.b16 %v2366
    %v3492 = vunpack.c.h.b16 %v2366
    %v3493 = vunpack.c.l.b16 %v2367
    %v3494 = vunpack.c.h.b16 %v2367
    %v3495 = vunpack.c.l.b16 %v2368
    %v3496 = vunpack.c.h.b16 %v2368
    %v3497 = vunpack.c.l.b16 %v2369
    %v3498 = vunpack.c.h.b16 %v2369
    %v3499 = vunpack.c.l.b16 %v2370
    %v3500 = vunpack.c.h.b16 %v2370
    %v3501 = vunpack.c.l.b16 %v2371
    %v3502 = vunpack.c.h.b16 %v2371
    %v3503 = vunpack.c.l.b16 %v2372
    %v3504 = vunpack.c.h.b16 %v2372
    %v3505 = vunpack.c.l.b16 %v2373
    %v3506 = vunpack.c.h.b16 %v2373
    %v3507 = vunpack.c.l.b16 %v2374
    %v3508 = vunpack.c.h.b16 %v2374
    %v3509 = vunpack.c.l.b16 %v2375
    %v3510 = vunpack.c.h.b16 %v2375
    %v3511 = vunpack.c.l.b16 %v2376
    %v3512 = vunpack.c.h.b16 %v2376
    %v3513 = vunpack.c.l.b16 %v2377
    %v3514 = vunpack.c.h.b16 %v2377
    %v3515 = vunpack.c.l.b16 %v2378
    %v3516 = vunpack.c.h.b16 %v2378
    %v3517 = vunpack.c.l.b16 %v2379
    %v3518 = vunpack.c.h.b16 %v2379
    %v3519 = vunpack.c.l.b16 %v2380
    %v3520 = vunpack.c.h.b16 %v2380
    %v3521 = vunpack.c.l.b16 %v2381
    %v3522 = vunpack.c.h.b16 %v2381
    %v3523 = vunpack.c.l.b16 %v2382
    %v3524 = vunpack.c.h.b16 %v2382
    %v3525 = vunpack.c.l.b16 %v2383
    %v3526 = vunpack.c.h.b16 %v2383
    %v3527 = vunpack.c.l.b16 %v2384
    %v3528 = vunpack.c.h.b16 %v2384
    %v3529 = vunpack.c.l.b16 %v2385
    %v3530 = vunpack.c.h.b16 %v2385
    %v3531 = vunpack.c.l.b16 %v2386
    %v3532 = vunpack.c.h.b16 %v2386
    %v3533 = vunpack.c.l.b16 %v2387
    %v3534 = vunpack.c.h.b16 %v2387
    %v3535 = vunpack.c.l.b16 %v2388
    %v3536 = vunpack.c.h.b16 %v2388
    %v3537 = vunpack.c.l.b16 %v2389
    %v3538 = vunpack.c.h.b16 %v2389
    %v3539 = vunpack.c.l.b16 %v2390
    %v3540 = vunpack.c.h.b16 %v2390
    %v3541 = vunpack.c.l.b16 %v2391
    %v3542 = vunpack.c.h.b16 %v2391
    %v3543 = vunpack.c.l.b16 %v2392
    %v3544 = vunpack.c.h.b16 %v2392
    %v3545 = vunpack.c.l.b16 %v2393
    %v3546 = vunpack.c.h.b16 %v2393
    %v3547 = vunpack.c.l.b16 %v2394
    %v3548 = vunpack.c.h.b16 %v2394
    %v3549 = vunpack.c.l.b16 %v2395
    %v3550 = vunpack.c.h.b16 %v2395
    %v3551 = vunpack.c.l.b16 %v2396
    %v3552 = vunpack.c.h.b16 %v2396
    %v3553 = vunpack.c.l.b16 %v2397
    %v3554 = vunpack.c.h.b16 %v2397
    %v3555 = vunpack.c.l.b16 %v2398
    %v3556 = vunpack.c.h.b16 %v2398
    %v3557 = vunpack.c.l.b16 %v2399
    %v3558 = vunpack.c.h.b16 %v2399
    %v3559 = vunpack.c.l.b16 %v2400
    %v3560 = vunpack.c.h.b16 %v2400
    %v3561 = vunpack.c.l.b16 %v2401
    %v3562 = vunpack.c.h.b16 %v2401
    %v3563 = vunpack.c.l.b16 %v2402
    %v3564 = vunpack.c.h.b16 %v2402
    %v3565 = vunpack.c.l.b16 %v2403
    %v3566 = vunpack.c.h.b16 %v2403
    %v3567 = vunpack.c.l.b16 %v2404
    %v3568 = vunpack.c.h.b16 %v2404
    %v3569 = vunpack.c.l.b16 %v2405
    %v3570 = vunpack.c.h.b16 %v2405
    %v3571 = vunpack.c.l.b16 %v2406
    %v3572 = vunpack.c.h.b16 %v2406
    %v3573 = vunpack.c.l.b16 %v2407
    %v3574 = vunpack.c.h.b16 %v2407
    %v3575 = vunpack.c.l.b16 %v2408
    %v3576 = vunpack.c.h.b16 %v2408
    %v3577 = vunpack.c.l.b16 %v2409
    %v3578 = vunpack.c.h.b16 %v2409
    %v3579 = vunpack.c.l.b16 %v2410
    %v3580 = vunpack.c.h.b16 %v2410
    %v3581 = vunpack.c.l.b16 %v2411
    %v3582 = vunpack.c.h.b16 %v2411
    %v3583 = vunpack.c.l.b16 %v2412
    %v3584 = vunpack.c.h.b16 %v2412
    %v3585 = vunpack.c.l.b16 %v2413
    %v3586 = vunpack.c.h.b16 %v2413
    %v3587 = vunpack.c.l.b16 %v2414
    %v3588 = vunpack.c.h.b16 %v2414
    %v3589 = vunpack.c.l.b16 %v2415
    %v3590 = vunpack.c.h.b16 %v2415
    %v3591 = vunpack.c.l.b16 %v2416
    %v3592 = vunpack.c.h.b16 %v2416
    %v3593 = vunpack.c.l.b16 %v2417
    %v3594 = vunpack.c.h.b16 %v2417
    %v3595 = vunpack.c.l.b16 %v2418
    %v3596 = vunpack.c.h.b16 %v2418
    %v3597 = vunpack.c.l.b16 %v2419
    %v3598 = vunpack.c.h.b16 %v2419
    %v3599 = vunpack.c.l.b16 %v2420
    %v3600 = vunpack.c.h.b16 %v2420
    %v3601 = vunpack.c.l.b16 %v2421
    %v3602 = vunpack.c.h.b16 %v2421
    %v3603 = vunpack.c.l.b16 %v2422
    %v3604 = vunpack.c.h.b16 %v2422
    %v3605 = vunpack.c.l.b16 %v2423
    %v3606 = vunpack.c.h.b16 %v2423
    %v3607 = vunpack.c.l.b16 %v2424
    %v3608 = vunpack.c.h.b16 %v2424
    %v3609 = vunpack.c.l.b16 %v2425
    %v3610 = vunpack.c.h.b16 %v2425
    %v3611 = vunpack.c.l.b16 %v2426
    %v3612 = vunpack.c.h.b16 %v2426
    %v3613 = vunpack.c.l.b16 %v2427
    %v3614 = vunpack.c.h.b16 %v2427
    %v3615 = vunpack.c.l.b16 %v2428
    %v3616 = vunpack.c.h.b16 %v2428
    %v3617 = vunpack.c.l.b16 %v2429
    %v3618 = vunpack.c.h.b16 %v2429
    %v3619 = vunpack.c.l.b16 %v2430
    %v3620 = vunpack.c.h.b16 %v2430
    %v3621 = vunpack.c.l.b16 %v2431
    %v3622 = vunpack.c.h.b16 %v2431
    %v3623 = vunpack.c.l.b16 %v2432
    %v3624 = vunpack.c.h.b16 %v2432
    %v3625 = vunpack.c.l.b16 %v2433
    %v3626 = vunpack.c.h.b16 %v2433
    %v3627 = vunpack.c.l.b16 %v2434
    %v3628 = vunpack.c.h.b16 %v2434
    %v3629 = vunpack.c.l.b16 %v2435
    %v3630 = vunpack.c.h.b16 %v2435
    %v3631 = vunpack.c.l.b16 %v2436
    %v3632 = vunpack.c.h.b16 %v2436
    %v3633 = vunpack.c.l.b16 %v2437
    %v3634 = vunpack.c.h.b16 %v2437
    %v3635 = vunpack.c.l.b16 %v2438
    %v3636 = vunpack.c.h.b16 %v2438
    %v3637 = vunpack.c.l.b16 %v2439
    %v3638 = vunpack.c.h.b16 %v2439
    %v3639 = vunpack.c.l.b16 %v2440
    %v3640 = vunpack.c.h.b16 %v2440
    %v3641 = vunpack.c.l.b16 %v2441
    %v3642 = vunpack.c.h.b16 %v2441
    %v3643 = vunpack.c.l.b16 %v2442
    %v3644 = vunpack.c.h.b16 %v2442
    %v3645 = vunpack.c.l.b16 %v2443
    %v3646 = vunpack.c.h.b16 %v2443
    %v3647 = vunpack.c.l.b16 %v2444
    %v3648 = vunpack.c.h.b16 %v2444
    %v3649 = vunpack.c.l.b16 %v2445
    %v3650 = vunpack.c.h.b16 %v2445
    %v3651 = vunpack.c.l.b16 %v2446
    %v3652 = vunpack.c.h.b16 %v2446
    %v3653 = vunpack.c.l.b16 %v2447
    %v3654 = vunpack.c.h.b16 %v2447
    %v3655 = vunpack.c.l.b16 %v2448
    %v3656 = vunpack.c.h.b16 %v2448
    %v3657 = vunpack.c.l.b16 %v2449
    %v3658 = vunpack.c.h.b16 %v2449
    %v3659 = vunpack.c.l.b16 %v2450
    %v3660 = vunpack.c.h.b16 %v2450
    %v3661 = vunpack.c.l.b16 %v2451
    %v3662 = vunpack.c.h.b16 %v2451
    %v3663 = vunpack.c.l.b16 %v2452
    %v3664 = vunpack.c.h.b16 %v2452
    %v3665 = vunpack.c.l.b16 %v2453
    %v3666 = vunpack.c.h.b16 %v2453
    %v3667 = vunpack.c.l.b16 %v2454
    %v3668 = vunpack.c.h.b16 %v2454
    %v3669 = vunpack.c.l.b16 %v2455
    %v3670 = vunpack.c.h.b16 %v2455
    %v3671 = vunpack.c.l.b16 %v2456
    %v3672 = vunpack.c.h.b16 %v2456
    %v3673 = vunpack.c.l.b16 %v2457
    %v3674 = vunpack.c.h.b16 %v2457
    %v3675 = vunpack.c.l.b16 %v2458
    %v3676 = vunpack.c.h.b16 %v2458
    %v3677 = vunpack.c.l.b16 %v2459
    %v3678 = vunpack.c.h.b16 %v2459
    %v3679 = vunpack.c.l.b16 %v2460
    %v3680 = vunpack.c.h.b16 %v2460
    %v3681 = vunpack.c.l.b16 %v2461
    %v3682 = vunpack.c.h.b16 %v2461
    %v3683 = vunpack.c.l.b16 %v2462
    %v3684 = vunpack.c.h.b16 %v2462
    %v3685 = vunpack.c.l.b16 %v2463
    %v3686 = vunpack.c.h.b16 %v2463
    %v3687 = vunpack.c.l.b16 %v2464
    %v3688 = vunpack.c.h.b16 %v2464
    %v3689 = vunpack.c.l.b16 %v2465
    %v3690 = vunpack.c.h.b16 %v2465
    %v3691 = vunpack.c.l.b16 %v2466
    %v3692 = vunpack.c.h.b16 %v2466
    %v3693 = vunpack.c.l.b16 %v2467
    %v3694 = vunpack.c.h.b16 %v2467
    %v3695 = vunpack.c.l.b16 %v2468
    %v3696 = vunpack.c.h.b16 %v2468
    %v3697 = vunpack.c.l.b16 %v2469
    %v3698 = vunpack.c.h.b16 %v2469
    %v3699 = vunpack.c.l.b16 %v2470
    %v3700 = vunpack.c.h.b16 %v2470
    %v3701 = vunpack.c.l.b16 %v2471
    %v3702 = vunpack.c.h.b16 %v2471
    %v3703 = vunpack.c.l.b16 %v2472
    %v3704 = vunpack.c.h.b16 %v2472
    %v3705 = vunpack.c.l.b16 %v2473
    %v3706 = vunpack.c.h.b16 %v2473
    %v3707 = vunpack.c.l.b16 %v2474
    %v3708 = vunpack.c.h.b16 %v2474
    %v3709 = vunpack.c.l.b16 %v2475
    %v3710 = vunpack.c.h.b16 %v2475
    %v3711 = vunpack.c.l.b16 %v2476
    %v3712 = vunpack.c.h.b16 %v2476
    %v3713 = vunpack.c.l.b16 %v2477
    %v3714 = vunpack.c.h.b16 %v2477
    %v3715 = vunpack.c.l.b16 %v2478
    %v3716 = vunpack.c.h.b16 %v2478
    %v3717 = vunpack.c.l.b16 %v2479
    %v3718 = vunpack.c.h.b16 %v2479
    %v3719 = vunpack.c.l.b16 %v2480
    %v3720 = vunpack.c.h.b16 %v2480
    %v3721 = vunpack.c.l.b16 %v2481
    %v3722 = vunpack.c.h.b16 %v2481
    %v3723 = vunpack.c.l.b16 %v2482
    %v3724 = vunpack.c.h.b16 %v2482
    %v3725 = vunpack.c.l.b16 %v2483
    %v3726 = vunpack.c.h.b16 %v2483
    %v3727 = vunpack.c.l.b16 %v2484
    %v3728 = vunpack.c.h.b16 %v2484
    %v3729 = vunpack.c.l.b16 %v2485
    %v3730 = vunpack.c.h.b16 %v2485
    %v3731 = vunpack.c.l.b16 %v2486
    %v3732 = vunpack.c.h.b16 %v2486
    %v3733 = vunpack.c.l.b16 %v2487
    %v3734 = vunpack.c.h.b16 %v2487
    %v3735 = vunpack.c.l.b16 %v2488
    %v3736 = vunpack.c.h.b16 %v2488
    %v3737 = vunpack.c.l.b16 %v2489
    %v3738 = vunpack.c.h.b16 %v2489
    %v3739 = vunpack.c.l.b16 %v2490
    %v3740 = vunpack.c.h.b16 %v2490
    %v3741 = vunpack.c.l.b16 %v2491
    %v3742 = vunpack.c.h.b16 %v2491
    %v3743 = vunpack.c.l.b16 %v2492
    %v3744 = vunpack.c.h.b16 %v2492
    %v3745 = vunpack.c.l.b16 %v2493
    %v3746 = vunpack.c.h.b16 %v2493
    %v3747 = vunpack.c.l.b16 %v2494
    %v3748 = vunpack.c.h.b16 %v2494
    %v3749 = vunpack.c.l.b16 %v2495
    %v3750 = vunpack.c.h.b16 %v2495
    %v3751 = vunpack.c.l.b16 %v2496
    %v3752 = vunpack.c.h.b16 %v2496
    %v3753 = vunpack.c.l.b16 %v2497
    %v3754 = vunpack.c.h.b16 %v2497
    %v3755 = vunpack.c.l.b16 %v2498
    %v3756 = vunpack.c.h.b16 %v2498
    %v3757 = vunpack.c.l.b16 %v2499
    %v3758 = vunpack.c.h.b16 %v2499
    %v3759 = vunpack.c.l.b16 %v2500
    %v3760 = vunpack.c.h.b16 %v2500
    %v3761 = vunpack.c.l.b16 %v2501
    %v3762 = vunpack.c.h.b16 %v2501
    %v3763 = vunpack.c.l.b16 %v2502
    %v3764 = vunpack.c.h.b16 %v2502
    %v3765 = vunpack.c.l.b16 %v2503
    %v3766 = vunpack.c.h.b16 %v2503
    %v3767 = vunpack.c.l.b16 %v2504
    %v3768 = vunpack.c.h.b16 %v2504
    %v3769 = vunpack.c.l.b16 %v2505
    %v3770 = vunpack.c.h.b16 %v2505
    %v3771 = vunpack.c.l.b16 %v2506
    %v3772 = vunpack.c.h.b16 %v2506
    %v3773 = vunpack.c.l.b16 %v2507
    %v3774 = vunpack.c.h.b16 %v2507
    %v3775 = vunpack.c.l.b16 %v2508
    %v3776 = vunpack.c.h.b16 %v2508
    %v3777 = vunpack.c.l.b16 %v2509
    %v3778 = vunpack.c.h.b16 %v2509
    %v3779 = vunpack.c.l.b16 %v2510
    %v3780 = vunpack.c.h.b16 %v2510
    %v3781 = vunpack.c.l.b16 %v2511
    %v3782 = vunpack.c.h.b16 %v2511
    %v3783 = vunpack.c.l.b16 %v2512
    %v3784 = vunpack.c.h.b16 %v2512
    %v3785 = vunpack.c.l.b16 %v2513
    %v3786 = vunpack.c.h.b16 %v2513
    %v3787 = vunpack.c.l.b16 %v2514
    %v3788 = vunpack.c.h.b16 %v2514
    %v3789 = vunpack.c.l.b16 %v2515
    %v3790 = vunpack.c.h.b16 %v2515
    %v3791 = vunpack.c.l.b16 %v2516
    %v3792 = vunpack.c.h.b16 %v2516
    %v3793 = vunpack.c.l.b16 %v2517
    %v3794 = vunpack.c.h.b16 %v2517
    %v3795 = vunpack.c.l.b16 %v2518
    %v3796 = vunpack.c.h.b16 %v2518
    %v3797 = vunpack.c.l.b16 %v2519
    %v3798 = vunpack.c.h.b16 %v2519
    %v3799 = vunpack.c.l.b16 %v2520
    %v3800 = vunpack.c.h.b16 %v2520
    %v3801 = vunpack.c.l.b16 %v2521
    %v3802 = vunpack.c.h.b16 %v2521
    %v3803 = vunpack.c.l.b16 %v2522
    %v3804 = vunpack.c.h.b16 %v2522
    %v3805 = vunpack.c.l.b16 %v2523
    %v3806 = vunpack.c.h.b16 %v2523
    %v3807 = vunpack.c.l.b16 %v2524
    %v3808 = vunpack.c.h.b16 %v2524
    %v3809 = vunpack.c.l.b16 %v2525
    %v3810 = vunpack.c.h.b16 %v2525
    %v3811 = vunpack.c.l.b16 %v2526
    %v3812 = vunpack.c.h.b16 %v2526
    %v3813 = vunpack.c.l.b16 %v2527
    %v3814 = vunpack.c.h.b16 %v2527
    %v3815 = vunpack.c.l.b16 %v2528
    %v3816 = vunpack.c.h.b16 %v2528
    %v3817 = vunpack.c.l.b16 %v2529
    %v3818 = vunpack.c.h.b16 %v2529
    %v3819 = vunpack.c.l.b16 %v2530
    %v3820 = vunpack.c.h.b16 %v2530
    %v3821 = vunpack.c.l.b16 %v2531
    %v3822 = vunpack.c.h.b16 %v2531
    %v3823 = vunpack.c.l.b16 %v2532
    %v3824 = vunpack.c.h.b16 %v2532
    %v3825 = vunpack.c.l.b16 %v2533
    %v3826 = vunpack.c.h.b16 %v2533
    %v3827 = vunpack.c.l.b16 %v2534
    %v3828 = vunpack.c.h.b16 %v2534
    %v3829 = vunpack.c.l.b16 %v2535
    %v3830 = vunpack.c.h.b16 %v2535
    %v3831 = vunpack.c.l.b16 %v2536
    %v3832 = vunpack.c.h.b16 %v2536
    %v3833 = vunpack.c.l.b16 %v2537
    %v3834 = vunpack.c.h.b16 %v2537
    %v3835 = vunpack.c.l.b16 %v2538
    %v3836 = vunpack.c.h.b16 %v2538
    %v3837 = vunpack.c.l.b16 %v2539
    %v3838 = vunpack.c.h.b16 %v2539
    %v3839 = vunpack.c.l.b16 %v2540
    %v3840 = vunpack.c.h.b16 %v2540
    %v3841 = vunpack.c.l.b16 %v2541
    %v3842 = vunpack.c.h.b16 %v2541
    %v3843 = vunpack.c.l.b16 %v2542
    %v3844 = vunpack.c.h.b16 %v2542
    %v3845 = vunpack.c.l.b16 %v2543
    %v3846 = vunpack.c.h.b16 %v2543
    %v3847 = vunpack.c.l.b16 %v2544
    %v3848 = vunpack.c.h.b16 %v2544
    %v3849 = vunpack.c.l.b16 %v2545
    %v3850 = vunpack.c.h.b16 %v2545
    %v3851 = vunpack.c.l.b16 %v2546
    %v3852 = vunpack.c.h.b16 %v2546
    %v3853 = vunpack.c.l.b16 %v2547
    %v3854 = vunpack.c.h.b16 %v2547
    %v3855 = vunpack.c.l.b16 %v2548
    %v3856 = vunpack.c.h.b16 %v2548
    %v3857 = vunpack.c.l.b16 %v2549
    %v3858 = vunpack.c.h.b16 %v2549
    %v3859 = vunpack.c.l.b16 %v2550
    %v3860 = vunpack.c.h.b16 %v2550
    %v3861 = vunpack.c.l.b16 %v2551
    %v3862 = vunpack.c.h.b16 %v2551
    %v3863 = vunpack.c.l.b16 %v2552
    %v3864 = vunpack.c.h.b16 %v2552
    %v3865 = vunpack.c.l.b16 %v2553
    %v3866 = vunpack.c.h.b16 %v2553
    %v3867 = vunpack.c.l.b16 %v2554
    %v3868 = vunpack.c.h.b16 %v2554
    %v3869 = vunpack.c.l.b16 %v2555
    %v3870 = vunpack.c.h.b16 %v2555
    %v3871 = vunpack.c.l.b16 %v2556
    %v3872 = vunpack.c.h.b16 %v2556
    %v3873 = vunpack.c.l.b16 %v2557
    %v3874 = vunpack.c.h.b16 %v2557
    %v3875 = vunpack.c.l.b16 %v2558
    %v3876 = vunpack.c.h.b16 %v2558
    %v3877 = vunpack.c.l.b16 %v2559
    %v3878 = vunpack.c.h.b16 %v2559
    %v3879 = vunpack.c.l.b16 %v2560
    %v3880 = vunpack.c.h.b16 %v2560
    %v3881 = vunpack.c.l.b16 %v2561
    %v3882 = vunpack.c.h.b16 %v2561
    %v3883 = vunpack.c.l.b16 %v2562
    %v3884 = vunpack.c.h.b16 %v2562
    %v3885 = vunpack.c.l.b16 %v2563
    %v3886 = vunpack.c.h.b16 %v2563
    %v3887 = vunpack.c.l.b16 %v2564
    %v3888 = vunpack.c.h.b16 %v2564
    %v3889 = vunpack.c.l.b16 %v2565
    %v3890 = vunpack.c.h.b16 %v2565
    %v3891 = vunpack.c.l.b16 %v2566
    %v3892 = vunpack.c.h.b16 %v2566
    %v3893 = vunpack.c.l.b16 %v2567
    %v3894 = vunpack.c.h.b16 %v2567
    %v3895 = vunpack.c.l.b16 %v2568
    %v3896 = vunpack.c.h.b16 %v2568
    %v3897 = vunpack.c.l.b16 %v2569
    %v3898 = vunpack.c.h.b16 %v2569
    %v3899 = vunpack.c.l.b16 %v2570
    %v3900 = vunpack.c.h.b16 %v2570
    %v3901 = vunpack.c.l.b16 %v2571
    %v3902 = vunpack.c.h.b16 %v2571
    %v3903 = vunpack.c.l.b16 %v2572
    %v3904 = vunpack.c.h.b16 %v2572
    %v3905 = vunpack.c.l.b16 %v2573
    %v3906 = vunpack.c.h.b16 %v2573
    %v3907 = vunpack.c.l.b16 %v2574
    %v3908 = vunpack.c.h.b16 %v2574
    %v3909 = vunpack.c.l.b16 %v2575
    %v3910 = vunpack.c.h.b16 %v2575
    %v3911 = vunpack.c.l.b16 %v2576
    %v3912 = vunpack.c.h.b16 %v2576
    %v3913 = vunpack.c.l.b16 %v2577
    %v3914 = vunpack.c.h.b16 %v2577
    %v3915 = vunpack.c.l.b16 %v2578
    %v3916 = vunpack.c.h.b16 %v2578
    %v3917 = vunpack.c.l.b16 %v2579
    %v3918 = vunpack.c.h.b16 %v2579
    %v3919 = vunpack.c.l.b16 %v2580
    %v3920 = vunpack.c.h.b16 %v2580
    %v3921 = vunpack.c.l.b16 %v2581
    %v3922 = vunpack.c.h.b16 %v2581
    %v3923 = vunpack.c.l.b16 %v2582
    %v3924 = vunpack.c.h.b16 %v2582
    %v3925 = vunpack.c.l.b16 %v2583
    %v3926 = vunpack.c.h.b16 %v2583
    %v3927 = vunpack.c.l.b16 %v2584
    %v3928 = vunpack.c.h.b16 %v2584
    %v3929 = vunpack.c.l.b16 %v2585
    %v3930 = vunpack.c.h.b16 %v2585
    %v3931 = vunpack.c.l.b16 %v2586
    %v3932 = vunpack.c.h.b16 %v2586
    %v3933 = vunpack.c.l.b16 %v2587
    %v3934 = vunpack.c.h.b16 %v2587
    %v3935 = vunpack.c.l.b16 %v2588
    %v3936 = vunpack.c.h.b16 %v2588
    %v3937 = vunpack.c.l.b16 %v2589
    %v3938 = vunpack.c.h.b16 %v2589
    %v3939 = vunpack.c.l.b16 %v2590
    %v3940 = vunpack.c.h.b16 %v2590
    %v3941 = vunpack.c.l.b16 %v2591
    %v3942 = vunpack.c.h.b16 %v2591
    %v3943 = vunpack.c.l.b16 %v2592
    %v3944 = vunpack.c.h.b16 %v2592
    %v3945 = vunpack.c.l.b16 %v2593
    %v3946 = vunpack.c.h.b16 %v2593
    %v3947 = vunpack.c.l.b16 %v2594
    %v3948 = vunpack.c.h.b16 %v2594
    %v3949 = vunpack.c.l.b16 %v2595
    %v3950 = vunpack.c.h.b16 %v2595
    %v3951 = vunpack.c.l.b16 %v2596
    %v3952 = vunpack.c.h.b16 %v2596
    %v3953 = vunpack.c.l.b16 %v2597
    %v3954 = vunpack.c.h.b16 %v2597
    %v3955 = vunpack.c.l.b16 %v2598
    %v3956 = vunpack.c.h.b16 %v2598
    %v3957 = vunpack.c.l.b16 %v2599
    %v3958 = vunpack.c.h.b16 %v2599
    %v3959 = vunpack.c.l.b16 %v2600
    %v3960 = vunpack.c.h.b16 %v2600
    %v3961 = vunpack.c.l.b16 %v2601
    %v3962 = vunpack.c.h.b16 %v2601
    %v3963 = vunpack.c.l.b16 %v2602
    %v3964 = vunpack.c.h.b16 %v2602
    %v3965 = vunpack.c.l.b16 %v2603
    %v3966 = vunpack.c.h.b16 %v2603
    %v3967 = vunpack.c.l.b16 %v2604
    %v3968 = vunpack.c.h.b16 %v2604
    %v3969 = vunpack.c.l.b16 %v2605
    %v3970 = vunpack.c.h.b16 %v2605
    %v3971 = vunpack.c.l.b16 %v2606
    %v3972 = vunpack.c.h.b16 %v2606
    %v3973 = vunpack.c.l.b16 %v2607
    %v3974 = vunpack.c.h.b16 %v2607
    %v3975 = vunpack.c.l.b16 %v2608
    %v3976 = vunpack.c.h.b16 %v2608
    %v3977 = vunpack.c.l.b16 %v2609
    %v3978 = vunpack.c.h.b16 %v2609
    %v3979 = vunpack.c.l.b16 %v2610
    %v3980 = vunpack.c.h.b16 %v2610
    %v3981 = vunpack.c.l.b16 %v2611
    %v3982 = vunpack.c.h.b16 %v2611
    %v3983 = vunpack.c.l.b16 %v2612
    %v3984 = vunpack.c.h.b16 %v2612
    %v3985 = vunpack.c.l.b16 %v2613
    %v3986 = vunpack.c.h.b16 %v2613
    %v3987 = vunpack.c.l.b16 %v2614
    %v3988 = vunpack.c.h.b16 %v2614
    %v3989 = vunpack.c.l.b16 %v2615
    %v3990 = vunpack.c.h.b16 %v2615
    %v3991 = vunpack.c.l.b16 %v2616
    %v3992 = vunpack.c.h.b16 %v2616
    %v3993 = vunpack.c.l.b16 %v2617
    %v3994 = vunpack.c.h.b16 %v2617
    %v3995 = vunpack.c.l.b16 %v2618
    %v3996 = vunpack.c.h.b16 %v2618
    %v3997 = vunpack.c.l.b16 %v2619
    %v3998 = vunpack.c.h.b16 %v2619
    %v3999 = vunpack.c.l.b16 %v2620
    %v4000 = vunpack.c.h.b16 %v2620
    %v4001 = vunpack.c.l.b16 %v2621
    %v4002 = vunpack.c.h.b16 %v2621
    %v4003 = vunpack.c.l.b16 %v2622
    %v4004 = vunpack.c.h.b16 %v2622
    %v4005 = vunpack.c.l.b16 %v2623
    %v4006 = vunpack.c.h.b16 %v2623
    %v4007 = vunpack.c.l.b16 %v2624
    %v4008 = vunpack.c.h.b16 %v2624
    %v4009 = vunpack.c.l.b16 %v2625
    %v4010 = vunpack.c.h.b16 %v2625
    %v4011 = vunpack.c.l.b16 %v2626
    %v4012 = vunpack.c.h.b16 %v2626
    %v4013 = vunpack.c.l.b16 %v2627
    %v4014 = vunpack.c.h.b16 %v2627
    %v4015 = vunpack.c.l.b16 %v2628
    %v4016 = vunpack.c.h.b16 %v2628
    %v4017 = vunpack.c.l.b16 %v2629
    %v4018 = vunpack.c.h.b16 %v2629
    %v4019 = vunpack.c.l.b16 %v2630
    %v4020 = vunpack.c.h.b16 %v2630
    %v4021 = vunpack.c.l.b16 %v2631
    %v4022 = vunpack.c.h.b16 %v2631
    %v4023 = vunpack.c.l.b16 %v2632
    %v4024 = vunpack.c.h.b16 %v2632
    %v4025 = vunpack.c.l.b16 %v2633
    %v4026 = vunpack.c.h.b16 %v2633
    %v4027 = vunpack.c.l.b16 %v2634
    %v4028 = vunpack.c.h.b16 %v2634
    %v4029 = vunpack.c.l.b16 %v2635
    %v4030 = vunpack.c.h.b16 %v2635
    %v4031 = vunpack.c.l.b16 %v2636
    %v4032 = vunpack.c.h.b16 %v2636
    %v4033 = vunpack.c.l.b16 %v2637
    %v4034 = vunpack.c.h.b16 %v2637
    %v4035 = vunpack.c.l.b16 %v2638
    %v4036 = vunpack.c.h.b16 %v2638
    %v4037 = vunpack.c.l.b16 %v2639
    %v4038 = vunpack.c.h.b16 %v2639
    %v4039 = vunpack.c.l.b16 %v2640
    %v4040 = vunpack.c.h.b16 %v2640
    %v4041 = vunpack.c.l.b16 %v2641
    %v4042 = vunpack.c.h.b16 %v2641
    %v4043 = vunpack.c.l.b16 %v2642
    %v4044 = vunpack.c.h.b16 %v2642
    %v4045 = vunpack.c.l.b16 %v2643
    %v4046 = vunpack.c.h.b16 %v2643
    %v4047 = vunpack.c.l.b16 %v2644
    %v4048 = vunpack.c.h.b16 %v2644
    %v4049 = vunpack.c.l.b16 %v2645
    %v4050 = vunpack.c.h.b16 %v2645
    %v4051 = vunpack.c.l.b16 %v2646
    %v4052 = vunpack.c.h.b16 %v2646
    %v4053 = vunpack.c.l.b16 %v2647
    %v4054 = vunpack.c.h.b16 %v2647
    %v4055 = vunpack.c.l.b16 %v2648
    %v4056 = vunpack.c.h.b16 %v2648
    %v4057 = vunpack.c.l.b16 %v2649
    %v4058 = vunpack.c.h.b16 %v2649
    %v4059 = vunpack.c.l.b16 %v2650
    %v4060 = vunpack.c.h.b16 %v2650
    %v4061 = vunpack.c.l.b16 %v2651
    %v4062 = vunpack.c.h.b16 %v2651
    %v4063 = vunpack.c.l.b16 %v2652
    %v4064 = vunpack.c.h.b16 %v2652
    %v4065 = vunpack.c.l.b16 %v2653
    %v4066 = vunpack.c.h.b16 %v2653
    %v4067 = vunpack.c.l.b16 %v2654
    %v4068 = vunpack.c.h.b16 %v2654
    %v4069 = vunpack.c.l.b16 %v2655
    %v4070 = vunpack.c.h.b16 %v2655
    %v4071 = vunpack.c.l.b16 %v2656
    %v4072 = vunpack.c.h.b16 %v2656
    %v4073 = vunpack.c.l.b16 %v2657
    %v4074 = vunpack.c.h.b16 %v2657
    %v4075 = vunpack.c.l.b16 %v2658
    %v4076 = vunpack.c.h.b16 %v2658
    %v4077 = vunpack.c.l.b16 %v2659
    %v4078 = vunpack.c.h.b16 %v2659
    %v4079 = vunpack.c.l.b16 %v2660
    %v4080 = vunpack.c.h.b16 %v2660
    %v4081 = vunpack.c.l.b16 %v2661
    %v4082 = vunpack.c.h.b16 %v2661
    %v4083 = vunpack.c.l.b16 %v2662
    %v4084 = vunpack.c.h.b16 %v2662
    %v4085 = vunpack.c.l.b16 %v2663
    %v4086 = vunpack.c.h.b16 %v2663
    %v4087 = vunpack.c.l.b16 %v2664
    %v4088 = vunpack.c.h.b16 %v2664
    %v4089 = vunpack.c.l.b16 %v2665
    %v4090 = vunpack.c.h.b16 %v2665
    %v4091 = vunpack.c.l.b16 %v2666
    %v4092 = vunpack.c.h.b16 %v2666
    %v4093 = vunpack.c.l.b16 %v2667
    %v4094 = vunpack.c.h.b16 %v2667
    %v4095 = vunpack.c.l.b16 %v2668
    %v4096 = vunpack.c.h.b16 %v2668
    %v4097 = vunpack.c.l.b16 %v2669
    %v4098 = vunpack.c.h.b16 %v2669
    %v4099 = vunpack.c.l.b16 %v2670
    %v4100 = vunpack.c.h.b16 %v2670
    %v4101 = vunpack.c.l.b16 %v2671
    %v4102 = vunpack.c.h.b16 %v2671
    %v4103 = vunpack.c.l.b16 %v2672
    %v4104 = vunpack.c.h.b16 %v2672
    %v4105 = vunpack.c.l.b16 %v2673
    %v4106 = vunpack.c.h.b16 %v2673
    %v4107 = vunpack.c.l.b16 %v2674
    %v4108 = vunpack.c.h.b16 %v2674
    %v4109 = vunpack.c.l.b16 %v2675
    %v4110 = vunpack.c.h.b16 %v2675
    %v4111 = vunpack.c.l.b16 %v2676
    %v4112 = vunpack.c.h.b16 %v2676
    %v4113 = vunpack.c.l.b16 %v2677
    %v4114 = vunpack.c.h.b16 %v2677
    %v4115 = vunpack.c.l.b16 %v2678
    %v4116 = vunpack.c.h.b16 %v2678
    %v4117 = vunpack.c.l.b16 %v2679
    %v4118 = vunpack.c.h.b16 %v2679
    %v4119 = vunpack.c.l.b16 %v2680
    %v4120 = vunpack.c.h.b16 %v2680
    %v4121 = vunpack.c.l.b16 %v2681
    %v4122 = vunpack.c.h.b16 %v2681
    %v4123 = vunpack.c.l.b16 %v2682
    %v4124 = vunpack.c.h.b16 %v2682
    %v4125 = vunpack.c.l.b16 %v2683
    %v4126 = vunpack.c.h.b16 %v2683
    %v4127 = vunpack.c.l.b16 %v2684
    %v4128 = vunpack.c.h.b16 %v2684
    %v4129 = vunpack.c.l.b16 %v2685
    %v4130 = vunpack.c.h.b16 %v2685
    %v4131 = vunpack.c.l.b16 %v2686
    %v4132 = vunpack.c.h.b16 %v2686
    %v4133 = vunpack.c.l.b16 %v2687
    %v4134 = vunpack.c.h.b16 %v2687
    %v4135 = vunpack.c.l.b16 %v2688
    %v4136 = vunpack.c.h.b16 %v2688
    %v4137 = vunpack.c.l.b16 %v2689
    %v4138 = vunpack.c.h.b16 %v2689
    %v4139 = vunpack.c.l.b16 %v2690
    %v4140 = vunpack.c.h.b16 %v2690
    %v4141 = vunpack.c.l.b16 %v2691
    %v4142 = vunpack.c.h.b16 %v2691
    %v4143 = vunpack.c.l.b16 %v2692
    %v4144 = vunpack.c.h.b16 %v2692
    %v4145 = vunpack.c.l.b16 %v2693
    %v4146 = vunpack.c.h.b16 %v2693
    %v4147 = vunpack.c.l.b16 %v2694
    %v4148 = vunpack.c.h.b16 %v2694
    %v4149 = vunpack.c.l.b16 %v2695
    %v4150 = vunpack.c.h.b16 %v2695
    %v4151 = vunpack.c.l.b16 %v2696
    %v4152 = vunpack.c.h.b16 %v2696
    %v4153 = vunpack.c.l.b16 %v2697
    %v4154 = vunpack.c.h.b16 %v2697
    %v4155 = vunpack.c.l.b16 %v2698
    %v4156 = vunpack.c.h.b16 %v2698
    %v4157 = vunpack.c.l.b16 %v2699
    %v4158 = vunpack.c.h.b16 %v2699
    %v4159 = vunpack.c.l.b16 %v2700
    %v4160 = vunpack.c.h.b16 %v2700
    %v4161 = vunpack.c.l.b16 %v2701
    %v4162 = vunpack.c.h.b16 %v2701
    %v4163 = vunpack.c.l.b16 %v2702
    %v4164 = vunpack.c.h.b16 %v2702
    %v4165 = vunpack.c.l.b16 %v2703
    %v4166 = vunpack.c.h.b16 %v2703
    %v4167 = vunpack.c.l.b16 %v2704
    %v4168 = vunpack.c.h.b16 %v2704
    %v4169 = vunpack.c.l.b16 %v2705
    %v4170 = vunpack.c.h.b16 %v2705
    %v4171 = vunpack.c.l.b16 %v2706
    %v4172 = vunpack.c.h.b16 %v2706
    %v4173 = vunpack.c.l.b16 %v2707
    %v4174 = vunpack.c.h.b16 %v2707
    %v4175 = vunpack.c.l.b16 %v2708
    %v4176 = vunpack.c.h.b16 %v2708
    %v4177 = vunpack.c.l.b16 %v2709
    %v4178 = vunpack.c.h.b16 %v2709
    %v4179 = vunpack.c.l.b16 %v2710
    %v4180 = vunpack.c.h.b16 %v2710
    %v4181 = vunpack.c.l.b16 %v2711
    %v4182 = vunpack.c.h.b16 %v2711
    %v4183 = vunpack.c.l.b16 %v2712
    %v4184 = vunpack.c.h.b16 %v2712
    %v4185 = vunpack.c.l.b16 %v2713
    %v4186 = vunpack.c.h.b16 %v2713
    %v4187 = vunpack.c.l.b16 %v2714
    %v4188 = vunpack.c.h.b16 %v2714
    %v4189 = vunpack.c.l.b16 %v2715
    %v4190 = vunpack.c.h.b16 %v2715
    %v4191 = vunpack.c.l.b16 %v2716
    %v4192 = vunpack.c.h.b16 %v2716
    %v4193 = vunpack.c.l.b16 %v2717
    %v4194 = vunpack.c.h.b16 %v2717
    %v4195 = vunpack.c.l.b16 %v2718
    %v4196 = vunpack.c.h.b16 %v2718
    %v4197 = vunpack.c.l.b16 %v2719
    %v4198 = vunpack.c.h.b16 %v2719
    %v4199 = vunpack.c.l.b16 %v2720
    %v4200 = vunpack.c.h.b16 %v2720
    %v4201 = vunpack.c.l.b16 %v2721
    %v4202 = vunpack.c.h.b16 %v2721
    %v4203 = vunpack.c.l.b16 %v2722
    %v4204 = vunpack.c.h.b16 %v2722
    %v4205 = vunpack.c.l.b16 %v2723
    %v4206 = vunpack.c.h.b16 %v2723
    %v4207 = vunpack.c.l.b16 %v2724
    %v4208 = vunpack.c.h.b16 %v2724
    %v4209 = vunpack.c.l.b16 %v2725
    %v4210 = vunpack.c.h.b16 %v2725
    %v4211 = vunpack.c.l.b16 %v2726
    %v4212 = vunpack.c.h.b16 %v2726
    %v4213 = vunpack.c.l.b16 %v2727
    %v4214 = vunpack.c.h.b16 %v2727
    %v4215 = vunpack.c.l.b16 %v2728
    %v4216 = vunpack.c.h.b16 %v2728
    %v4217 = vunpack.c.l.b16 %v2729
    %v4218 = vunpack.c.h.b16 %v2729
    %v4219 = vunpack.c.l.b16 %v2730
    %v4220 = vunpack.c.h.b16 %v2730
    %v4221 = vunpack.c.l.b16 %v2731
    %v4222 = vunpack.c.h.b16 %v2731
    %v4223 = vunpack.c.l.b16 %v2732
    %v4224 = vunpack.c.h.b16 %v2732
    %v4225 = vunpack.c.l.b16 %v2733
    %v4226 = vunpack.c.h.b16 %v2733
    %v4227 = vunpack.c.l.b16 %v2734
    %v4228 = vunpack.c.h.b16 %v2734
    %v4229 = vunpack.c.l.b16 %v2735
    %v4230 = vunpack.c.h.b16 %v2735
    %v4231 = vunpack.c.l.b16 %v2736
    %v4232 = vunpack.c.h.b16 %v2736
    %v4233 = vunpack.c.l.b16 %v2737
    %v4234 = vunpack.c.h.b16 %v2737
    %v4235 = vunpack.c.l.b16 %v2738
    %v4236 = vunpack.c.h.b16 %v2738
    %v4237 = vunpack.c.l.b16 %v2739
    %v4238 = vunpack.c.h.b16 %v2739
    %v4239 = vunpack.c.l.b16 %v2740
    %v4240 = vunpack.c.h.b16 %v2740
    %v4241 = vunpack.c.l.b16 %v2741
    %v4242 = vunpack.c.h.b16 %v2741
    %v4243 = vunpack.c.l.b16 %v2742
    %v4244 = vunpack.c.h.b16 %v2742
    %v4245 = vunpack.c.l.b16 %v2743
    %v4246 = vunpack.c.h.b16 %v2743
    %v4247 = vunpack.c.l.b16 %v2744
    %v4248 = vunpack.c.h.b16 %v2744
    %v4249 = vunpack.c.l.b16 %v2745
    %v4250 = vunpack.c.h.b16 %v2745
    %v4251 = vunpack.c.l.b16 %v2746
    %v4252 = vunpack.c.h.b16 %v2746
    %v4253 = vunpack.c.l.b16 %v2747
    %v4254 = vunpack.c.h.b16 %v2747
    %v4255 = vunpack.c.l.b16 %v2748
    %v4256 = vunpack.c.h.b16 %v2748
    %v4257 = vunpack.c.l.b16 %v2749
    %v4258 = vunpack.c.h.b16 %v2749
    %v4259 = vunpack.c.l.b16 %v2750
    %v4260 = vunpack.c.h.b16 %v2750
    %v4261 = vunpack.c.l.b16 %v2751
    %v4262 = vunpack.c.h.b16 %v2751
    %v4263 = vunpack.c.l.b16 %v2752
    %v4264 = vunpack.c.h.b16 %v2752
    %v4265 = vunpack.c.l.b16 %v2753
    %v4266 = vunpack.c.h.b16 %v2753
    %v4267 = vunpack.c.l.b16 %v2754
    %v4268 = vunpack.c.h.b16 %v2754
    %v4269 = vunpack.c.l.b16 %v2755
    %v4270 = vunpack.c.h.b16 %v2755
    %v4271 = vunpack.c.l.b16 %v2756
    %v4272 = vunpack.c.h.b16 %v2756
    %v4273 = vunpack.c.l.b16 %v2757
    %v4274 = vunpack.c.h.b16 %v2757
    %v4275 = vunpack.c.l.b16 %v2758
    %v4276 = vunpack.c.h.b16 %v2758
    %v4277 = vunpack.c.l.b16 %v2759
    %v4278 = vunpack.c.h.b16 %v2759
    %v4279 = vunpack.c.l.b16 %v2760
    %v4280 = vunpack.c.h.b16 %v2760
    %v4281 = vunpack.c.l.b16 %v2761
    %v4282 = vunpack.c.h.b16 %v2761
    %v4283 = vunpack.c.l.b16 %v2762
    %v4284 = vunpack.c.h.b16 %v2762
    %v4285 = vunpack.c.l.b16 %v2763
    %v4286 = vunpack.c.h.b16 %v2763
    %v4287 = vunpack.c.l.b16 %v2764
    %v4288 = vunpack.c.h.b16 %v2764
    %v4289 = vunpack.c.l.b16 %v2765
    %v4290 = vunpack.c.h.b16 %v2765
    %v4291 = vunpack.c.l.b16 %v2766
    %v4292 = vunpack.c.h.b16 %v2766
    %v4293 = vunpack.c.l.b16 %v2767
    %v4294 = vunpack.c.h.b16 %v2767
    %v4295 = vunpack.c.l.b16 %v2768
    %v4296 = vunpack.c.h.b16 %v2768
    %v4297 = vunpack.c.l.b16 %v2769
    %v4298 = vunpack.c.h.b16 %v2769
    %v4299 = vunpack.c.l.b16 %v2770
    %v4300 = vunpack.c.h.b16 %v2770
    %v4301 = vunpack.c.l.b16 %v2771
    %v4302 = vunpack.c.h.b16 %v2771
    %v4303 = vunpack.c.l.b16 %v2772
    %v4304 = vunpack.c.h.b16 %v2772
    %v4305 = vunpack.c.l.b16 %v2773
    %v4306 = vunpack.c.h.b16 %v2773
    %v4307 = vunpack.c.l.b16 %v2774
    %v4308 = vunpack.c.h.b16 %v2774
    %v4309 = vunpack.c.l.b16 %v2775
    %v4310 = vunpack.c.h.b16 %v2775
    %v4311 = vunpack.c.l.b16 %v2776
    %v4312 = vunpack.c.h.b16 %v2776
    %v4313 = vunpack.c.l.b16 %v2777
    %v4314 = vunpack.c.h.b16 %v2777
    %v4315 = vunpack.c.l.b16 %v2778
    %v4316 = vunpack.c.h.b16 %v2778
    %v4317 = vunpack.c.l.b16 %v2779
    %v4318 = vunpack.c.h.b16 %v2779
    %v4319 = vunpack.c.l.b16 %v2780
    %v4320 = vunpack.c.h.b16 %v2780
    %v4321 = vunpack.c.l.b16 %v2781
    %v4322 = vunpack.c.h.b16 %v2781
    %v4323 = vunpack.c.l.b16 %v2782
    %v4324 = vunpack.c.h.b16 %v2782
    %v4325 = vunpack.c.l.b16 %v2783
    %v4326 = vunpack.c.h.b16 %v2783
    %v4327 = vunpack.c.l.b16 %v2784
    %v4328 = vunpack.c.h.b16 %v2784
    %v4329 = vunpack.c.l.b16 %v2785
    %v4330 = vunpack.c.h.b16 %v2785
    %v4331 = vunpack.c.l.b16 %v2786
    %v4332 = vunpack.c.h.b16 %v2786
    %v4333 = vunpack.c.l.b16 %v2787
    %v4334 = vunpack.c.h.b16 %v2787
    %v4335 = vunpack.c.l.b16 %v2788
    %v4336 = vunpack.c.h.b16 %v2788
    %v4337 = vunpack.c.l.b16 %v2789
    %v4338 = vunpack.c.h.b16 %v2789
    %v4339 = vunpack.c.l.b16 %v2790
    %v4340 = vunpack.c.h.b16 %v2790
    %v4341 = vunpack.c.l.b16 %v2791
    %v4342 = vunpack.c.h.b16 %v2791
    %v4343 = vunpack.c.l.b16 %v2792
    %v4344 = vunpack.c.h.b16 %v2792
    %v4345 = vunpack.c.l.b16 %v2793
    %v4346 = vunpack.c.h.b16 %v2793
    %v4347 = vunpack.c.l.b16 %v2794
    %v4348 = vunpack.c.h.b16 %v2794
    %v4349 = vunpack.c.l.b16 %v2795
    %v4350 = vunpack.c.h.b16 %v2795
    %v4351 = vunpack.c.l.b16 %v2796
    %v4352 = vunpack.c.h.b16 %v2796
    %v4353 = vunpack.c.l.b16 %v2797
    %v4354 = vunpack.c.h.b16 %v2797
    %v4355 = vunpack.c.l.b16 %v2798
    %v4356 = vunpack.c.h.b16 %v2798
    %v4357 = vpack.c.b16 %v3337, %v3333
    %v4358 = vpack.c.b16 %v3338, %v3334
    %v4359 = vpack.c.b16 %v3339, %v3335
    %v4360 = vpack.c.b16 %v3340, %v3336
    %v4361 = vpack.c.b16 %v3345, %v3341
    %v4362 = vpack.c.b16 %v3346, %v3342
    %v4363 = vpack.c.b16 %v3347, %v3343
    %v4364 = vpack.c.b16 %v3348, %v3344
    %v4365 = vpack.c.b16 %v3353, %v3349
    %v4366 = vpack.c.b16 %v3354, %v3350
    %v4367 = vpack.c.b16 %v3355, %v3351
    %v4368 = vpack.c.b16 %v3356, %v3352
    %v4369 = vpack.c.b16 %v3361, %v3357
    %v4370 = vpack.c.b16 %v3362, %v3358
    %v4371 = vpack.c.b16 %v3363, %v3359
    %v4372 = vpack.c.b16 %v3364, %v3360
    %v4373 = vpack.c.b16 %v3369, %v3365
    %v4374 = vpack.c.b16 %v3370, %v3366
    %v4375 = vpack.c.b16 %v3371, %v3367
    %v4376 = vpack.c.b16 %v3372, %v3368
    %v4377 = vpack.c.b16 %v3377, %v3373
    %v4378 = vpack.c.b16 %v3378, %v3374
    %v4379 = vpack.c.b16 %v3379, %v3375
    %v4380 = vpack.c.b16 %v3380, %v3376
    %v4381 = vpack.c.b16 %v3385, %v3381
    %v4382 = vpack.c.b16 %v3386, %v3382
    %v4383 = vpack.c.b16 %v3387, %v3383
    %v4384 = vpack.c.b16 %v3388, %v3384
    %v4385 = vpack.c.b16 %v3393, %v3389
    %v4386 = vpack.c.b16 %v3394, %v3390
    %v4387 = vpack.c.b16 %v3395, %v3391
    %v4388 = vpack.c.b16 %v3396, %v3392
    %v4389 = vpack.c.b16 %v3401, %v3397
    %v4390 = vpack.c.b16 %v3402, %v3398
    %v4391 = vpack.c.b16 %v3403, %v3399
    %v4392 = vpack.c.b16 %v3404, %v3400
    %v4393 = vpack.c.b16 %v3409, %v3405
    %v4394 = vpack.c.b16 %v3410, %v3406
    %v4395 = vpack.c.b16 %v3411, %v3407
    %v4396 = vpack.c.b16 %v3412, %v3408
    %v4397 = vpack.c.b16 %v3417, %v3413
    %v4398 = vpack.c.b16 %v3418, %v3414
    %v4399 = vpack.c.b16 %v3419, %v3415
    %v4400 = vpack.c.b16 %v3420, %v3416
    %v4401 = vpack.c.b16 %v3425, %v3421
    %v4402 = vpack.c.b16 %v3426, %v3422
    %v4403 = vpack.c.b16 %v3427, %v3423
    %v4404 = vpack.c.b16 %v3428, %v3424
    %v4405 = vpack.c.b16 %v3433, %v3429
    %v4406 = vpack.c.b16 %v3434, %v3430
    %v4407 = vpack.c.b16 %v3435, %v3431
    %v4408 = vpack.c.b16 %v3436, %v3432
    %v4409 = vpack.c.b16 %v3441, %v3437
    %v4410 = vpack.c.b16 %v3442, %v3438
    %v4411 = vpack.c.b16 %v3443, %v3439
    %v4412 = vpack.c.b16 %v3444, %v3440
    %v4413 = vpack.c.b16 %v3449, %v3445
    %v4414 = vpack.c.b16 %v3450, %v3446
    %v4415 = vpack.c.b16 %v3451, %v3447
    %v4416 = vpack.c.b16 %v3452, %v3448
    %v4417 = vpack.c.b16 %v3457, %v3453
    %v4418 = vpack.c.b16 %v3458, %v3454
    %v4419 = vpack.c.b16 %v3459, %v3455
    %v4420 = vpack.c.b16 %v3460, %v3456
    %v4421 = vpack.c.b16 %v3465, %v3461
    %v4422 = vpack.c.b16 %v3466, %v3462
    %v4423 = vpack.c.b16 %v3467, %v3463
    %v4424 = vpack.c.b16 %v3468, %v3464
    %v4425 = vpack.c.b16 %v3473, %v3469
    %v4426 = vpack.c.b16 %v3474, %v3470
    %v4427 = vpack.c.b16 %v3475, %v3471
    %v4428 = vpack.c.b16 %v3476, %v3472
    %v4429 = vpack.c.b16 %v3481, %v3477
    %v4430 = vpack.c.b16 %v3482, %v3478
    %v4431 = vpack.c.b16 %v3483, %v3479
    %v4432 = vpack.c.b16 %v3484, %v3480
    %v4433 = vpack.c.b16 %v3489, %v3485
    %v4434 = vpack.c.b16 %v3490, %v3486
    %v4435 = vpack.c.b16 %v3491, %v3487
    %v4436 = vpack.c.b16 %v3492, %v3488
    %v4437 = vpack.c.b16 %v3497, %v3493
    %v4438 = vpack.c.b16 %v3498, %v3494
    %v4439 = vpack.c.b16 %v3499, %v3495
    %v4440 = vpack.c.b16 %v3500, %v3496
    %v4441 = vpack.c.b16 %v3505, %v3501
    %v4442 = vpack.c.b16 %v3506, %v3502
    %v4443 = vpack.c.b16 %v3507, %v3503
    %v4444 = vpack.c.b16 %v3508, %v3504
    %v4445 = vpack.c.b16 %v3513, %v3509
    %v4446 = vpack.c.b16 %v3514, %v3510
    %v4447 = vpack.c.b16 %v3515, %v3511
    %v4448 = vpack.c.b16 %v3516, %v3512
    %v4449 = vpack.c.b16 %v3521, %v3517
    %v4450 = vpack.c.b16 %v3522, %v3518
    %v4451 = vpack.c.b16 %v3523, %v3519
    %v4452 = vpack.c.b16 %v3524, %v3520
    %v4453 = vpack.c.b16 %v3529, %v3525
    %v4454 = vpack.c.b16 %v3530, %v3526
    %v4455 = vpack.c.b16 %v3531, %v3527
    %v4456 = vpack.c.b16 %v3532, %v3528
    %v4457 = vpack.c.b16 %v3537, %v3533
    %v4458 = vpack.c.b16 %v3538, %v3534
    %v4459 = vpack.c.b16 %v3539, %v3535
    %v4460 = vpack.c.b16 %v3540, %v3536
    %v4461 = vpack.c.b16 %v3545, %v3541
    %v4462 = vpack.c.b16 %v3546, %v3542
    %v4463 = vpack.c.b16 %v3547, %v3543
    %v4464 = vpack.c.b16 %v3548, %v3544
    %v4465 = vpack.c.b16 %v3553, %v3549
    %v4466 = vpack.c.b16 %v3554, %v3550
    %v4467 = vpack.c.b16 %v3555, %v3551
    %v4468 = vpack.c.b16 %v3556, %v3552
    %v4469 = vpack.c.b16 %v3561, %v3557
    %v4470 = vpack.c.b16 %v3562, %v3558
    %v4471 = vpack.c.b16 %v3563, %v3559
    %v4472 = vpack.c.b16 %v3564, %v3560
    %v4473 = vpack.c.b16 %v3569, %v3565
    %v4474 = vpack.c.b16 %v3570, %v3566
    %v4475 = vpack.c.b16 %v3571, %v3567
    %v4476 = vpack.c.b16 %v3572, %v3568
    %v4477 = vpack.c.b16 %v3577, %v3573
    %v4478 = vpack.c.b16 %v3578, %v3574
    %v4479 = vpack.c.b16 %v3579, %v3575
    %v4480 = vpack.c.b16 %v3580, %v3576
    %v4481 = vpack.c.b16 %v3585, %v3581
    %v4482 = vpack.c.b16 %v3586, %v3582
    %v4483 = vpack.c.b16 %v3587, %v3583
    %v4484 = vpack.c.b16 %v3588, %v3584
    %v4485 = vpack.c.b16 %v3593, %v3589
    %v4486 = vpack.c.b16 %v3594, %v3590
    %v4487 = vpack.c.b16 %v3595, %v3591
    %v4488 = vpack.c.b16 %v3596, %v3592
    %v4489 = vpack.c.b16 %v3601, %v3597
    %v4490 = vpack.c.b16 %v3602, %v3598
    %v4491 = vpack.c.b16 %v3603, %v3599
    %v4492 = vpack.c.b16 %v3604, %v3600
    %v4493 = vpack.c.b16 %v3609, %v3605
    %v4494 = vpack.c.b16 %v3610, %v3606
    %v4495 = vpack.c.b16 %v3611, %v3607
    %v4496 = vpack.c.b16 %v3612, %v3608
    %v4497 = vpack.c.b16 %v3617, %v3613
    %v4498 = vpack.c.b16 %v3618, %v3614
    %v4499 = vpack.c.b16 %v3619, %v3615
    %v4500 = vpack.c.b16 %v3620, %v3616
    %v4501 = vpack.c.b16 %v3625, %v3621
    %v4502 = vpack.c.b16 %v3626, %v3622
    %v4503 = vpack.c.b16 %v3627, %v3623
    %v4504 = vpack.c.b16 %v3628, %v3624
    %v4505 = vpack.c.b16 %v3633, %v3629
    %v4506 = vpack.c.b16 %v3634, %v3630
    %v4507 = vpack.c.b16 %v3635, %v3631
    %v4508 = vpack.c.b16 %v3636, %v3632
    %v4509 = vpack.c.b16 %v3641, %v3637
    %v4510 = vpack.c.b16 %v3642, %v3638
    %v4511 = vpack.c.b16 %v3643, %v3639
    %v4512 = vpack.c.b16 %v3644, %v3640
    %v4513 = vpack.c.b16 %v3649, %v3645
    %v4514 = vpack.c.b16 %v3650, %v3646
    %v4515 = vpack.c.b16 %v3651, %v3647
    %v4516 = vpack.c.b16 %v3652, %v3648
    %v4517 = vpack.c.b16 %v3657, %v3653
    %v4518 = vpack.c.b16 %v3658, %v3654
    %v4519 = vpack.c.b16 %v3659, %v3655
    %v4520 = vpack.c.b16 %v3660, %v3656
    %v4521 = vpack.c.b16 %v3665, %v3661
    %v4522 = vpack.c.b16 %v3666, %v3662
    %v4523 = vpack.c.b16 %v3667, %v3663
    %v4524 = vpack.c.b16 %v3668, %v3664
    %v4525 = vpack.c.b16 %v3673, %v3669
    %v4526 = vpack.c.b16 %v3674, %v3670
    %v4527 = vpack.c.b16 %v3675, %v3671
    %v4528 = vpack.c.b16 %v3676, %v3672
    %v4529 = vpack.c.b16 %v3681, %v3677
    %v4530 = vpack.c.b16 %v3682, %v3678
    %v4531 = vpack.c.b16 %v3683, %v3679
    %v4532 = vpack.c.b16 %v3684, %v3680
    %v4533 = vpack.c.b16 %v3689, %v3685
    %v4534 = vpack.c.b16 %v3690, %v3686
    %v4535 = vpack.c.b16 %v3691, %v3687
    %v4536 = vpack.c.b16 %v3692, %v3688
    %v4537 = vpack.c.b16 %v3697, %v3693
    %v4538 = vpack.c.b16 %v3698, %v3694
    %v4539 = vpack.c.b16 %v3699, %v3695
    %v4540 = vpack.c.b16 %v3700, %v3696
    %v4541 = vpack.c.b16 %v3705, %v3701
    %v4542 = vpack.c.b16 %v3706, %v3702
    %v4543 = vpack.c.b16 %v3707, %v3703
    %v4544 = vpack.c.b16 %v3708, %v3704
    %v4545 = vpack.c.b16 %v3713, %v3709
    %v4546 = vpack.c.b16 %v3714, %v3710
    %v4547 = vpack.c.b16 %v3715, %v3711
    %v4548 = vpack.c.b16 %v3716, %v3712
    %v4549 = vpack.c.b16 %v3721, %v3717
    %v4550 = vpack.c.b16 %v3722, %v3718
    %v4551 = vpack.c.b16 %v3723, %v3719
    %v4552 = vpack.c.b16 %v3724, %v3720
    %v4553 = vpack.c.b16 %v3729, %v3725
    %v4554 = vpack.c.b16 %v3730, %v3726
    %v4555 = vpack.c.b16 %v3731, %v3727
    %v4556 = vpack.c.b16 %v3732, %v3728
    %v4557 = vpack.c.b16 %v3737, %v3733
    %v4558 = vpack.c.b16 %v3738, %v3734
    %v4559 = vpack.c.b16 %v3739, %v3735
    %v4560 = vpack.c.b16 %v3740, %v3736
    %v4561 = vpack.c.b16 %v3745, %v3741
    %v4562 = vpack.c.b16 %v3746, %v3742
    %v4563 = vpack.c.b16 %v3747, %v3743
    %v4564 = vpack.c.b16 %v3748, %v3744
    %v4565 = vpack.c.b16 %v3753, %v3749
    %v4566 = vpack.c.b16 %v3754, %v3750
    %v4567 = vpack.c.b16 %v3755, %v3751
    %v4568 = vpack.c.b16 %v3756, %v3752
    %v4569 = vpack.c.b16 %v3761, %v3757
    %v4570 = vpack.c.b16 %v3762, %v3758
    %v4571 = vpack.c.b16 %v3763, %v3759
    %v4572 = vpack.c.b16 %v3764, %v3760
    %v4573 = vpack.c.b16 %v3769, %v3765
    %v4574 = vpack.c.b16 %v3770, %v3766
    %v4575 = vpack.c.b16 %v3771, %v3767
    %v4576 = vpack.c.b16 %v3772, %v3768
    %v4577 = vpack.c.b16 %v3777, %v3773
    %v4578 = vpack.c.b16 %v3778, %v3774
    %v4579 = vpack.c.b16 %v3779, %v3775
    %v4580 = vpack.c.b16 %v3780, %v3776
    %v4581 = vpack.c.b16 %v3785, %v3781
    %v4582 = vpack.c.b16 %v3786, %v3782
    %v4583 = vpack.c.b16 %v3787, %v3783
    %v4584 = vpack.c.b16 %v3788, %v3784
    %v4585 = vpack.c.b16 %v3793, %v3789
    %v4586 = vpack.c.b16 %v3794, %v3790
    %v4587 = vpack.c.b16 %v3795, %v3791
    %v4588 = vpack.c.b16 %v3796, %v3792
    %v4589 = vpack.c.b16 %v3801, %v3797
    %v4590 = vpack.c.b16 %v3802, %v3798
    %v4591 = vpack.c.b16 %v3803, %v3799
    %v4592 = vpack.c.b16 %v3804, %v3800
    %v4593 = vpack.c.b16 %v3809, %v3805
    %v4594 = vpack.c.b16 %v3810, %v3806
    %v4595 = vpack.c.b16 %v3811, %v3807
    %v4596 = vpack.c.b16 %v3812, %v3808
    %v4597 = vpack.c.b16 %v3817, %v3813
    %v4598 = vpack.c.b16 %v3818, %v3814
    %v4599 = vpack.c.b16 %v3819, %v3815
    %v4600 = vpack.c.b16 %v3820, %v3816
    %v4601 = vpack.c.b16 %v3825, %v3821
    %v4602 = vpack.c.b16 %v3826, %v3822
    %v4603 = vpack.c.b16 %v3827, %v3823
    %v4604 = vpack.c.b16 %v3828, %v3824
    %v4605 = vpack.c.b16 %v3833, %v3829
    %v4606 = vpack.c.b16 %v3834, %v3830
    %v4607 = vpack.c.b16 %v3835, %v3831
    %v4608 = vpack.c.b16 %v3836, %v3832
    %v4609 = vpack.c.b16 %v3841, %v3837
    %v4610 = vpack.c.b16 %v3842, %v3838
    %v4611 = vpack.c.b16 %v3843, %v3839
    %v4612 = vpack.c.b16 %v3844, %v3840
    %v4613 = vpack.c.b16 %v3849, %v3845
    %v4614 = vpack.c.b16 %v3850, %v3846
    %v4615 = vpack.c.b16 %v3851, %v3847
    %v4616 = vpack.c.b16 %v3852, %v3848
    %v4617 = vpack.c.b16 %v3857, %v3853
    %v4618 = vpack.c.b16 %v3858, %v3854
    %v4619 = vpack.c.b16 %v3859, %v3855
    %v4620 = vpack.c.b16 %v3860, %v3856
    %v4621 = vpack.c.b16 %v3865, %v3861
    %v4622 = vpack.c.b16 %v3866, %v3862
    %v4623 = vpack.c.b16 %v3867, %v3863
    %v4624 = vpack.c.b16 %v3868, %v3864
    %v4625 = vpack.c.b16 %v3873, %v3869
    %v4626 = vpack.c.b16 %v3874, %v3870
    %v4627 = vpack.c.b16 %v3875, %v3871
    %v4628 = vpack.c.b16 %v3876, %v3872
    %v4629 = vpack.c.b16 %v3881, %v3877
    %v4630 = vpack.c.b16 %v3882, %v3878
    %v4631 = vpack.c.b16 %v3883, %v3879
    %v4632 = vpack.c.b16 %v3884, %v3880
    %v4633 = vpack.c.b16 %v3889, %v3885
    %v4634 = vpack.c.b16 %v3890, %v3886
    %v4635 = vpack.c.b16 %v3891, %v3887
    %v4636 = vpack.c.b16 %v3892, %v3888
    %v4637 = vpack.c.b16 %v3897, %v3893
    %v4638 = vpack.c.b16 %v3898, %v3894
    %v4639 = vpack.c.b16 %v3899, %v3895
    %v4640 = vpack.c.b16 %v3900, %v3896
    %v4641 = vpack.c.b16 %v3905, %v3901
    %v4642 = vpack.c.b16 %v3906, %v3902
    %v4643 = vpack.c.b16 %v3907, %v3903
    %v4644 = vpack.c.b16 %v3908, %v3904
    %v4645 = vpack.c.b16 %v3913, %v3909
    %v4646 = vpack.c.b16 %v3914, %v3910
    %v4647 = vpack.c.b16 %v3915, %v3911
    %v4648 = vpack.c.b16 %v3916, %v3912
    %v4649 = vpack.c.b16 %v3921, %v3917
    %v4650 = vpack.c.b16 %v3922, %v3918
    %v4651 = vpack.c.b16 %v3923, %v3919
    %v4652 = vpack.c.b16 %v3924, %v3920
    %v4653 = vpack.c.b16 %v3929, %v3925
    %v4654 = vpack.c.b16 %v3930, %v3926
    %v4655 = vpack.c.b16 %v3931, %v3927
    %v4656 = vpack.c.b16 %v3932, %v3928
    %v4657 = vpack.c.b16 %v3937, %v3933
    %v4658 = vpack.c.b16 %v3938, %v3934
    %v4659 = vpack.c.b16 %v3939, %v3935
    %v4660 = vpack.c.b16 %v3940, %v3936
    %v4661 = vpack.c.b16 %v3945, %v3941
    %v4662 = vpack.c.b16 %v3946, %v3942
    %v4663 = vpack.c.b16 %v3947, %v3943
    %v4664 = vpack.c.b16 %v3948, %v3944
    %v4665 = vpack.c.b16 %v3953, %v3949
    %v4666 = vpack.c.b16 %v3954, %v3950
    %v4667 = vpack.c.b16 %v3955, %v3951
    %v4668 = vpack.c.b16 %v3956, %v3952
    %v4669 = vpack.c.b16 %v3961, %v3957
    %v4670 = vpack.c.b16 %v3962, %v3958
    %v4671 = vpack.c.b16 %v3963, %v3959
    %v4672 = vpack.c.b16 %v3964, %v3960
    %v4673 = vpack.c.b16 %v3969, %v3965
    %v4674 = vpack.c.b16 %v3970, %v3966
    %v4675 = vpack.c.b16 %v3971, %v3967
    %v4676 = vpack.c.b16 %v3972, %v3968
    %v4677 = vpack.c.b16 %v3977, %v3973
    %v4678 = vpack.c.b16 %v3978, %v3974
    %v4679 = vpack.c.b16 %v3979, %v3975
    %v4680 = vpack.c.b16 %v3980, %v3976
    %v4681 = vpack.c.b16 %v3985, %v3981
    %v4682 = vpack.c.b16 %v3986, %v3982
    %v4683 = vpack.c.b16 %v3987, %v3983
    %v4684 = vpack.c.b16 %v3988, %v3984
    %v4685 = vpack.c.b16 %v3993, %v3989
    %v4686 = vpack.c.b16 %v3994, %v3990
    %v4687 = vpack.c.b16 %v3995, %v3991
    %v4688 = vpack.c.b16 %v3996, %v3992
    %v4689 = vpack.c.b16 %v4001, %v3997
    %v4690 = vpack.c.b16 %v4002, %v3998
    %v4691 = vpack.c.b16 %v4003, %v3999
    %v4692 = vpack.c.b16 %v4004, %v4000
    %v4693 = vpack.c.b16 %v4009, %v4005
    %v4694 = vpack.c.b16 %v4010, %v4006
    %v4695 = vpack.c.b16 %v4011, %v4007
    %v4696 = vpack.c.b16 %v4012, %v4008
    %v4697 = vpack.c.b16 %v4017, %v4013
    %v4698 = vpack.c.b16 %v4018, %v4014
    %v4699 = vpack.c.b16 %v4019, %v4015
    %v4700 = vpack.c.b16 %v4020, %v4016
    %v4701 = vpack.c.b16 %v4025, %v4021
    %v4702 = vpack.c.b16 %v4026, %v4022
    %v4703 = vpack.c.b16 %v4027, %v4023
    %v4704 = vpack.c.b16 %v4028, %v4024
    %v4705 = vpack.c.b16 %v4033, %v4029
    %v4706 = vpack.c.b16 %v4034, %v4030
    %v4707 = vpack.c.b16 %v4035, %v4031
    %v4708 = vpack.c.b16 %v4036, %v4032
    %v4709 = vpack.c.b16 %v4041, %v4037
    %v4710 = vpack.c.b16 %v4042, %v4038
    %v4711 = vpack.c.b16 %v4043, %v4039
    %v4712 = vpack.c.b16 %v4044, %v4040
    %v4713 = vpack.c.b16 %v4049, %v4045
    %v4714 = vpack.c.b16 %v4050, %v4046
    %v4715 = vpack.c.b16 %v4051, %v4047
    %v4716 = vpack.c.b16 %v4052, %v4048
    %v4717 = vpack.c.b16 %v4057, %v4053
    %v4718 = vpack.c.b16 %v4058, %v4054
    %v4719 = vpack.c.b16 %v4059, %v4055
    %v4720 = vpack.c.b16 %v4060, %v4056
    %v4721 = vpack.c.b16 %v4065, %v4061
    %v4722 = vpack.c.b16 %v4066, %v4062
    %v4723 = vpack.c.b16 %v4067, %v4063
    %v4724 = vpack.c.b16 %v4068, %v4064
    %v4725 = vpack.c.b16 %v4073, %v4069
    %v4726 = vpack.c.b16 %v4074, %v4070
    %v4727 = vpack.c.b16 %v4075, %v4071
    %v4728 = vpack.c.b16 %v4076, %v4072
    %v4729 = vpack.c.b16 %v4081, %v4077
    %v4730 = vpack.c.b16 %v4082, %v4078
    %v4731 = vpack.c.b16 %v4083, %v4079
    %v4732 = vpack.c.b16 %v4084, %v4080
    %v4733 = vpack.c.b16 %v4089, %v4085
    %v4734 = vpack.c.b16 %v4090, %v4086
    %v4735 = vpack.c.b16 %v4091, %v4087
    %v4736 = vpack.c.b16 %v4092, %v4088
    %v4737 = vpack.c.b16 %v4097, %v4093
    %v4738 = vpack.c.b16 %v4098, %v4094
    %v4739 = vpack.c.b16 %v4099, %v4095
    %v4740 = vpack.c.b16 %v4100, %v4096
    %v4741 = vpack.c.b16 %v4105, %v4101
    %v4742 = vpack.c.b16 %v4106, %v4102
    %v4743 = vpack.c.b16 %v4107, %v4103
    %v4744 = vpack.c.b16 %v4108, %v4104
    %v4745 = vpack.c.b16 %v4113, %v4109
    %v4746 = vpack.c.b16 %v4114, %v4110
    %v4747 = vpack.c.b16 %v4115, %v4111
    %v4748 = vpack.c.b16 %v4116, %v4112
    %v4749 = vpack.c.b16 %v4121, %v4117
    %v4750 = vpack.c.b16 %v4122, %v4118
    %v4751 = vpack.c.b16 %v4123, %v4119
    %v4752 = vpack.c.b16 %v4124, %v4120
    %v4753 = vpack.c.b16 %v4129, %v4125
    %v4754 = vpack.c.b16 %v4130, %v4126
    %v4755 = vpack.c.b16 %v4131, %v4127
    %v4756 = vpack.c.b16 %v4132, %v4128
    %v4757 = vpack.c.b16 %v4137, %v4133
    %v4758 = vpack.c.b16 %v4138, %v4134
    %v4759 = vpack.c.b16 %v4139, %v4135
    %v4760 = vpack.c.b16 %v4140, %v4136
    %v4761 = vpack.c.b16 %v4145, %v4141
    %v4762 = vpack.c.b16 %v4146, %v4142
    %v4763 = vpack.c.b16 %v4147, %v4143
    %v4764 = vpack.c.b16 %v4148, %v4144
    %v4765 = vpack.c.b16 %v4153, %v4149
    %v4766 = vpack.c.b16 %v4154, %v4150
    %v4767 = vpack.c.b16 %v4155, %v4151
    %v4768 = vpack.c.b16 %v4156, %v4152
    %v4769 = vpack.c.b16 %v4161, %v4157
    %v4770 = vpack.c.b16 %v4162, %v4158
    %v4771 = vpack.c.b16 %v4163, %v4159
    %v4772 = vpack.c.b16 %v4164, %v4160
    %v4773 = vpack.c.b16 %v4169, %v4165
    %v4774 = vpack.c.b16 %v4170, %v4166
    %v4775 = vpack.c.b16 %v4171, %v4167
    %v4776 = vpack.c.b16 %v4172, %v4168
    %v4777 = vpack.c.b16 %v4177, %v4173
    %v4778 = vpack.c.b16 %v4178, %v4174
    %v4779 = vpack.c.b16 %v4179, %v4175
    %v4780 = vpack.c.b16 %v4180, %v4176
    %v4781 = vpack.c.b16 %v4185, %v4181
    %v4782 = vpack.c.b16 %v4186, %v4182
    %v4783 = vpack.c.b16 %v4187, %v4183
    %v4784 = vpack.c.b16 %v4188, %v4184
    %v4785 = vpack.c.b16 %v4193, %v4189
    %v4786 = vpack.c.b16 %v4194, %v4190
    %v4787 = vpack.c.b16 %v4195, %v4191
    %v4788 = vpack.c.b16 %v4196, %v4192
    %v4789 = vpack.c.b16 %v4201, %v4197
    %v4790 = vpack.c.b16 %v4202, %v4198
    %v4791 = vpack.c.b16 %v4203, %v4199
    %v4792 = vpack.c.b16 %v4204, %v4200
    %v4793 = vpack.c.b16 %v4209, %v4205
    %v4794 = vpack.c.b16 %v4210, %v4206
    %v4795 = vpack.c.b16 %v4211, %v4207
    %v4796 = vpack.c.b16 %v4212, %v4208
    %v4797 = vpack.c.b16 %v4217, %v4213
    %v4798 = vpack.c.b16 %v4218, %v4214
    %v4799 = vpack.c.b16 %v4219, %v4215
    %v4800 = vpack.c.b16 %v4220, %v4216
    %v4801 = vpack.c.b16 %v4225, %v4221
    %v4802 = vpack.c.b16 %v4226, %v4222
    %v4803 = vpack.c.b16 %v4227, %v4223
    %v4804 = vpack.c.b16 %v4228, %v4224
    %v4805 = vpack.c.b16 %v4233, %v4229
    %v4806 = vpack.c.b16 %v4234, %v4230
    %v4807 = vpack.c.b16 %v4235, %v4231
    %v4808 = vpack.c.b16 %v4236, %v4232
    %v4809 = vpack.c.b16 %v4241, %v4237
    %v4810 = vpack.c.b16 %v4242, %v4238
    %v4811 = vpack.c.b16 %v4243, %v4239
    %v4812 = vpack.c.b16 %v4244, %v4240
    %v4813 = vpack.c.b16 %v4249, %v4245
    %v4814 = vpack.c.b16 %v4250, %v4246
    %v4815 = vpack.c.b16 %v4251, %v4247
    %v4816 = vpack.c.b16 %v4252, %v4248
    %v4817 = vpack.c.b16 %v4257, %v4253
    %v4818 = vpack.c.b16 %v4258, %v4254
    %v4819 = vpack.c.b16 %v4259, %v4255
    %v4820 = vpack.c.b16 %v4260, %v4256
    %v4821 = vpack.c.b16 %v4265, %v4261
    %v4822 = vpack.c.b16 %v4266, %v4262
    %v4823 = vpack.c.b16 %v4267, %v4263
    %v4824 = vpack.c.b16 %v4268, %v4264
    %v4825 = vpack.c.b16 %v4273, %v4269
    %v4826 = vpack.c.b16 %v4274, %v4270
    %v4827 = vpack.c.b16 %v4275, %v4271
    %v4828 = vpack.c.b16 %v4276, %v4272
    %v4829 = vpack.c.b16 %v4281, %v4277
    %v4830 = vpack.c.b16 %v4282, %v4278
    %v4831 = vpack.c.b16 %v4283, %v4279
    %v4832 = vpack.c.b16 %v4284, %v4280
    %v4833 = vpack.c.b16 %v4289, %v4285
    %v4834 = vpack.c.b16 %v4290, %v4286
    %v4835 = vpack.c.b16 %v4291, %v4287
    %v4836 = vpack.c.b16 %v4292, %v4288
    %v4837 = vpack.c.b16 %v4297, %v4293
    %v4838 = vpack.c.b16 %v4298, %v4294
    %v4839 = vpack.c.b16 %v4299, %v4295
    %v4840 = vpack.c.b16 %v4300, %v4296
    %v4841 = vpack.c.b16 %v4305, %v4301
    %v4842 = vpack.c.b16 %v4306, %v4302
    %v4843 = vpack.c.b16 %v4307, %v4303
    %v4844 = vpack.c.b16 %v4308, %v4304
    %v4845 = vpack.c.b16 %v4313, %v4309
    %v4846 = vpack.c.b16 %v4314, %v4310
    %v4847 = vpack.c.b16 %v4315, %v4311
    %v4848 = vpack.c.b16 %v4316, %v4312
    %v4849 = vpack.c.b16 %v4321, %v4317
    %v4850 = vpack.c.b16 %v4322, %v4318
    %v4851 = vpack.c.b16 %v4323, %v4319
    %v4852 = vpack.c.b16 %v4324, %v4320
    %v4853 = vpack.c.b16 %v4329, %v4325
    %v4854 = vpack.c.b16 %v4330, %v4326
    %v4855 = vpack.c.b16 %v4331, %v4327
    %v4856 = vpack.c.b16 %v4332, %v4328
    %v4857 = vpack.c.b16 %v4337, %v4333
    %v4858 = vpack.c.b16 %v4338, %v4334
    %v4859 = vpack.c.b16 %v4339, %v4335
    %v4860 = vpack.c.b16 %v4340, %v4336
    %v4861 = vpack.c.b16 %v4345, %v4341
    %v4862 = vpack.c.b16 %v4346, %v4342
    %v4863 = vpack.c.b16 %v4347, %v4343
    %v4864 = vpack.c.b16 %v4348, %v4344
    %v4865 = vpack.c.b16 %v4353, %v4349
    %v4866 = vpack.c.b16 %v4354, %v4350
    %v4867 = vpack.c.b16 %v4355, %v4351
    %v4868 = vpack.c.b16 %v4356, %v4352
    %5381 = vmatprep.subr.bf16.mxu0 %v4386
    %5382 = vmatpush1.bf16.msra.mxu0 %v4385
    %5383 = vmatprep.subr.bf16.mxu0 %v4382
    %5384 = vmatpush1.bf16.msra.mxu0 %v4381
    %5385 = vmatprep.subr.bf16.mxu0 %v4378
    %5386 = vmatpush1.bf16.msra.mxu0 %v4377
    %5387 = vmatprep.subr.bf16.mxu0 %v4374
    %5388 = vmatpush1.bf16.msra.mxu0 %v4373
    %5389 = vmatprep.subr.bf16.mxu0 %v4370
    %5390 = vmatpush1.bf16.msra.mxu0 %v4369
    %5391 = vmatprep.subr.bf16.mxu0 %v4366
    %5392 = vmatpush1.bf16.msra.mxu0 %v4365
    %5393 = vmatprep.subr.bf16.mxu0 %v4362
    %5394 = vmatpush1.bf16.msra.mxu0 %v4361
    %5395 = vmatprep.subr.bf16.mxu0 %v4358
    %5396 = vmatpush1.bf16.msra.mxu0 %v4357
    %5397 = vmatprep.subr.bf16.mxu0 %v4418
    %5398 = vmatpush2.bf16.msra.mxu0 %v4417
    %5399 = vmatprep.subr.bf16.mxu0 %v4414
    %5400 = vmatpush2.bf16.msra.mxu0 %v4413
    %5401 = vmatprep.subr.bf16.mxu0 %v4410
    %5402 = vmatpush2.bf16.msra.mxu0 %v4409
    %5403 = vmatprep.subr.bf16.mxu0 %v4406
    %5404 = vmatpush2.bf16.msra.mxu0 %v4405
    %5405 = vmatprep.subr.bf16.mxu0 %v4402
    %5406 = vmatpush2.bf16.msra.mxu0 %v4401
    %5407 = vmatprep.subr.bf16.mxu0 %v4398
    %5408 = vmatpush2.bf16.msra.mxu0 %v4397
    %5409 = vmatprep.subr.bf16.mxu0 %v4394
    %5410 = vmatpush2.bf16.msra.mxu0 %v4393
    %5411 = vmatprep.subr.bf16.mxu0 %v4390
    %5412 = vmatpush2.bf16.msra.mxu0 %v4389
    %5413 = vmatprep.mubr.bf16.mxu0 %v2256
    %5414 = vmatmul.mubr.bf16.gmra.mxu0 %v2255
    %v5415 = vpop.f32.mrf.mxu0
    %v5416 = vadd.f32 %v2804, %v5415
    %v5417 = vpop.f32.mrf.mxu0
    %v5418 = vadd.f32 %v2808, %v5417
    %v5419 = vpop.f32.mrf.mxu0
    %v5420 = vadd.f32 %v2804, %v5419
    %v5421 = vpop.f32.mrf.mxu0
    %v5422 = vadd.f32 %v2808, %v5421
    %5423 = vmatprep.mubr.bf16.mxu0 %v2272
    %5424 = vmatmul.mubr.bf16.gmra.mxu0 %v2271
    %v5425 = vpop.f32.mrf.mxu0
    %v5426 = vadd.f32 %v2804, %v5425
    %v5427 = vpop.f32.mrf.mxu0
    %v5428 = vadd.f32 %v2808, %v5427
    %v5429 = vpop.f32.mrf.mxu0
    %v5430 = vadd.f32 %v2804, %v5429
    %v5431 = vpop.f32.mrf.mxu0
    %v5432 = vadd.f32 %v2808, %v5431
    %5433 = vdwg.mxu0
    %5434 = vmatprep.subr.bf16.mxu0 %v4450
    %5435 = vmatpush1.bf16.msra.mxu0 %v4449
    %5436 = vmatprep.subr.bf16.mxu0 %v4446
    %5437 = vmatpush1.bf16.msra.mxu0 %v4445
    %5438 = vmatprep.subr.bf16.mxu0 %v4442
    %5439 = vmatpush1.bf16.msra.mxu0 %v4441
    %5440 = vmatprep.subr.bf16.mxu0 %v4438
    %5441 = vmatpush1.bf16.msra.mxu0 %v4437
    %5442 = vmatprep.subr.bf16.mxu0 %v4434
    %5443 = vmatpush1.bf16.msra.mxu0 %v4433
    %5444 = vmatprep.subr.bf16.mxu0 %v4430
    %5445 = vmatpush1.bf16.msra.mxu0 %v4429
    %5446 = vmatprep.subr.bf16.mxu0 %v4426
    %5447 = vmatpush1.bf16.msra.mxu0 %v4425
    %5448 = vmatprep.subr.bf16.mxu0 %v4422
    %5449 = vmatpush1.bf16.msra.mxu0 %v4421
    %5450 = vmatprep.subr.bf16.mxu0 %v4482
    %5451 = vmatpush2.bf16.msra.mxu0 %v4481
    %5452 = vmatprep.subr.bf16.mxu0 %v4478
    %5453 = vmatpush2.bf16.msra.mxu0 %v4477
    %5454 = vmatprep.subr.bf16.mxu0 %v4474
    %5455 = vmatpush2.bf16.msra.mxu0 %v4473
    %5456 = vmatprep.subr.bf16.mxu0 %v4470
    %5457 = vmatpush2.bf16.msra.mxu0 %v4469
    %5458 = vmatprep.subr.bf16.mxu0 %v4466
    %5459 = vmatpush2.bf16.msra.mxu0 %v4465
    %5460 = vmatprep.subr.bf16.mxu0 %v4462
    %5461 = vmatpush2.bf16.msra.mxu0 %v4461
    %5462 = vmatprep.subr.bf16.mxu0 %v4458
    %5463 = vmatpush2.bf16.msra.mxu0 %v4457
    %5464 = vmatprep.subr.bf16.mxu0 %v4454
    %5465 = vmatpush2.bf16.msra.mxu0 %v4453
    %5466 = vmatprep.mubr.bf16.mxu0 %v2258
    %5467 = vmatmul.mubr.bf16.gmra.mxu0 %v2257
    %v5468 = vpop.f32.mrf.mxu0
    %v5469 = vadd.f32 %v5416, %v5468
    %v5470 = vpop.f32.mrf.mxu0
    %v5471 = vadd.f32 %v5418, %v5470
    %v5472 = vpop.f32.mrf.mxu0
    %v5473 = vadd.f32 %v5420, %v5472
    %v5474 = vpop.f32.mrf.mxu0
    %v5475 = vadd.f32 %v5422, %v5474
    %5476 = vmatprep.mubr.bf16.mxu0 %v2274
    %5477 = vmatmul.mubr.bf16.gmra.mxu0 %v2273
    %v5478 = vpop.f32.mrf.mxu0
    %v5479 = vadd.f32 %v5426, %v5478
    %v5480 = vpop.f32.mrf.mxu0
    %v5481 = vadd.f32 %v5428, %v5480
    %v5482 = vpop.f32.mrf.mxu0
    %v5483 = vadd.f32 %v5430, %v5482
    %v5484 = vpop.f32.mrf.mxu0
    %v5485 = vadd.f32 %v5432, %v5484
    %5486 = vdwg.mxu0
    %5487 = vmatprep.subr.bf16.mxu0 %v4514
    %5488 = vmatpush1.bf16.msra.mxu0 %v4513
    %5489 = vmatprep.subr.bf16.mxu0 %v4510
    %5490 = vmatpush1.bf16.msra.mxu0 %v4509
    %5491 = vmatprep.subr.bf16.mxu0 %v4506
    %5492 = vmatpush1.bf16.msra.mxu0 %v4505
    %5493 = vmatprep.subr.bf16.mxu0 %v4502
    %5494 = vmatpush1.bf16.msra.mxu0 %v4501
    %5495 = vmatprep.subr.bf16.mxu0 %v4498
    %5496 = vmatpush1.bf16.msra.mxu0 %v4497
    %5497 = vmatprep.subr.bf16.mxu0 %v4494
    %5498 = vmatpush1.bf16.msra.mxu0 %v4493
    %5499 = vmatprep.subr.bf16.mxu0 %v4490
    %5500 = vmatpush1.bf16.msra.mxu0 %v4489
    %5501 = vmatprep.subr.bf16.mxu0 %v4486
    %5502 = vmatpush1.bf16.msra.mxu0 %v4485
    %5503 = vmatprep.subr.bf16.mxu0 %v4546
    %5504 = vmatpush2.bf16.msra.mxu0 %v4545
    %5505 = vmatprep.subr.bf16.mxu0 %v4542
    %5506 = vmatpush2.bf16.msra.mxu0 %v4541
    %5507 = vmatprep.subr.bf16.mxu0 %v4538
    %5508 = vmatpush2.bf16.msra.mxu0 %v4537
    %5509 = vmatprep.subr.bf16.mxu0 %v4534
    %5510 = vmatpush2.bf16.msra.mxu0 %v4533
    %5511 = vmatprep.subr.bf16.mxu0 %v4530
    %5512 = vmatpush2.bf16.msra.mxu0 %v4529
    %5513 = vmatprep.subr.bf16.mxu0 %v4526
    %5514 = vmatpush2.bf16.msra.mxu0 %v4525
    %5515 = vmatprep.subr.bf16.mxu0 %v4522
    %5516 = vmatpush2.bf16.msra.mxu0 %v4521
    %5517 = vmatprep.subr.bf16.mxu0 %v4518
    %5518 = vmatpush2.bf16.msra.mxu0 %v4517
    %5519 = vmatprep.mubr.bf16.mxu0 %v2260
    %5520 = vmatmul.mubr.bf16.gmra.mxu0 %v2259
    %v5521 = vpop.f32.mrf.mxu0
    %v5522 = vadd.f32 %v5469, %v5521
    %v5523 = vpop.f32.mrf.mxu0
    %v5524 = vadd.f32 %v5471, %v5523
    %v5525 = vpop.f32.mrf.mxu0
    %v5526 = vadd.f32 %v5473, %v5525
    %v5527 = vpop.f32.mrf.mxu0
    %v5528 = vadd.f32 %v5475, %v5527
    %5529 = vmatprep.mubr.bf16.mxu0 %v2276
    %5530 = vmatmul.mubr.bf16.gmra.mxu0 %v2275
    %v5531 = vpop.f32.mrf.mxu0
    %v5532 = vadd.f32 %v5479, %v5531
    %v5533 = vpop.f32.mrf.mxu0
    %v5534 = vadd.f32 %v5481, %v5533
    %v5535 = vpop.f32.mrf.mxu0
    %v5536 = vadd.f32 %v5483, %v5535
    %v5537 = vpop.f32.mrf.mxu0
    %v5538 = vadd.f32 %v5485, %v5537
    %5539 = vdwg.mxu0
    %5540 = vmatprep.subr.bf16.mxu0 %v4578
    %5541 = vmatpush1.bf16.msra.mxu0 %v4577
    %5542 = vmatprep.subr.bf16.mxu0 %v4574
    %5543 = vmatpush1.bf16.msra.mxu0 %v4573
    %5544 = vmatprep.subr.bf16.mxu0 %v4570
    %5545 = vmatpush1.bf16.msra.mxu0 %v4569
    %5546 = vmatprep.subr.bf16.mxu0 %v4566
    %5547 = vmatpush1.bf16.msra.mxu0 %v4565
    %5548 = vmatprep.subr.bf16.mxu0 %v4562
    %5549 = vmatpush1.bf16.msra.mxu0 %v4561
    %5550 = vmatprep.subr.bf16.mxu0 %v4558
    %5551 = vmatpush1.bf16.msra.mxu0 %v4557
    %5552 = vmatprep.subr.bf16.mxu0 %v4554
    %5553 = vmatpush1.bf16.msra.mxu0 %v4553
    %5554 = vmatprep.subr.bf16.mxu0 %v4550
    %5555 = vmatpush1.bf16.msra.mxu0 %v4549
    %5556 = vmatprep.subr.bf16.mxu0 %v4610
    %5557 = vmatpush2.bf16.msra.mxu0 %v4609
    %5558 = vmatprep.subr.bf16.mxu0 %v4606
    %5559 = vmatpush2.bf16.msra.mxu0 %v4605
    %5560 = vmatprep.subr.bf16.mxu0 %v4602
    %5561 = vmatpush2.bf16.msra.mxu0 %v4601
    %5562 = vmatprep.subr.bf16.mxu0 %v4598
    %5563 = vmatpush2.bf16.msra.mxu0 %v4597
    %5564 = vmatprep.subr.bf16.mxu0 %v4594
    %5565 = vmatpush2.bf16.msra.mxu0 %v4593
    %5566 = vmatprep.subr.bf16.mxu0 %v4590
    %5567 = vmatpush2.bf16.msra.mxu0 %v4589
    %5568 = vmatprep.subr.bf16.mxu0 %v4586
    %5569 = vmatpush2.bf16.msra.mxu0 %v4585
    %5570 = vmatprep.subr.bf16.mxu0 %v4582
    %5571 = vmatpush2.bf16.msra.mxu0 %v4581
    %5572 = vmatprep.mubr.bf16.mxu0 %v2262
    %5573 = vmatmul.mubr.bf16.gmra.mxu0 %v2261
    %v5574 = vpop.f32.mrf.mxu0
    %v5575 = vadd.f32 %v5522, %v5574
    %v5576 = vpop.f32.mrf.mxu0
    %v5577 = vadd.f32 %v5524, %v5576
    %v5578 = vpop.f32.mrf.mxu0
    %v5579 = vadd.f32 %v5526, %v5578
    %v5580 = vpop.f32.mrf.mxu0
    %v5581 = vadd.f32 %v5528, %v5580
    %5582 = vmatprep.mubr.bf16.mxu0 %v2278
    %5583 = vmatmul.mubr.bf16.gmra.mxu0 %v2277
    %v5584 = vpop.f32.mrf.mxu0
    %v5585 = vadd.f32 %v5532, %v5584
    %v5586 = vpop.f32.mrf.mxu0
    %v5587 = vadd.f32 %v5534, %v5586
    %v5588 = vpop.f32.mrf.mxu0
    %v5589 = vadd.f32 %v5536, %v5588
    %v5590 = vpop.f32.mrf.mxu0
    %v5591 = vadd.f32 %v5538, %v5590
    %5592 = vdwg.mxu0
    %5593 = vmatprep.subr.bf16.mxu0 %v4642
    %5594 = vmatpush1.bf16.msra.mxu0 %v4641
    %5595 = vmatprep.subr.bf16.mxu0 %v4638
    %5596 = vmatpush1.bf16.msra.mxu0 %v4637
    %5597 = vmatprep.subr.bf16.mxu0 %v4634
    %5598 = vmatpush1.bf16.msra.mxu0 %v4633
    %5599 = vmatprep.subr.bf16.mxu0 %v4630
    %5600 = vmatpush1.bf16.msra.mxu0 %v4629
    %5601 = vmatprep.subr.bf16.mxu0 %v4626
    %5602 = vmatpush1.bf16.msra.mxu0 %v4625
    %5603 = vmatprep.subr.bf16.mxu0 %v4622
    %5604 = vmatpush1.bf16.msra.mxu0 %v4621
    %5605 = vmatprep.subr.bf16.mxu0 %v4618
    %5606 = vmatpush1.bf16.msra.mxu0 %v4617
    %5607 = vmatprep.subr.bf16.mxu0 %v4614
    %5608 = vmatpush1.bf16.msra.mxu0 %v4613
    %5609 = vmatprep.subr.bf16.mxu0 %v4674
    %5610 = vmatpush2.bf16.msra.mxu0 %v4673
    %5611 = vmatprep.subr.bf16.mxu0 %v4670
    %5612 = vmatpush2.bf16.msra.mxu0 %v4669
    %5613 = vmatprep.subr.bf16.mxu0 %v4666
    %5614 = vmatpush2.bf16.msra.mxu0 %v4665
    %5615 = vmatprep.subr.bf16.mxu0 %v4662
    %5616 = vmatpush2.bf16.msra.mxu0 %v4661
    %5617 = vmatprep.subr.bf16.mxu0 %v4658
    %5618 = vmatpush2.bf16.msra.mxu0 %v4657
    %5619 = vmatprep.subr.bf16.mxu0 %v4654
    %5620 = vmatpush2.bf16.msra.mxu0 %v4653
    %5621 = vmatprep.subr.bf16.mxu0 %v4650
    %5622 = vmatpush2.bf16.msra.mxu0 %v4649
    %5623 = vmatprep.subr.bf16.mxu0 %v4646
    %5624 = vmatpush2.bf16.msra.mxu0 %v4645
    %5625 = vmatprep.mubr.bf16.mxu0 %v2264
    %5626 = vmatmul.mubr.bf16.gmra.mxu0 %v2263
    %v5627 = vpop.f32.mrf.mxu0
    %v5628 = vadd.f32 %v5575, %v5627
    %v5629 = vpop.f32.mrf.mxu0
    %v5630 = vadd.f32 %v5577, %v5629
    %v5631 = vpop.f32.mrf.mxu0
    %v5632 = vadd.f32 %v5579, %v5631
    %v5633 = vpop.f32.mrf.mxu0
    %v5634 = vadd.f32 %v5581, %v5633
    %5635 = vmatprep.mubr.bf16.mxu0 %v2280
    %5636 = vmatmul.mubr.bf16.gmra.mxu0 %v2279
    %v5637 = vpop.f32.mrf.mxu0
    %v5638 = vadd.f32 %v5585, %v5637
    %v5639 = vpop.f32.mrf.mxu0
    %v5640 = vadd.f32 %v5587, %v5639
    %v5641 = vpop.f32.mrf.mxu0
    %v5642 = vadd.f32 %v5589, %v5641
    %v5643 = vpop.f32.mrf.mxu0
    %v5644 = vadd.f32 %v5591, %v5643
    %5645 = vdwg.mxu0
    %5646 = vmatprep.subr.bf16.mxu0 %v4706
    %5647 = vmatpush1.bf16.msra.mxu0 %v4705
    %5648 = vmatprep.subr.bf16.mxu0 %v4702
    %5649 = vmatpush1.bf16.msra.mxu0 %v4701
    %5650 = vmatprep.subr.bf16.mxu0 %v4698
    %5651 = vmatpush1.bf16.msra.mxu0 %v4697
    %5652 = vmatprep.subr.bf16.mxu0 %v4694
    %5653 = vmatpush1.bf16.msra.mxu0 %v4693
    %5654 = vmatprep.subr.bf16.mxu0 %v4690
    %5655 = vmatpush1.bf16.msra.mxu0 %v4689
    %5656 = vmatprep.subr.bf16.mxu0 %v4686
    %5657 = vmatpush1.bf16.msra.mxu0 %v4685
    %5658 = vmatprep.subr.bf16.mxu0 %v4682
    %5659 = vmatpush1.bf16.msra.mxu0 %v4681
    %5660 = vmatprep.subr.bf16.mxu0 %v4678
    %5661 = vmatpush1.bf16.msra.mxu0 %v4677
    %5662 = vmatprep.subr.bf16.mxu0 %v4738
    %5663 = vmatpush2.bf16.msra.mxu0 %v4737
    %5664 = vmatprep.subr.bf16.mxu0 %v4734
    %5665 = vmatpush2.bf16.msra.mxu0 %v4733
    %5666 = vmatprep.subr.bf16.mxu0 %v4730
    %5667 = vmatpush2.bf16.msra.mxu0 %v4729
    %5668 = vmatprep.subr.bf16.mxu0 %v4726
    %5669 = vmatpush2.bf16.msra.mxu0 %v4725
    %5670 = vmatprep.subr.bf16.mxu0 %v4722
    %5671 = vmatpush2.bf16.msra.mxu0 %v4721
    %5672 = vmatprep.subr.bf16.mxu0 %v4718
    %5673 = vmatpush2.bf16.msra.mxu0 %v4717
    %5674 = vmatprep.subr.bf16.mxu0 %v4714
    %5675 = vmatpush2.bf16.msra.mxu0 %v4713
    %5676 = vmatprep.subr.bf16.mxu0 %v4710
    %5677 = vmatpush2.bf16.msra.mxu0 %v4709
    %5678 = vmatprep.mubr.bf16.mxu0 %v2266
    %5679 = vmatmul.mubr.bf16.gmra.mxu0 %v2265
    %v5680 = vpop.f32.mrf.mxu0
    %v5681 = vadd.f32 %v5628, %v5680
    %v5682 = vpop.f32.mrf.mxu0
    %v5683 = vadd.f32 %v5630, %v5682
    %v5684 = vpop.f32.mrf.mxu0
    %v5685 = vadd.f32 %v5632, %v5684
    %v5686 = vpop.f32.mrf.mxu0
    %v5687 = vadd.f32 %v5634, %v5686
    %5688 = vmatprep.mubr.bf16.mxu0 %v2282
    %5689 = vmatmul.mubr.bf16.gmra.mxu0 %v2281
    %v5690 = vpop.f32.mrf.mxu0
    %v5691 = vadd.f32 %v5638, %v5690
    %v5692 = vpop.f32.mrf.mxu0
    %v5693 = vadd.f32 %v5640, %v5692
    %v5694 = vpop.f32.mrf.mxu0
    %v5695 = vadd.f32 %v5642, %v5694
    %v5696 = vpop.f32.mrf.mxu0
    %v5697 = vadd.f32 %v5644, %v5696
    %5698 = vdwg.mxu0
    %5699 = vmatprep.subr.bf16.mxu0 %v4770
    %5700 = vmatpush1.bf16.msra.mxu0 %v4769
    %5701 = vmatprep.subr.bf16.mxu0 %v4766
    %5702 = vmatpush1.bf16.msra.mxu0 %v4765
    %5703 = vmatprep.subr.bf16.mxu0 %v4762
    %5704 = vmatpush1.bf16.msra.mxu0 %v4761
    %5705 = vmatprep.subr.bf16.mxu0 %v4758
    %5706 = vmatpush1.bf16.msra.mxu0 %v4757
    %5707 = vmatprep.subr.bf16.mxu0 %v4754
    %5708 = vmatpush1.bf16.msra.mxu0 %v4753
    %5709 = vmatprep.subr.bf16.mxu0 %v4750
    %5710 = vmatpush1.bf16.msra.mxu0 %v4749
    %5711 = vmatprep.subr.bf16.mxu0 %v4746
    %5712 = vmatpush1.bf16.msra.mxu0 %v4745
    %5713 = vmatprep.subr.bf16.mxu0 %v4742
    %5714 = vmatpush1.bf16.msra.mxu0 %v4741
    %5715 = vmatprep.subr.bf16.mxu0 %v4802
    %5716 = vmatpush2.bf16.msra.mxu0 %v4801
    %5717 = vmatprep.subr.bf16.mxu0 %v4798
    %5718 = vmatpush2.bf16.msra.mxu0 %v4797
    %5719 = vmatprep.subr.bf16.mxu0 %v4794
    %5720 = vmatpush2.bf16.msra.mxu0 %v4793
    %5721 = vmatprep.subr.bf16.mxu0 %v4790
    %5722 = vmatpush2.bf16.msra.mxu0 %v4789
    %5723 = vmatprep.subr.bf16.mxu0 %v4786
    %5724 = vmatpush2.bf16.msra.mxu0 %v4785
    %5725 = vmatprep.subr.bf16.mxu0 %v4782
    %5726 = vmatpush2.bf16.msra.mxu0 %v4781
    %5727 = vmatprep.subr.bf16.mxu0 %v4778
    %5728 = vmatpush2.bf16.msra.mxu0 %v4777
    %5729 = vmatprep.subr.bf16.mxu0 %v4774
    %5730 = vmatpush2.bf16.msra.mxu0 %v4773
    %5731 = vmatprep.mubr.bf16.mxu0 %v2268
    %5732 = vmatmul.mubr.bf16.gmra.mxu0 %v2267
    %v5733 = vpop.f32.mrf.mxu0
    %v5734 = vadd.f32 %v5681, %v5733
    %v5735 = vpop.f32.mrf.mxu0
    %v5736 = vadd.f32 %v5683, %v5735
    %v5737 = vpop.f32.mrf.mxu0
    %v5738 = vadd.f32 %v5685, %v5737
    %v5739 = vpop.f32.mrf.mxu0
    %v5740 = vadd.f32 %v5687, %v5739
    %5741 = vmatprep.mubr.bf16.mxu0 %v2284
    %5742 = vmatmul.mubr.bf16.gmra.mxu0 %v2283
    %v5743 = vpop.f32.mrf.mxu0
    %v5744 = vadd.f32 %v5691, %v5743
    %v5745 = vpop.f32.mrf.mxu0
    %v5746 = vadd.f32 %v5693, %v5745
    %v5747 = vpop.f32.mrf.mxu0
    %v5748 = vadd.f32 %v5695, %v5747
    %v5749 = vpop.f32.mrf.mxu0
    %v5750 = vadd.f32 %v5697, %v5749
    %5751 = vdwg.mxu0
    %5752 = vmatprep.subr.bf16.mxu0 %v4834
    %5753 = vmatpush1.bf16.msra.mxu0 %v4833
    %5754 = vmatprep.subr.bf16.mxu0 %v4830
    %5755 = vmatpush1.bf16.msra.mxu0 %v4829
    %5756 = vmatprep.subr.bf16.mxu0 %v4826
    %5757 = vmatpush1.bf16.msra.mxu0 %v4825
    %5758 = vmatprep.subr.bf16.mxu0 %v4822
    %5759 = vmatpush1.bf16.msra.mxu0 %v4821
    %5760 = vmatprep.subr.bf16.mxu0 %v4818
    %5761 = vmatpush1.bf16.msra.mxu0 %v4817
    %5762 = vmatprep.subr.bf16.mxu0 %v4814
    %5763 = vmatpush1.bf16.msra.mxu0 %v4813
    %5764 = vmatprep.subr.bf16.mxu0 %v4810
    %5765 = vmatpush1.bf16.msra.mxu0 %v4809
    %5766 = vmatprep.subr.bf16.mxu0 %v4806
    %5767 = vmatpush1.bf16.msra.mxu0 %v4805
    %5768 = vmatprep.subr.bf16.mxu0 %v4866
    %5769 = vmatpush2.bf16.msra.mxu0 %v4865
    %5770 = vmatprep.subr.bf16.mxu0 %v4862
    %5771 = vmatpush2.bf16.msra.mxu0 %v4861
    %5772 = vmatprep.subr.bf16.mxu0 %v4858
    %5773 = vmatpush2.bf16.msra.mxu0 %v4857
    %5774 = vmatprep.subr.bf16.mxu0 %v4854
    %5775 = vmatpush2.bf16.msra.mxu0 %v4853
    %5776 = vmatprep.subr.bf16.mxu0 %v4850
    %5777 = vmatpush2.bf16.msra.mxu0 %v4849
    %5778 = vmatprep.subr.bf16.mxu0 %v4846
    %5779 = vmatpush2.bf16.msra.mxu0 %v4845
    %5780 = vmatprep.subr.bf16.mxu0 %v4842
    %5781 = vmatpush2.bf16.msra.mxu0 %v4841
    %5782 = vmatprep.subr.bf16.mxu0 %v4838
    %5783 = vmatpush2.bf16.msra.mxu0 %v4837
    %5784 = vmatprep.mubr.bf16.mxu0 %v2270
    %5785 = vmatmul.mubr.bf16.gmra.mxu0 %v2269
    %v5786 = vpop.f32.mrf.mxu0
    %v5787 = vadd.f32 %v5734, %v5786
    %v5788 = vpop.f32.mrf.mxu0
    %v5789 = vadd.f32 %v5736, %v5788
    %v5790 = vpop.f32.mrf.mxu0
    %v5791 = vadd.f32 %v5738, %v5790
    %v5792 = vpop.f32.mrf.mxu0
    %v5793 = vadd.f32 %v5740, %v5792
    %5794 = vmatprep.mubr.bf16.mxu0 %v2286
    %5795 = vmatmul.mubr.bf16.gmra.mxu0 %v2285
    %v5796 = vpop.f32.mrf.mxu0
    %v5797 = vadd.f32 %v5744, %v5796
    %v5798 = vpop.f32.mrf.mxu0
    %v5799 = vadd.f32 %v5746, %v5798
    %v5800 = vpop.f32.mrf.mxu0
    %v5801 = vadd.f32 %v5748, %v5800
    %v5802 = vpop.f32.mrf.mxu0
    %v5803 = vadd.f32 %v5750, %v5802
    %5804 = vdwg.mxu0
    %5805 = vmatprep.subr.bf16.mxu0 %v4388
    %5806 = vmatpush1.bf16.msra.mxu0 %v4387
    %5807 = vmatprep.subr.bf16.mxu0 %v4384
    %5808 = vmatpush1.bf16.msra.mxu0 %v4383
    %5809 = vmatprep.subr.bf16.mxu0 %v4380
    %5810 = vmatpush1.bf16.msra.mxu0 %v4379
    %5811 = vmatprep.subr.bf16.mxu0 %v4376
    %5812 = vmatpush1.bf16.msra.mxu0 %v4375
    %5813 = vmatprep.subr.bf16.mxu0 %v4372
    %5814 = vmatpush1.bf16.msra.mxu0 %v4371
    %5815 = vmatprep.subr.bf16.mxu0 %v4368
    %5816 = vmatpush1.bf16.msra.mxu0 %v4367
    %5817 = vmatprep.subr.bf16.mxu0 %v4364
    %5818 = vmatpush1.bf16.msra.mxu0 %v4363
    %5819 = vmatprep.subr.bf16.mxu0 %v4360
    %5820 = vmatpush1.bf16.msra.mxu0 %v4359
    %5821 = vmatprep.subr.bf16.mxu0 %v4420
    %5822 = vmatpush2.bf16.msra.mxu0 %v4419
    %5823 = vmatprep.subr.bf16.mxu0 %v4416
    %5824 = vmatpush2.bf16.msra.mxu0 %v4415
    %5825 = vmatprep.subr.bf16.mxu0 %v4412
    %5826 = vmatpush2.bf16.msra.mxu0 %v4411
    %5827 = vmatprep.subr.bf16.mxu0 %v4408
    %5828 = vmatpush2.bf16.msra.mxu0 %v4407
    %5829 = vmatprep.subr.bf16.mxu0 %v4404
    %5830 = vmatpush2.bf16.msra.mxu0 %v4403
    %5831 = vmatprep.subr.bf16.mxu0 %v4400
    %5832 = vmatpush2.bf16.msra.mxu0 %v4399
    %5833 = vmatprep.subr.bf16.mxu0 %v4396
    %5834 = vmatpush2.bf16.msra.mxu0 %v4395
    %5835 = vmatprep.subr.bf16.mxu0 %v4392
    %5836 = vmatpush2.bf16.msra.mxu0 %v4391
    %5837 = vmatprep.mubr.bf16.mxu0 %v2256
    %5838 = vmatmul.mubr.bf16.gmra.mxu0 %v2255
    %v5839 = vpop.f32.mrf.mxu0
    %v5840 = vadd.f32 %v2812, %v5839
    %v5841 = vpop.f32.mrf.mxu0
    %v5842 = vadd.f32 %v2816, %v5841
    %v5843 = vpop.f32.mrf.mxu0
    %v5844 = vadd.f32 %v2812, %v5843
    %v5845 = vpop.f32.mrf.mxu0
    %v5846 = vadd.f32 %v2816, %v5845
    %5847 = vmatprep.mubr.bf16.mxu0 %v2272
    %5848 = vmatmul.mubr.bf16.gmra.mxu0 %v2271
    %v5849 = vpop.f32.mrf.mxu0
    %v5850 = vadd.f32 %v2812, %v5849
    %v5851 = vpop.f32.mrf.mxu0
    %v5852 = vadd.f32 %v2816, %v5851
    %v5853 = vpop.f32.mrf.mxu0
    %v5854 = vadd.f32 %v2812, %v5853
    %v5855 = vpop.f32.mrf.mxu0
    %v5856 = vadd.f32 %v2816, %v5855
    %5857 = vdwg.mxu0
    %5858 = vmatprep.subr.bf16.mxu0 %v4452
    %5859 = vmatpush1.bf16.msra.mxu0 %v4451
    %5860 = vmatprep.subr.bf16.mxu0 %v4448
    %5861 = vmatpush1.bf16.msra.mxu0 %v4447
    %5862 = vmatprep.subr.bf16.mxu0 %v4444
    %5863 = vmatpush1.bf16.msra.mxu0 %v4443
    %5864 = vmatprep.subr.bf16.mxu0 %v4440
    %5865 = vmatpush1.bf16.msra.mxu0 %v4439
    %5866 = vmatprep.subr.bf16.mxu0 %v4436
    %5867 = vmatpush1.bf16.msra.mxu0 %v4435
    %5868 = vmatprep.subr.bf16.mxu0 %v4432
    %5869 = vmatpush1.bf16.msra.mxu0 %v4431
    %5870 = vmatprep.subr.bf16.mxu0 %v4428
    %5871 = vmatpush1.bf16.msra.mxu0 %v4427
    %5872 = vmatprep.subr.bf16.mxu0 %v4424
    %5873 = vmatpush1.bf16.msra.mxu0 %v4423
    %5874 = vmatprep.subr.bf16.mxu0 %v4484
    %5875 = vmatpush2.bf16.msra.mxu0 %v4483
    %5876 = vmatprep.subr.bf16.mxu0 %v4480
    %5877 = vmatpush2.bf16.msra.mxu0 %v4479
    %5878 = vmatprep.subr.bf16.mxu0 %v4476
    %5879 = vmatpush2.bf16.msra.mxu0 %v4475
    %5880 = vmatprep.subr.bf16.mxu0 %v4472
    %5881 = vmatpush2.bf16.msra.mxu0 %v4471
    %5882 = vmatprep.subr.bf16.mxu0 %v4468
    %5883 = vmatpush2.bf16.msra.mxu0 %v4467
    %5884 = vmatprep.subr.bf16.mxu0 %v4464
    %5885 = vmatpush2.bf16.msra.mxu0 %v4463
    %5886 = vmatprep.subr.bf16.mxu0 %v4460
    %5887 = vmatpush2.bf16.msra.mxu0 %v4459
    %5888 = vmatprep.subr.bf16.mxu0 %v4456
    %5889 = vmatpush2.bf16.msra.mxu0 %v4455
    %5890 = vmatprep.mubr.bf16.mxu0 %v2258
    %5891 = vmatmul.mubr.bf16.gmra.mxu0 %v2257
    %v5892 = vpop.f32.mrf.mxu0
    %v5893 = vadd.f32 %v5840, %v5892
    %v5894 = vpop.f32.mrf.mxu0
    %v5895 = vadd.f32 %v5842, %v5894
    %v5896 = vpop.f32.mrf.mxu0
    %v5897 = vadd.f32 %v5844, %v5896
    %v5898 = vpop.f32.mrf.mxu0
    %v5899 = vadd.f32 %v5846, %v5898
    %5900 = vmatprep.mubr.bf16.mxu0 %v2274
    %5901 = vmatmul.mubr.bf16.gmra.mxu0 %v2273
    %v5902 = vpop.f32.mrf.mxu0
    %v5903 = vadd.f32 %v5850, %v5902
    %v5904 = vpop.f32.mrf.mxu0
    %v5905 = vadd.f32 %v5852, %v5904
    %v5906 = vpop.f32.mrf.mxu0
    %v5907 = vadd.f32 %v5854, %v5906
    %v5908 = vpop.f32.mrf.mxu0
    %v5909 = vadd.f32 %v5856, %v5908
    %5910 = vdwg.mxu0
    %5911 = vmatprep.subr.bf16.mxu0 %v4516
    %5912 = vmatpush1.bf16.msra.mxu0 %v4515
    %5913 = vmatprep.subr.bf16.mxu0 %v4512
    %5914 = vmatpush1.bf16.msra.mxu0 %v4511
    %5915 = vmatprep.subr.bf16.mxu0 %v4508
    %5916 = vmatpush1.bf16.msra.mxu0 %v4507
    %5917 = vmatprep.subr.bf16.mxu0 %v4504
    %5918 = vmatpush1.bf16.msra.mxu0 %v4503
    %5919 = vmatprep.subr.bf16.mxu0 %v4500
    %5920 = vmatpush1.bf16.msra.mxu0 %v4499
    %5921 = vmatprep.subr.bf16.mxu0 %v4496
    %5922 = vmatpush1.bf16.msra.mxu0 %v4495
    %5923 = vmatprep.subr.bf16.mxu0 %v4492
    %5924 = vmatpush1.bf16.msra.mxu0 %v4491
    %5925 = vmatprep.subr.bf16.mxu0 %v4488
    %5926 = vmatpush1.bf16.msra.mxu0 %v4487
    %5927 = vmatprep.subr.bf16.mxu0 %v4548
    %5928 = vmatpush2.bf16.msra.mxu0 %v4547
    %5929 = vmatprep.subr.bf16.mxu0 %v4544
    %5930 = vmatpush2.bf16.msra.mxu0 %v4543
    %5931 = vmatprep.subr.bf16.mxu0 %v4540
    %5932 = vmatpush2.bf16.msra.mxu0 %v4539
    %5933 = vmatprep.subr.bf16.mxu0 %v4536
    %5934 = vmatpush2.bf16.msra.mxu0 %v4535
    %5935 = vmatprep.subr.bf16.mxu0 %v4532
    %5936 = vmatpush2.bf16.msra.mxu0 %v4531
    %5937 = vmatprep.subr.bf16.mxu0 %v4528
    %5938 = vmatpush2.bf16.msra.mxu0 %v4527
    %5939 = vmatprep.subr.bf16.mxu0 %v4524
    %5940 = vmatpush2.bf16.msra.mxu0 %v4523
    %5941 = vmatprep.subr.bf16.mxu0 %v4520
    %5942 = vmatpush2.bf16.msra.mxu0 %v4519
    %5943 = vmatprep.mubr.bf16.mxu0 %v2260
    %5944 = vmatmul.mubr.bf16.gmra.mxu0 %v2259
    %v5945 = vpop.f32.mrf.mxu0
    %v5946 = vadd.f32 %v5893, %v5945
    %v5947 = vpop.f32.mrf.mxu0
    %v5948 = vadd.f32 %v5895, %v5947
    %v5949 = vpop.f32.mrf.mxu0
    %v5950 = vadd.f32 %v5897, %v5949
    %v5951 = vpop.f32.mrf.mxu0
    %v5952 = vadd.f32 %v5899, %v5951
    %5953 = vmatprep.mubr.bf16.mxu0 %v2276
    %5954 = vmatmul.mubr.bf16.gmra.mxu0 %v2275
    %v5955 = vpop.f32.mrf.mxu0
    %v5956 = vadd.f32 %v5903, %v5955
    %v5957 = vpop.f32.mrf.mxu0
    %v5958 = vadd.f32 %v5905, %v5957
    %v5959 = vpop.f32.mrf.mxu0
    %v5960 = vadd.f32 %v5907, %v5959
    %v5961 = vpop.f32.mrf.mxu0
    %v5962 = vadd.f32 %v5909, %v5961
    %5963 = vdwg.mxu0
    %5964 = vmatprep.subr.bf16.mxu0 %v4580
    %5965 = vmatpush1.bf16.msra.mxu0 %v4579
    %5966 = vmatprep.subr.bf16.mxu0 %v4576
    %5967 = vmatpush1.bf16.msra.mxu0 %v4575
    %5968 = vmatprep.subr.bf16.mxu0 %v4572
    %5969 = vmatpush1.bf16.msra.mxu0 %v4571
    %5970 = vmatprep.subr.bf16.mxu0 %v4568
    %5971 = vmatpush1.bf16.msra.mxu0 %v4567
    %5972 = vmatprep.subr.bf16.mxu0 %v4564
    %5973 = vmatpush1.bf16.msra.mxu0 %v4563
    %5974 = vmatprep.subr.bf16.mxu0 %v4560
    %5975 = vmatpush1.bf16.msra.mxu0 %v4559
    %5976 = vmatprep.subr.bf16.mxu0 %v4556
    %5977 = vmatpush1.bf16.msra.mxu0 %v4555
    %5978 = vmatprep.subr.bf16.mxu0 %v4552
    %5979 = vmatpush1.bf16.msra.mxu0 %v4551
    %5980 = vmatprep.subr.bf16.mxu0 %v4612
    %5981 = vmatpush2.bf16.msra.mxu0 %v4611
    %5982 = vmatprep.subr.bf16.mxu0 %v4608
    %5983 = vmatpush2.bf16.msra.mxu0 %v4607
    %5984 = vmatprep.subr.bf16.mxu0 %v4604
    %5985 = vmatpush2.bf16.msra.mxu0 %v4603
    %5986 = vmatprep.subr.bf16.mxu0 %v4600
    %5987 = vmatpush2.bf16.msra.mxu0 %v4599
    %5988 = vmatprep.subr.bf16.mxu0 %v4596
    %5989 = vmatpush2.bf16.msra.mxu0 %v4595
    %5990 = vmatprep.subr.bf16.mxu0 %v4592
    %5991 = vmatpush2.bf16.msra.mxu0 %v4591
    %5992 = vmatprep.subr.bf16.mxu0 %v4588
    %5993 = vmatpush2.bf16.msra.mxu0 %v4587
    %5994 = vmatprep.subr.bf16.mxu0 %v4584
    %5995 = vmatpush2.bf16.msra.mxu0 %v4583
    %5996 = vmatprep.mubr.bf16.mxu0 %v2262
    %5997 = vmatmul.mubr.bf16.gmra.mxu0 %v2261
    %v5998 = vpop.f32.mrf.mxu0
    %v5999 = vadd.f32 %v5946, %v5998
    %v6000 = vpop.f32.mrf.mxu0
    %v6001 = vadd.f32 %v5948, %v6000
    %v6002 = vpop.f32.mrf.mxu0
    %v6003 = vadd.f32 %v5950, %v6002
    %v6004 = vpop.f32.mrf.mxu0
    %v6005 = vadd.f32 %v5952, %v6004
    %6006 = vmatprep.mubr.bf16.mxu0 %v2278
    %6007 = vmatmul.mubr.bf16.gmra.mxu0 %v2277
    %v6008 = vpop.f32.mrf.mxu0
    %v6009 = vadd.f32 %v5956, %v6008
    %v6010 = vpop.f32.mrf.mxu0
    %v6011 = vadd.f32 %v5958, %v6010
    %v6012 = vpop.f32.mrf.mxu0
    %v6013 = vadd.f32 %v5960, %v6012
    %v6014 = vpop.f32.mrf.mxu0
    %v6015 = vadd.f32 %v5962, %v6014
    %6016 = vdwg.mxu0
    %6017 = vmatprep.subr.bf16.mxu0 %v4644
    %6018 = vmatpush1.bf16.msra.mxu0 %v4643
    %6019 = vmatprep.subr.bf16.mxu0 %v4640
    %6020 = vmatpush1.bf16.msra.mxu0 %v4639
    %6021 = vmatprep.subr.bf16.mxu0 %v4636
    %6022 = vmatpush1.bf16.msra.mxu0 %v4635
    %6023 = vmatprep.subr.bf16.mxu0 %v4632
    %6024 = vmatpush1.bf16.msra.mxu0 %v4631
    %6025 = vmatprep.subr.bf16.mxu0 %v4628
    %6026 = vmatpush1.bf16.msra.mxu0 %v4627
    %6027 = vmatprep.subr.bf16.mxu0 %v4624
    %6028 = vmatpush1.bf16.msra.mxu0 %v4623
    %6029 = vmatprep.subr.bf16.mxu0 %v4620
    %6030 = vmatpush1.bf16.msra.mxu0 %v4619
    %6031 = vmatprep.subr.bf16.mxu0 %v4616
    %6032 = vmatpush1.bf16.msra.mxu0 %v4615
    %6033 = vmatprep.subr.bf16.mxu0 %v4676
    %6034 = vmatpush2.bf16.msra.mxu0 %v4675
    %6035 = vmatprep.subr.bf16.mxu0 %v4672
    %6036 = vmatpush2.bf16.msra.mxu0 %v4671
    %6037 = vmatprep.subr.bf16.mxu0 %v4668
    %6038 = vmatpush2.bf16.msra.mxu0 %v4667
    %6039 = vmatprep.subr.bf16.mxu0 %v4664
    %6040 = vmatpush2.bf16.msra.mxu0 %v4663
    %6041 = vmatprep.subr.bf16.mxu0 %v4660
    %6042 = vmatpush2.bf16.msra.mxu0 %v4659
    %6043 = vmatprep.subr.bf16.mxu0 %v4656
    %6044 = vmatpush2.bf16.msra.mxu0 %v4655
    %6045 = vmatprep.subr.bf16.mxu0 %v4652
    %6046 = vmatpush2.bf16.msra.mxu0 %v4651
    %6047 = vmatprep.subr.bf16.mxu0 %v4648
    %6048 = vmatpush2.bf16.msra.mxu0 %v4647
    %6049 = vmatprep.mubr.bf16.mxu0 %v2264
    %6050 = vmatmul.mubr.bf16.gmra.mxu0 %v2263
    %v6051 = vpop.f32.mrf.mxu0
    %v6052 = vadd.f32 %v5999, %v6051
    %v6053 = vpop.f32.mrf.mxu0
    %v6054 = vadd.f32 %v6001, %v6053
    %v6055 = vpop.f32.mrf.mxu0
    %v6056 = vadd.f32 %v6003, %v6055
    %v6057 = vpop.f32.mrf.mxu0
    %v6058 = vadd.f32 %v6005, %v6057
    %6059 = vmatprep.mubr.bf16.mxu0 %v2280
    %6060 = vmatmul.mubr.bf16.gmra.mxu0 %v2279
    %v6061 = vpop.f32.mrf.mxu0
    %v6062 = vadd.f32 %v6009, %v6061
    %v6063 = vpop.f32.mrf.mxu0
    %v6064 = vadd.f32 %v6011, %v6063
    %v6065 = vpop.f32.mrf.mxu0
    %v6066 = vadd.f32 %v6013, %v6065
    %v6067 = vpop.f32.mrf.mxu0
    %v6068 = vadd.f32 %v6015, %v6067
    %6069 = vdwg.mxu0
    %6070 = vmatprep.subr.bf16.mxu0 %v4708
    %6071 = vmatpush1.bf16.msra.mxu0 %v4707
    %6072 = vmatprep.subr.bf16.mxu0 %v4704
    %6073 = vmatpush1.bf16.msra.mxu0 %v4703
    %6074 = vmatprep.subr.bf16.mxu0 %v4700
    %6075 = vmatpush1.bf16.msra.mxu0 %v4699
    %6076 = vmatprep.subr.bf16.mxu0 %v4696
    %6077 = vmatpush1.bf16.msra.mxu0 %v4695
    %6078 = vmatprep.subr.bf16.mxu0 %v4692
    %6079 = vmatpush1.bf16.msra.mxu0 %v4691
    %6080 = vmatprep.subr.bf16.mxu0 %v4688
    %6081 = vmatpush1.bf16.msra.mxu0 %v4687
    %6082 = vmatprep.subr.bf16.mxu0 %v4684
    %6083 = vmatpush1.bf16.msra.mxu0 %v4683
    %6084 = vmatprep.subr.bf16.mxu0 %v4680
    %6085 = vmatpush1.bf16.msra.mxu0 %v4679
    %6086 = vmatprep.subr.bf16.mxu0 %v4740
    %6087 = vmatpush2.bf16.msra.mxu0 %v4739
    %6088 = vmatprep.subr.bf16.mxu0 %v4736
    %6089 = vmatpush2.bf16.msra.mxu0 %v4735
    %6090 = vmatprep.subr.bf16.mxu0 %v4732
    %6091 = vmatpush2.bf16.msra.mxu0 %v4731
    %6092 = vmatprep.subr.bf16.mxu0 %v4728
    %6093 = vmatpush2.bf16.msra.mxu0 %v4727
    %6094 = vmatprep.subr.bf16.mxu0 %v4724
    %6095 = vmatpush2.bf16.msra.mxu0 %v4723
    %6096 = vmatprep.subr.bf16.mxu0 %v4720
    %6097 = vmatpush2.bf16.msra.mxu0 %v4719
    %6098 = vmatprep.subr.bf16.mxu0 %v4716
    %6099 = vmatpush2.bf16.msra.mxu0 %v4715
    %6100 = vmatprep.subr.bf16.mxu0 %v4712
    %6101 = vmatpush2.bf16.msra.mxu0 %v4711
    %6102 = vmatprep.mubr.bf16.mxu0 %v2266
    %6103 = vmatmul.mubr.bf16.gmra.mxu0 %v2265
    %v6104 = vpop.f32.mrf.mxu0
    %v6105 = vadd.f32 %v6052, %v6104
    %v6106 = vpop.f32.mrf.mxu0
    %v6107 = vadd.f32 %v6054, %v6106
    %v6108 = vpop.f32.mrf.mxu0
    %v6109 = vadd.f32 %v6056, %v6108
    %v6110 = vpop.f32.mrf.mxu0
    %v6111 = vadd.f32 %v6058, %v6110
    %6112 = vmatprep.mubr.bf16.mxu0 %v2282
    %6113 = vmatmul.mubr.bf16.gmra.mxu0 %v2281
    %v6114 = vpop.f32.mrf.mxu0
    %v6115 = vadd.f32 %v6062, %v6114
    %v6116 = vpop.f32.mrf.mxu0
    %v6117 = vadd.f32 %v6064, %v6116
    %v6118 = vpop.f32.mrf.mxu0
    %v6119 = vadd.f32 %v6066, %v6118
    %v6120 = vpop.f32.mrf.mxu0
    %v6121 = vadd.f32 %v6068, %v6120
    %6122 = vdwg.mxu0
    %6123 = vmatprep.subr.bf16.mxu0 %v4772
    %6124 = vmatpush1.bf16.msra.mxu0 %v4771
    %6125 = vmatprep.subr.bf16.mxu0 %v4768
    %6126 = vmatpush1.bf16.msra.mxu0 %v4767
    %6127 = vmatprep.subr.bf16.mxu0 %v4764
    %6128 = vmatpush1.bf16.msra.mxu0 %v4763
    %6129 = vmatprep.subr.bf16.mxu0 %v4760
    %6130 = vmatpush1.bf16.msra.mxu0 %v4759
    %6131 = vmatprep.subr.bf16.mxu0 %v4756
    %6132 = vmatpush1.bf16.msra.mxu0 %v4755
    %6133 = vmatprep.subr.bf16.mxu0 %v4752
    %6134 = vmatpush1.bf16.msra.mxu0 %v4751
    %6135 = vmatprep.subr.bf16.mxu0 %v4748
    %6136 = vmatpush1.bf16.msra.mxu0 %v4747
    %6137 = vmatprep.subr.bf16.mxu0 %v4744
    %6138 = vmatpush1.bf16.msra.mxu0 %v4743
    %6139 = vmatprep.subr.bf16.mxu0 %v4804
    %6140 = vmatpush2.bf16.msra.mxu0 %v4803
    %6141 = vmatprep.subr.bf16.mxu0 %v4800
    %6142 = vmatpush2.bf16.msra.mxu0 %v4799
    %6143 = vmatprep.subr.bf16.mxu0 %v4796
    %6144 = vmatpush2.bf16.msra.mxu0 %v4795
    %6145 = vmatprep.subr.bf16.mxu0 %v4792
    %6146 = vmatpush2.bf16.msra.mxu0 %v4791
    %6147 = vmatprep.subr.bf16.mxu0 %v4788
    %6148 = vmatpush2.bf16.msra.mxu0 %v4787
    %6149 = vmatprep.subr.bf16.mxu0 %v4784
    %6150 = vmatpush2.bf16.msra.mxu0 %v4783
    %6151 = vmatprep.subr.bf16.mxu0 %v4780
    %6152 = vmatpush2.bf16.msra.mxu0 %v4779
    %6153 = vmatprep.subr.bf16.mxu0 %v4776
    %6154 = vmatpush2.bf16.msra.mxu0 %v4775
    %6155 = vmatprep.mubr.bf16.mxu0 %v2268
    %6156 = vmatmul.mubr.bf16.gmra.mxu0 %v2267
    %v6157 = vpop.f32.mrf.mxu0
    %v6158 = vadd.f32 %v6105, %v6157
    %v6159 = vpop.f32.mrf.mxu0
    %v6160 = vadd.f32 %v6107, %v6159
    %v6161 = vpop.f32.mrf.mxu0
    %v6162 = vadd.f32 %v6109, %v6161
    %v6163 = vpop.f32.mrf.mxu0
    %v6164 = vadd.f32 %v6111, %v6163
    %6165 = vmatprep.mubr.bf16.mxu0 %v2284
    %6166 = vmatmul.mubr.bf16.gmra.mxu0 %v2283
    %v6167 = vpop.f32.mrf.mxu0
    %v6168 = vadd.f32 %v6115, %v6167
    %v6169 = vpop.f32.mrf.mxu0
    %v6170 = vadd.f32 %v6117, %v6169
    %v6171 = vpop.f32.mrf.mxu0
    %v6172 = vadd.f32 %v6119, %v6171
    %v6173 = vpop.f32.mrf.mxu0
    %v6174 = vadd.f32 %v6121, %v6173
    %6175 = vdwg.mxu0
    %6176 = vmatprep.subr.bf16.mxu0 %v4836
    %6177 = vmatpush1.bf16.msra.mxu0 %v4835
    %6178 = vmatprep.subr.bf16.mxu0 %v4832
    %6179 = vmatpush1.bf16.msra.mxu0 %v4831
    %6180 = vmatprep.subr.bf16.mxu0 %v4828
    %6181 = vmatpush1.bf16.msra.mxu0 %v4827
    %6182 = vmatprep.subr.bf16.mxu0 %v4824
    %6183 = vmatpush1.bf16.msra.mxu0 %v4823
    %6184 = vmatprep.subr.bf16.mxu0 %v4820
    %6185 = vmatpush1.bf16.msra.mxu0 %v4819
    %6186 = vmatprep.subr.bf16.mxu0 %v4816
    %6187 = vmatpush1.bf16.msra.mxu0 %v4815
    %6188 = vmatprep.subr.bf16.mxu0 %v4812
    %6189 = vmatpush1.bf16.msra.mxu0 %v4811
    %6190 = vmatprep.subr.bf16.mxu0 %v4808
    %6191 = vmatpush1.bf16.msra.mxu0 %v4807
    %6192 = vmatprep.subr.bf16.mxu0 %v4868
    %6193 = vmatpush2.bf16.msra.mxu0 %v4867
    %6194 = vmatprep.subr.bf16.mxu0 %v4864
    %6195 = vmatpush2.bf16.msra.mxu0 %v4863
    %6196 = vmatprep.subr.bf16.mxu0 %v4860
    %6197 = vmatpush2.bf16.msra.mxu0 %v4859
    %6198 = vmatprep.subr.bf16.mxu0 %v4856
    %6199 = vmatpush2.bf16.msra.mxu0 %v4855
    %6200 = vmatprep.subr.bf16.mxu0 %v4852
    %6201 = vmatpush2.bf16.msra.mxu0 %v4851
    %6202 = vmatprep.subr.bf16.mxu0 %v4848
    %6203 = vmatpush2.bf16.msra.mxu0 %v4847
    %6204 = vmatprep.subr.bf16.mxu0 %v4844
    %6205 = vmatpush2.bf16.msra.mxu0 %v4843
    %6206 = vmatprep.subr.bf16.mxu0 %v4840
    %6207 = vmatpush2.bf16.msra.mxu0 %v4839
    %6208 = vmatprep.mubr.bf16.mxu0 %v2270
    %6209 = vmatmul.mubr.bf16.gmra.mxu0 %v2269
    %v6210 = vpop.f32.mrf.mxu0
    %v6211 = vadd.f32 %v6158, %v6210
    %v6212 = vpop.f32.mrf.mxu0
    %v6213 = vadd.f32 %v6160, %v6212
    %v6214 = vpop.f32.mrf.mxu0
    %v6215 = vadd.f32 %v6162, %v6214
    %v6216 = vpop.f32.mrf.mxu0
    %v6217 = vadd.f32 %v6164, %v6216
    %6218 = vmatprep.mubr.bf16.mxu0 %v2286
    %6219 = vmatmul.mubr.bf16.gmra.mxu0 %v2285
    %v6220 = vpop.f32.mrf.mxu0
    %v6221 = vadd.f32 %v6168, %v6220
    %v6222 = vpop.f32.mrf.mxu0
    %v6223 = vadd.f32 %v6170, %v6222
    %v6224 = vpop.f32.mrf.mxu0
    %v6225 = vadd.f32 %v6172, %v6224
    %v6226 = vpop.f32.mrf.mxu0
    %v6227 = vadd.f32 %v6174, %v6226
    %6228 = vdwg.mxu0
    %v6229 = vmax.f32 %v5787, 0.0
    %v6230 = vmax.f32 %v5789, 0.0
    %v6231 = vmax.f32 %v6211, 0.0
    %v6232 = vmax.f32 %v6213, 0.0
    %v6233 = vmax.f32 %v5791, 0.0
    %v6234 = vmax.f32 %v5793, 0.0
    %v6235 = vmax.f32 %v6215, 0.0
    %v6236 = vmax.f32 %v6217, 0.0
    %v6237 = vmax.f32 %v5797, 0.0
    %v6238 = vmax.f32 %v5799, 0.0
    %v6239 = vmax.f32 %v6221, 0.0
    %v6240 = vmax.f32 %v6223, 0.0
    %v6241 = vmax.f32 %v5801, 0.0
    %v6242 = vmax.f32 %v5803, 0.0
    %v6243 = vmax.f32 %v6225, 0.0
    %v6244 = vmax.f32 %v6227, 0.0
    %v6245 = vpack.c.bf16 %v6233, %v6229
    %v6246 = vpack.c.bf16 %v6234, %v6230
    %v6247 = vpack.c.bf16 %v6235, %v6231
    %v6248 = vpack.c.bf16 %v6236, %v6232
    %v6249 = vpack.c.bf16 %v6241, %v6237
    %v6250 = vpack.c.bf16 %v6242, %v6238
    %v6251 = vpack.c.bf16 %v6243, %v6239
    %v6252 = vpack.c.bf16 %v6244, %v6240
    %v6253 = vld [vmem:[#allocation11] sm:$0xf]
    %v6254 = vld [vmem:[#allocation11 + $0x4] sm:$0xf]
    %v6255 = vld [vmem:[#allocation11 + $0x8] sm:$0xf]
    %v6256 = vld [vmem:[#allocation11 + $0xc] sm:$0xf]
    %v6257 = vld [vmem:[#allocation11 + $0x10] sm:$0xf]
    %v6258 = vld [vmem:[#allocation11 + $0x14] sm:$0xf]
    %v6259 = vld [vmem:[#allocation11 + $0x18] sm:$0xf]
    %v6260 = vld [vmem:[#allocation11 + $0x1c] sm:$0xf]
    %v6261 = vld [vmem:[#allocation11 + $0x20] sm:$0xf]
    %v6262 = vld [vmem:[#allocation11 + $0x24] sm:$0xf]
    %v6263 = vld [vmem:[#allocation11 + $0x28] sm:$0xf]
    %v6264 = vld [vmem:[#allocation11 + $0x2c] sm:$0xf]
    %v6265 = vld [vmem:[#allocation11 + $0x30] sm:$0xf]
    %v6266 = vld [vmem:[#allocation11 + $0x34] sm:$0xf]
    %v6267 = vld [vmem:[#allocation11 + $0x38] sm:$0xf]
    %v6268 = vld [vmem:[#allocation11 + $0x3c] sm:$0xf]
    %v6269 = vld [vmem:[#allocation11 + $0x40] sm:$0xf]
    %v6270 = vld [vmem:[#allocation11 + $0x44] sm:$0xf]
    %v6271 = vld [vmem:[#allocation11 + $0x48] sm:$0xf]
    %v6272 = vld [vmem:[#allocation11 + $0x4c] sm:$0xf]
    %v6273 = vld [vmem:[#allocation11 + $0x50] sm:$0xf]
    %v6274 = vld [vmem:[#allocation11 + $0x54] sm:$0xf]
    %v6275 = vld [vmem:[#allocation11 + $0x58] sm:$0xf]
    %v6276 = vld [vmem:[#allocation11 + $0x5c] sm:$0xf]
    %v6277 = vld [vmem:[#allocation11 + $0x60] sm:$0xf]
    %v6278 = vld [vmem:[#allocation11 + $0x64] sm:$0xf]
    %v6279 = vld [vmem:[#allocation11 + $0x68] sm:$0xf]
    %v6280 = vld [vmem:[#allocation11 + $0x6c] sm:$0xf]
    %v6281 = vld [vmem:[#allocation11 + $0x70] sm:$0xf]
    %v6282 = vld [vmem:[#allocation11 + $0x74] sm:$0xf]
    %v6283 = vld [vmem:[#allocation11 + $0x78] sm:$0xf]
    %v6284 = vld [vmem:[#allocation11 + $0x7c] sm:$0xf]
    %v6285 = vld [vmem:[#allocation11 + $0x80] sm:$0xf]
    %v6286 = vld [vmem:[#allocation11 + $0x84] sm:$0xf]
    %v6287 = vld [vmem:[#allocation11 + $0x88] sm:$0xf]
    %v6288 = vld [vmem:[#allocation11 + $0x8c] sm:$0xf]
    %v6289 = vld [vmem:[#allocation11 + $0x90] sm:$0xf]
    %v6290 = vld [vmem:[#allocation11 + $0x94] sm:$0xf]
    %v6291 = vld [vmem:[#allocation11 + $0x98] sm:$0xf]
    %v6292 = vld [vmem:[#allocation11 + $0x9c] sm:$0xf]
    %v6293 = vld [vmem:[#allocation11 + $0xa0] sm:$0xf]
    %v6294 = vld [vmem:[#allocation11 + $0xa4] sm:$0xf]
    %v6295 = vld [vmem:[#allocation11 + $0xa8] sm:$0xf]
    %v6296 = vld [vmem:[#allocation11 + $0xac] sm:$0xf]
    %v6297 = vld [vmem:[#allocation11 + $0xb0] sm:$0xf]
    %v6298 = vld [vmem:[#allocation11 + $0xb4] sm:$0xf]
    %v6299 = vld [vmem:[#allocation11 + $0xb8] sm:$0xf]
    %v6300 = vld [vmem:[#allocation11 + $0xbc] sm:$0xf]
    %v6301 = vld [vmem:[#allocation11 + $0xc0] sm:$0xf]
    %v6302 = vld [vmem:[#allocation11 + $0xc4] sm:$0xf]
    %v6303 = vld [vmem:[#allocation11 + $0xc8] sm:$0xf]
    %v6304 = vld [vmem:[#allocation11 + $0xcc] sm:$0xf]
    %v6305 = vld [vmem:[#allocation11 + $0xd0] sm:$0xf]
    %v6306 = vld [vmem:[#allocation11 + $0xd4] sm:$0xf]
    %v6307 = vld [vmem:[#allocation11 + $0xd8] sm:$0xf]
    %v6308 = vld [vmem:[#allocation11 + $0xdc] sm:$0xf]
    %v6309 = vld [vmem:[#allocation11 + $0xe0] sm:$0xf]
    %v6310 = vld [vmem:[#allocation11 + $0xe4] sm:$0xf]
    %v6311 = vld [vmem:[#allocation11 + $0xe8] sm:$0xf]
    %v6312 = vld [vmem:[#allocation11 + $0xec] sm:$0xf]
    %v6313 = vld [vmem:[#allocation11 + $0xf0] sm:$0xf]
    %v6314 = vld [vmem:[#allocation11 + $0xf4] sm:$0xf]
    %v6315 = vld [vmem:[#allocation11 + $0xf8] sm:$0xf]
    %v6316 = vld [vmem:[#allocation11 + $0xfc] sm:$0xf]
    %v6317 = vld [vmem:[#allocation13] sm:$0x1]
    %v6319 = vlaneseq
    %v6320 = vshrl.u32 %v6319, 7
    %v6321 = vsub.s32 0, %v6320
    %v6322 = vrot.slane %v6317, %v6321
    %v6388 = vunpack.c.l.b16 %v6253
    %v6389 = vunpack.c.l.b16 %v6254
    %v6390 = vunpack.c.l.b16 %v6255
    %v6391 = vunpack.c.l.b16 %v6256
    %v6392 = vunpack.c.l.b16 %v6257
    %v6393 = vunpack.c.l.b16 %v6258
    %v6394 = vunpack.c.l.b16 %v6259
    %v6395 = vunpack.c.l.b16 %v6260
    %v6396 = vunpack.c.l.b16 %v6261
    %v6397 = vunpack.c.l.b16 %v6262
    %v6398 = vunpack.c.l.b16 %v6263
    %v6399 = vunpack.c.l.b16 %v6264
    %v6400 = vunpack.c.l.b16 %v6265
    %v6401 = vunpack.c.l.b16 %v6266
    %v6402 = vunpack.c.l.b16 %v6267
    %v6403 = vunpack.c.l.b16 %v6268
    %v6404 = vunpack.c.l.b16 %v6269
    %v6405 = vunpack.c.l.b16 %v6270
    %v6406 = vunpack.c.l.b16 %v6271
    %v6407 = vunpack.c.l.b16 %v6272
    %v6408 = vunpack.c.l.b16 %v6273
    %v6409 = vunpack.c.l.b16 %v6274
    %v6410 = vunpack.c.l.b16 %v6275
    %v6411 = vunpack.c.l.b16 %v6276
    %v6412 = vunpack.c.l.b16 %v6277
    %v6413 = vunpack.c.l.b16 %v6278
    %v6414 = vunpack.c.l.b16 %v6279
    %v6415 = vunpack.c.l.b16 %v6280
    %v6416 = vunpack.c.l.b16 %v6281
    %v6417 = vunpack.c.l.b16 %v6282
    %v6418 = vunpack.c.l.b16 %v6283
    %v6419 = vunpack.c.l.b16 %v6284
    %v6420 = vunpack.c.l.b16 %v6285
    %v6421 = vunpack.c.l.b16 %v6286
    %v6422 = vunpack.c.l.b16 %v6287
    %v6423 = vunpack.c.l.b16 %v6288
    %v6424 = vunpack.c.l.b16 %v6289
    %v6425 = vunpack.c.l.b16 %v6290
    %v6426 = vunpack.c.l.b16 %v6291
    %v6427 = vunpack.c.l.b16 %v6292
    %v6428 = vunpack.c.l.b16 %v6293
    %v6429 = vunpack.c.l.b16 %v6294
    %v6430 = vunpack.c.l.b16 %v6295
    %v6431 = vunpack.c.l.b16 %v6296
    %v6432 = vunpack.c.l.b16 %v6297
    %v6433 = vunpack.c.l.b16 %v6298
    %v6434 = vunpack.c.l.b16 %v6299
    %v6435 = vunpack.c.l.b16 %v6300
    %v6436 = vunpack.c.l.b16 %v6301
    %v6437 = vunpack.c.l.b16 %v6302
    %v6438 = vunpack.c.l.b16 %v6303
    %v6439 = vunpack.c.l.b16 %v6304
    %v6440 = vunpack.c.l.b16 %v6305
    %v6441 = vunpack.c.l.b16 %v6306
    %v6442 = vunpack.c.l.b16 %v6307
    %v6443 = vunpack.c.l.b16 %v6308
    %v6444 = vunpack.c.l.b16 %v6309
    %v6445 = vunpack.c.l.b16 %v6310
    %v6446 = vunpack.c.l.b16 %v6311
    %v6447 = vunpack.c.l.b16 %v6312
    %v6448 = vunpack.c.l.b16 %v6313
    %v6449 = vunpack.c.l.b16 %v6314
    %v6450 = vunpack.c.l.b16 %v6315
    %v6451 = vunpack.c.l.b16 %v6316
    %v6452 = vpack.c.b16 %v6389, %v6388
    %v6453 = vpack.c.b16 %v6391, %v6390
    %v6454 = vpack.c.b16 %v6393, %v6392
    %v6455 = vpack.c.b16 %v6395, %v6394
    %v6456 = vpack.c.b16 %v6397, %v6396
    %v6457 = vpack.c.b16 %v6399, %v6398
    %v6458 = vpack.c.b16 %v6401, %v6400
    %v6459 = vpack.c.b16 %v6403, %v6402
    %v6460 = vpack.c.b16 %v6405, %v6404
    %v6461 = vpack.c.b16 %v6407, %v6406
    %v6462 = vpack.c.b16 %v6409, %v6408
    %v6463 = vpack.c.b16 %v6411, %v6410
    %v6464 = vpack.c.b16 %v6413, %v6412
    %v6465 = vpack.c.b16 %v6415, %v6414
    %v6466 = vpack.c.b16 %v6417, %v6416
    %v6467 = vpack.c.b16 %v6419, %v6418
    %v6468 = vpack.c.b16 %v6421, %v6420
    %v6469 = vpack.c.b16 %v6423, %v6422
    %v6470 = vpack.c.b16 %v6425, %v6424
    %v6471 = vpack.c.b16 %v6427, %v6426
    %v6472 = vpack.c.b16 %v6429, %v6428
    %v6473 = vpack.c.b16 %v6431, %v6430
    %v6474 = vpack.c.b16 %v6433, %v6432
    %v6475 = vpack.c.b16 %v6435, %v6434
    %v6476 = vpack.c.b16 %v6437, %v6436
    %v6477 = vpack.c.b16 %v6439, %v6438
    %v6478 = vpack.c.b16 %v6441, %v6440
    %v6479 = vpack.c.b16 %v6443, %v6442
    %v6480 = vpack.c.b16 %v6445, %v6444
    %v6481 = vpack.c.b16 %v6447, %v6446
    %v6482 = vpack.c.b16 %v6449, %v6448
    %v6483 = vpack.c.b16 %v6451, %v6450
    %6516 = vmatprep.subr.bf16.mxu0 0
    %6517 = vmatpush1.bf16.msra.mxu0 %v6459
    %6518 = vmatprep.subr.bf16.mxu0 0
    %6519 = vmatpush1.bf16.msra.mxu0 %v6458
    %6520 = vmatprep.subr.bf16.mxu0 0
    %6521 = vmatpush1.bf16.msra.mxu0 %v6457
    %6522 = vmatprep.subr.bf16.mxu0 0
    %6523 = vmatpush1.bf16.msra.mxu0 %v6456
    %6524 = vmatprep.subr.bf16.mxu0 0
    %6525 = vmatpush1.bf16.msra.mxu0 %v6455
    %6526 = vmatprep.subr.bf16.mxu0 0
    %6527 = vmatpush1.bf16.msra.mxu0 %v6454
    %6528 = vmatprep.subr.bf16.mxu0 0
    %6529 = vmatpush1.bf16.msra.mxu0 %v6453
    %6530 = vmatprep.subr.bf16.mxu0 0
    %6531 = vmatpush1.bf16.msra.mxu0 %v6452
    %6532 = vmatprep.subr.bf16.mxu0 0
    %6533 = vmatpush2.bf16.msra.mxu0 %v6467
    %6534 = vmatprep.subr.bf16.mxu0 0
    %6535 = vmatpush2.bf16.msra.mxu0 %v6466
    %6536 = vmatprep.subr.bf16.mxu0 0
    %6537 = vmatpush2.bf16.msra.mxu0 %v6465
    %6538 = vmatprep.subr.bf16.mxu0 0
    %6539 = vmatpush2.bf16.msra.mxu0 %v6464
    %6540 = vmatprep.subr.bf16.mxu0 0
    %6541 = vmatpush2.bf16.msra.mxu0 %v6463
    %6542 = vmatprep.subr.bf16.mxu0 0
    %6543 = vmatpush2.bf16.msra.mxu0 %v6462
    %6544 = vmatprep.subr.bf16.mxu0 0
    %6545 = vmatpush2.bf16.msra.mxu0 %v6461
    %6546 = vmatprep.subr.bf16.mxu0 0
    %6547 = vmatpush2.bf16.msra.mxu0 %v6460
    %6548 = vmatprep.mubr.bf16.mxu0 %v6246
    %6549 = vmatmul.mubr.bf16.gmra.mxu0 %v6245
    %v6550 = vpop.f32.mrf.mxu0
    %v6551 = vadd.f32 %v6322, %v6550
    %v6552 = vpop.f32.mrf.mxu0
    %v6553 = vpop.f32.mrf.mxu0
    %v6554 = vadd.f32 %v6322, %v6553
    %v6555 = vpop.f32.mrf.mxu0
    %6556 = vmatprep.mubr.bf16.mxu0 %v6250
    %6557 = vmatmul.mubr.bf16.gmra.mxu0 %v6249
    %v6558 = vpop.f32.mrf.mxu0
    %v6559 = vadd.f32 %v6322, %v6558
    %v6560 = vpop.f32.mrf.mxu0
    %v6561 = vpop.f32.mrf.mxu0
    %v6562 = vadd.f32 %v6322, %v6561
    %v6563 = vpop.f32.mrf.mxu0
    %6564 = vdwg.mxu0
    %6565 = vmatprep.subr.bf16.mxu0 0
    %6566 = vmatpush1.bf16.msra.mxu0 %v6475
    %6567 = vmatprep.subr.bf16.mxu0 0
    %6568 = vmatpush1.bf16.msra.mxu0 %v6474
    %6569 = vmatprep.subr.bf16.mxu0 0
    %6570 = vmatpush1.bf16.msra.mxu0 %v6473
    %6571 = vmatprep.subr.bf16.mxu0 0
    %6572 = vmatpush1.bf16.msra.mxu0 %v6472
    %6573 = vmatprep.subr.bf16.mxu0 0
    %6574 = vmatpush1.bf16.msra.mxu0 %v6471
    %6575 = vmatprep.subr.bf16.mxu0 0
    %6576 = vmatpush1.bf16.msra.mxu0 %v6470
    %6577 = vmatprep.subr.bf16.mxu0 0
    %6578 = vmatpush1.bf16.msra.mxu0 %v6469
    %6579 = vmatprep.subr.bf16.mxu0 0
    %6580 = vmatpush1.bf16.msra.mxu0 %v6468
    %6581 = vmatprep.subr.bf16.mxu0 0
    %6582 = vmatpush2.bf16.msra.mxu0 %v6483
    %6583 = vmatprep.subr.bf16.mxu0 0
    %6584 = vmatpush2.bf16.msra.mxu0 %v6482
    %6585 = vmatprep.subr.bf16.mxu0 0
    %6586 = vmatpush2.bf16.msra.mxu0 %v6481
    %6587 = vmatprep.subr.bf16.mxu0 0
    %6588 = vmatpush2.bf16.msra.mxu0 %v6480
    %6589 = vmatprep.subr.bf16.mxu0 0
    %6590 = vmatpush2.bf16.msra.mxu0 %v6479
    %6591 = vmatprep.subr.bf16.mxu0 0
    %6592 = vmatpush2.bf16.msra.mxu0 %v6478
    %6593 = vmatprep.subr.bf16.mxu0 0
    %6594 = vmatpush2.bf16.msra.mxu0 %v6477
    %6595 = vmatprep.subr.bf16.mxu0 0
    %6596 = vmatpush2.bf16.msra.mxu0 %v6476
    %6597 = vmatprep.mubr.bf16.mxu0 %v6248
    %6598 = vmatmul.mubr.bf16.gmra.mxu0 %v6247
    %v6599 = vpop.f32.mrf.mxu0
    %v6600 = vadd.f32 %v6551, %v6599
    %v6601 = vpop.f32.mrf.mxu0
    %v6602 = vpop.f32.mrf.mxu0
    %v6603 = vadd.f32 %v6554, %v6602
    %v6604 = vpop.f32.mrf.mxu0
    %6605 = vmatprep.mubr.bf16.mxu0 %v6252
    %6606 = vmatmul.mubr.bf16.gmra.mxu0 %v6251
    %v6607 = vpop.f32.mrf.mxu0
    %v6608 = vadd.f32 %v6559, %v6607
    %v6609 = vpop.f32.mrf.mxu0
    %v6610 = vpop.f32.mrf.mxu0
    %v6611 = vadd.f32 %v6562, %v6610
    %v6612 = vpop.f32.mrf.mxu0
    %6613 = vdwg.mxu0
    %v6614 = vmax.f32 %v6600, 0.0
    %v6615 = vmax.f32 %v6603, 0.0
    %v6616 = vmax.f32 %v6608, 0.0
    %v6617 = vmax.f32 %v6611, 0.0
    %v6618 = vld [vmem:[#allocation14] sm:$0x1]
    %v6620 = vlaneseq
    %v6621 = vshrl.u32 %v6620, 7
    %v6622 = vsub.s32 0, %v6621
    %v6623 = vrot.slane %v6618, %v6622
    %v6625 = vmul.f32 %v6614, %v6623
    %v6626 = vmul.f32 %v6615, %v6623
    %v6627 = vmul.f32 %v6616, %v6623
    %v6628 = vmul.f32 %v6617, %v6623
    %6629 = vadd.xlane.f32.xlu0 %v6625
    %v6630 = vpop.xlane.xlu0 %6629
    %6631 = vadd.xlane.f32.xlu0 %v6626
    %v6632 = vpop.xlane.xlu0 %6631
    %6633 = vadd.xlane.f32.xlu0 %v6627
    %v6634 = vpop.xlane.xlu0 %6633
    %6635 = vadd.xlane.f32.xlu0 %v6628
    %v6636 = vpop.xlane.xlu0 %6635
    %s6637 = sld [smem:[#allocation2]]
    %v6638 = vstv %s6637
    %v6639 = vadd.f32 %v6630, %v6638
    %v6640 = vadd.f32 %v6632, %v6638
    %v6641 = vadd.f32 %v6634, %v6638
    %v6642 = vadd.f32 %v6636, %v6638
    %vm6643 = vcmask 7168
    %6644 = vst.msk [vmem:[%s9] sm:$0xff] %vm6643, %v6639
    %6645 = vst.msk [vmem:[%s9 + $0x8] sm:$0xff] %vm6643, %v6640
    %6646 = vst.msk [vmem:[%s9 + $0x10] sm:$0xff] %vm6643, %v6641
    %6647 = vst.msk [vmem:[%s9 + $0x18] sm:$0xff] %vm6643, %v6642
    // Predicated region
    $region70: #{tpu_custom_call.1} parent=1 // pred_check
      _
    $region71: #{tpu_custom_call.1} parent=1 // pred_check_branch
      %6649 = sbr.rel (0) target = $region73
    $region72: #{tpu_custom_call.1} parent=1 // pred_region
      _
    $region73: #{tpu_custom_call.1} parent=1 // pred_fallthru
      _
    // Predicated region
    $region74: #{tpu_custom_call.1} parent=1 // pred_check
      _
    $region75: #{tpu_custom_call.1} parent=1 // pred_check_branch
      %6651 = sbr.rel (0) target = $region77
    $region76: #{tpu_custom_call.1} parent=1 // pred_region
      _
    $region77: #{tpu_custom_call.1} parent=1 // pred_fallthru
      _
    %6652 = vsyncpa [#allocation4], 1
    %6653 = vsyncpa [#allocation6], 1
    %6654 = vsyncpa [#allocation9], 1
    %6655 = vsyncpa [#allocation12], 1
    %6656 = vsyncpa [#allocation15], 1

</llo_original>
